<compile_context>
chip_gen: v6e
topology: v6e:2x2x1
jax: 0.10.0
libtpu: 0.0.40
codegen_flags: <defaults>
</compile_context>

<pallas_src>
import functools

import jax
import jax.numpy as jnp
from jax.experimental import pallas as pl
from jax.experimental.pallas import tpu as pltpu


# ---------------------------------------------------------------------------
# Fused kernel: one image per grid step.
#   conv(3x3, pad=1, norm folded in) + bias + ReLU -> global avg pool -> linear
#
# x_ref[0] is the flattened, border-padded image [ (H+2)*(W+2) + 2, C_in ]:
#   row m = padded pixel (m // (W+2), m % (W+2)); the +2 trailing rows keep the
#   last tap's contiguous slab in bounds and only ever feed masked-out rows.
# For tap (dy, dx) the contiguous slab starting at dy*(W+2)+dx of length
# H*(W+2) aligns its row h*(W+2)+j with padded pixel (h+dy, j+dx); rows with
# j >= W are wrap-around junk and get zero weight in the pooling mat-vec.
# ---------------------------------------------------------------------------
def _fused_classifier_kernel(x_ref, w1_ref, b1_ref, pw_ref, w2_ref, b2_ref,
                             o_ref, *, H, W, C_in, C_out):
    Wp = W + 2
    HWp = H * Wp

    acc = jnp.zeros((HWp, C_out), jnp.float32)
    for dy in range(3):
        for dx in range(3):
            t = dy * 3 + dx
            # static start -> plain contiguous VMEM slab, no lane/sublane shift
            slab = x_ref[0, pl.ds(dy * Wp + dx, HWp), :]            # [H*Wp, C_in]
            acc = acc + jnp.dot(slab, w1_ref[t],
                                preferred_element_type=jnp.float32)

    h_act = jnp.maximum(acc + b1_ref[...], 0.0)                     # [H*Wp, C_out]

    # Global average pool == mat-vec with precomputed {1/(H*W), 0} row weights
    # (junk rows j >= W carry weight 0).
    pooled = jnp.dot(pw_ref[...], h_act,
                     preferred_element_type=jnp.float32)            # [1, C_out]

    logits = jnp.dot(pooled, w2_ref[...],
                     preferred_element_type=jnp.float32) + b2_ref[...]
    o_ref[0] = logits                                               # [1, num_classes]


def init_params(key, c_in=3, c_out=32, num_classes=10):
    k1, k2, k3, k4 = jax.random.split(key, 4)
    # Conv2d(c_in, c_out, 3, padding=1): PyTorch weight layout (out, in, kh, kw)
    w_conv = jax.random.normal(k1, (c_out, c_in, 3, 3), jnp.float32) * 0.1
    b_conv = jax.random.normal(k2, (c_out,), jnp.float32) * 0.01
    # per-tap layout: [9, c_in, c_out], taps ordered (kh, kw)
    w_tap = jnp.transpose(w_conv, (2, 3, 1, 0)).reshape(9, c_in, c_out)
    # Linear(c_out, num_classes)
    w2 = jax.random.normal(k3, (c_out, num_classes), jnp.float32) * 0.1
    b2 = (jax.random.normal(k4, (num_classes,), jnp.float32) * 0.01).reshape(
        1, num_classes)
    # ImageNetInputNorm buffers
    mean = jnp.array([0.485, 0.456, 0.406], jnp.float32)
    std = jnp.array([0.229, 0.224, 0.225], jnp.float32)
    inv_std = 1.0 / std

    # Fold (x - mean) * inv_std into the conv:
    #   w1f = w_tap * inv_std (per input channel), b1f = b - sum(w1f * mean).
    # With the input spatially padded by `mean`, every border tap contributes
    # exactly 0, matching zero-padding of the *normalized* input in PyTorch.
    w1f = w_tap * inv_std[None, :, None]                            # [9, c_in, c_out]
    b1f = (b_conv - jnp.sum(w1f * mean[None, :, None], axis=(0, 1))).reshape(
        1, c_out)

    params = dict(w1f=w1f, b1f=b1f, w2=w2, b2=b2, mean=mean)
    ref_params = dict(w1=w_tap.reshape(9 * c_in, c_out),
                      b1=b_conv.reshape(1, c_out),
                      w2=w2, b2=b2, mean=mean, inv_std=inv_std)
    return params, ref_params


@jax.jit
def classifier_forward(x_nchw, params):
    N, C_in, H, W = x_nchw.shape
    C_out = params["w1f"].shape[-1]
    NC = params["w2"].shape[1]
    Hp, Wp = H + 2, W + 2
    HWp = H * Wp
    PP = Hp * Wp + 2   # +2 rows so the (dy=2, dx=2) contiguous slab stays in bounds

    # ---- layout prep (tiny glue): NCHW -> NHWC, border-pad with the
    # per-channel mean (== zero in normalized space), flatten padded spatial. ----
    mean = params["mean"]
    x = jnp.transpose(x_nchw, (0, 2, 3, 1)).astype(jnp.float32)     # [N, H, W, C]
    xp = jnp.broadcast_to(mean.reshape(1, 1, 1, C_in), (N, Hp, Wp, C_in))
    xp = jax.lax.dynamic_update_slice(xp, x, (0, 1, 1, 0))          # interior = x
    x2 = xp.reshape(N, Hp * Wp, C_in)
    x2 = jnp.pad(x2, ((0, 0), (0, PP - Hp * Wp), (0, 0)))           # [N, PP, C_in]

    # pooling weights: 1/(H*W) on valid rows (column index < W), 0 on junk rows
    r = jnp.arange(HWp)
    pool_w = (((r % Wp) < W).astype(jnp.float32) / float(H * W)).reshape(1, HWp)

    kernel = functools.partial(_fused_classifier_kernel,
                               H=H, W=W, C_in=C_in, C_out=C_out)

    out = pl.pallas_call(
        kernel,
        out_shape=jax.ShapeDtypeStruct((N, 1, NC), jnp.float32),
        grid=(N,),
        in_specs=[
            pl.BlockSpec((1, PP, C_in), lambda n: (n, 0, 0)),       # image n
            pl.BlockSpec((9, C_in, C_out), lambda n: (0, 0, 0)),    # folded conv w
            pl.BlockSpec((1, C_out), lambda n: (0, 0)),             # folded conv b
            pl.BlockSpec((1, HWp), lambda n: (0, 0)),               # pool weights
            pl.BlockSpec((C_out, NC), lambda n: (0, 0)),            # head w
            pl.BlockSpec((1, NC), lambda n: (0, 0)),                # head b
        ],
        out_specs=pl.BlockSpec((1, 1, NC), lambda n: (n, 0, 0)),
        compiler_params=pltpu.CompilerParams(
            dimension_semantics=("parallel",),
            vmem_limit_bytes=32 * 1024 * 1024,
        ),
    )(x2, params["w1f"], params["b1f"], pool_w, params["w2"], params["b2"])

    return out[:, 0, :]


def reference_forward(x_nchw, ref_params):
    """Pure-JAX reference with the original (unfolded) module semantics."""
    N, C_in, H, W = x_nchw.shape
    mean = ref_params["mean"].reshape(1, 1, 1, C_in)
    inv_std = ref_params["inv_std"].reshape(1, 1, 1, C_in)
    x = jnp.transpose(x_nchw, (0, 2, 3, 1)).astype(jnp.float32)
    z = (x - mean) * inv_std                                        # ImageNetInputNorm
    zp = jnp.pad(z, ((0, 0), (1, 1), (1, 1), (0, 0)))               # Conv2d padding=1
    pats = jnp.concatenate(
        [zp[:, dy:dy + H, dx:dx + W, :] for dy in range(3) for dx in range(3)],
        axis=-1).reshape(N * H * W, 9 * C_in)
    h = jnp.maximum(pats @ ref_params["w1"] + ref_params["b1"], 0.0)
    pooled = h.reshape(N, H * W, -1).mean(axis=1)
    return pooled @ ref_params["w2"] + ref_params["b2"]


if __name__ == "__main__":
    key = jax.random.PRNGKey(0)
    kx, kp = jax.random.split(key)
    # small image batch in [0, 1]; ImageNet-norm implies 3 channels
    x = jax.random.uniform(kx, (2, 3, 16, 16), jnp.float32)
    params, ref_params = init_params(kp)

    out = classifier_forward(x, params)
    jax.block_until_ready(out)
    assert out.shape == (2, 10) and out.dtype == jnp.float32

    ref = reference_forward(x, ref_params)
    assert jnp.allclose(out, ref, atol=1e-3, rtol=1e-3), (
        "mismatch vs reference, max abs err = "
        f"{float(jnp.max(jnp.abs(out - ref)))}")
    print("KERNEL_OK")
</pallas_src>

<mosaic_0001>
module attributes {stable_mosaic.version = 11 : i64} {
  func.func @_fused_classifier_kernel(%arg0: i32, %arg1: memref<1x326x3xf32, #tpu.memory_space<vmem>>, %arg2: memref<9x3x32xf32, #tpu.memory_space<vmem>>, %arg3: memref<1x32xf32, #tpu.memory_space<vmem>>, %arg4: memref<1x288xf32, #tpu.memory_space<vmem>>, %arg5: memref<32x10xf32, #tpu.memory_space<vmem>>, %arg6: memref<1x10xf32, #tpu.memory_space<vmem>>, %arg7: memref<1x1x10xf32, #tpu.memory_space<vmem>>) attributes {dimension_semantics = [#tpu.dimension_semantics<parallel>], iteration_bounds = array<i64: 2>, scalar_prefetch = 0 : i64, scratch_operands = 0 : i64, tpu.core_type = #tpu.core_type<tc>, window_params = [{transform_indices = @transform_0, window_bounds = array<i64: 1, 326, 3>}, {pipeline_mode = #tpu.pipeline_mode<synchronous>, transform_indices = @transform_1, window_bounds = array<i64: 9, 3, 32>}, {pipeline_mode = #tpu.pipeline_mode<synchronous>, transform_indices = @transform_2, window_bounds = array<i64: 1, 32>}, {pipeline_mode = #tpu.pipeline_mode<synchronous>, transform_indices = @transform_3, window_bounds = array<i64: 1, 288>}, {pipeline_mode = #tpu.pipeline_mode<synchronous>, transform_indices = @transform_4, window_bounds = array<i64: 32, 10>}, {pipeline_mode = #tpu.pipeline_mode<synchronous>, transform_indices = @transform_5, window_bounds = array<i64: 1, 10>}, {transform_indices = @transform_6, window_bounds = array<i64: 1, 1, 10>}]} {
    %cst = arith.constant 0.000000e+00 : f32
    %0 = vector.broadcast %cst : f32 to vector<288x32xf32>
    %c0 = arith.constant 0 : index
    %c0_0 = arith.constant 0 : index
    %c0_1 = arith.constant 0 : index
    %1 = vector.load %arg1[%c0, %c0_0, %c0_1] : memref<1x326x3xf32, #tpu.memory_space<vmem>>, vector<1x288x3xf32>
    %2 = vector.shape_cast %1 : vector<1x288x3xf32> to vector<288x3xf32>
    %c0_2 = arith.constant 0 : index
    %c0_3 = arith.constant 0 : index
    %c0_4 = arith.constant 0 : index
    %3 = vector.load %arg2[%c0_2, %c0_3, %c0_4] : memref<9x3x32xf32, #tpu.memory_space<vmem>>, vector<1x3x32xf32>
    %4 = vector.shape_cast %3 : vector<1x3x32xf32> to vector<3x32xf32>
    %cst_5 = arith.constant dense<0.000000e+00> : vector<288x32xf32>
    %5 = tpu.matmul %2, %4, %cst_5 {dimension_numbers = #tpu.dot_dimension_numbers<[1], [0], [0], [1], [0, 0, 1, 1], [], []>} : vector<288x3xf32>, vector<3x32xf32>, vector<288x32xf32> -> vector<288x32xf32>
    %6 = arith.addf %0, %5 : vector<288x32xf32>
    %c0_6 = arith.constant 0 : index
    %c1 = arith.constant 1 : index
    %c0_7 = arith.constant 0 : index
    %7 = vector.load %arg1[%c0_6, %c1, %c0_7] : memref<1x326x3xf32, #tpu.memory_space<vmem>>, vector<1x288x3xf32>
    %8 = vector.shape_cast %7 : vector<1x288x3xf32> to vector<288x3xf32>
    %c1_8 = arith.constant 1 : index
    %c0_9 = arith.constant 0 : index
    %c0_10 = arith.constant 0 : index
    %9 = vector.load %arg2[%c1_8, %c0_9, %c0_10] : memref<9x3x32xf32, #tpu.memory_space<vmem>>, vector<1x3x32xf32>
    %10 = vector.shape_cast %9 : vector<1x3x32xf32> to vector<3x32xf32>
    %cst_11 = arith.constant dense<0.000000e+00> : vector<288x32xf32>
    %11 = tpu.matmul %8, %10, %cst_11 {dimension_numbers = #tpu.dot_dimension_numbers<[1], [0], [0], [1], [0, 0, 1, 1], [], []>} : vector<288x3xf32>, vector<3x32xf32>, vector<288x32xf32> -> vector<288x32xf32>
    %12 = arith.addf %6, %11 : vector<288x32xf32>
    %c0_12 = arith.constant 0 : index
    %c2 = arith.constant 2 : index
    %c0_13 = arith.constant 0 : index
    %13 = vector.load %arg1[%c0_12, %c2, %c0_13] : memref<1x326x3xf32, #tpu.memory_space<vmem>>, vector<1x288x3xf32>
    %14 = vector.shape_cast %13 : vector<1x288x3xf32> to vector<288x3xf32>
    %c2_14 = arith.constant 2 : index
    %c0_15 = arith.constant 0 : index
    %c0_16 = arith.constant 0 : index
    %15 = vector.load %arg2[%c2_14, %c0_15, %c0_16] : memref<9x3x32xf32, #tpu.memory_space<vmem>>, vector<1x3x32xf32>
    %16 = vector.shape_cast %15 : vector<1x3x32xf32> to vector<3x32xf32>
    %cst_17 = arith.constant dense<0.000000e+00> : vector<288x32xf32>
    %17 = tpu.matmul %14, %16, %cst_17 {dimension_numbers = #tpu.dot_dimension_numbers<[1], [0], [0], [1], [0, 0, 1, 1], [], []>} : vector<288x3xf32>, vector<3x32xf32>, vector<288x32xf32> -> vector<288x32xf32>
    %18 = arith.addf %12, %17 : vector<288x32xf32>
    %c0_18 = arith.constant 0 : index
    %c18 = arith.constant 18 : index
    %c0_19 = arith.constant 0 : index
    %19 = vector.load %arg1[%c0_18, %c18, %c0_19] : memref<1x326x3xf32, #tpu.memory_space<vmem>>, vector<1x288x3xf32>
    %20 = vector.shape_cast %19 : vector<1x288x3xf32> to vector<288x3xf32>
    %c3 = arith.constant 3 : index
    %c0_20 = arith.constant 0 : index
    %c0_21 = arith.constant 0 : index
    %21 = vector.load %arg2[%c3, %c0_20, %c0_21] : memref<9x3x32xf32, #tpu.memory_space<vmem>>, vector<1x3x32xf32>
    %22 = vector.shape_cast %21 : vector<1x3x32xf32> to vector<3x32xf32>
    %cst_22 = arith.constant dense<0.000000e+00> : vector<288x32xf32>
    %23 = tpu.matmul %20, %22, %cst_22 {dimension_numbers = #tpu.dot_dimension_numbers<[1], [0], [0], [1], [0, 0, 1, 1], [], []>} : vector<288x3xf32>, vector<3x32xf32>, vector<288x32xf32> -> vector<288x32xf32>
    %24 = arith.addf %18, %23 : vector<288x32xf32>
    %c0_23 = arith.constant 0 : index
    %c19 = arith.constant 19 : index
    %c0_24 = arith.constant 0 : index
    %25 = vector.load %arg1[%c0_23, %c19, %c0_24] : memref<1x326x3xf32, #tpu.memory_space<vmem>>, vector<1x288x3xf32>
    %26 = vector.shape_cast %25 : vector<1x288x3xf32> to vector<288x3xf32>
    %c4 = arith.constant 4 : index
    %c0_25 = arith.constant 0 : index
    %c0_26 = arith.constant 0 : index
    %27 = vector.load %arg2[%c4, %c0_25, %c0_26] : memref<9x3x32xf32, #tpu.memory_space<vmem>>, vector<1x3x32xf32>
    %28 = vector.shape_cast %27 : vector<1x3x32xf32> to vector<3x32xf32>
    %cst_27 = arith.constant dense<0.000000e+00> : vector<288x32xf32>
    %29 = tpu.matmul %26, %28, %cst_27 {dimension_numbers = #tpu.dot_dimension_numbers<[1], [0], [0], [1], [0, 0, 1, 1], [], []>} : vector<288x3xf32>, vector<3x32xf32>, vector<288x32xf32> -> vector<288x32xf32>
    %30 = arith.addf %24, %29 : vector<288x32xf32>
    %c0_28 = arith.constant 0 : index
    %c20 = arith.constant 20 : index
    %c0_29 = arith.constant 0 : index
    %31 = vector.load %arg1[%c0_28, %c20, %c0_29] : memref<1x326x3xf32, #tpu.memory_space<vmem>>, vector<1x288x3xf32>
    %32 = vector.shape_cast %31 : vector<1x288x3xf32> to vector<288x3xf32>
    %c5 = arith.constant 5 : index
    %c0_30 = arith.constant 0 : index
    %c0_31 = arith.constant 0 : index
    %33 = vector.load %arg2[%c5, %c0_30, %c0_31] : memref<9x3x32xf32, #tpu.memory_space<vmem>>, vector<1x3x32xf32>
    %34 = vector.shape_cast %33 : vector<1x3x32xf32> to vector<3x32xf32>
    %cst_32 = arith.constant dense<0.000000e+00> : vector<288x32xf32>
    %35 = tpu.matmul %32, %34, %cst_32 {dimension_numbers = #tpu.dot_dimension_numbers<[1], [0], [0], [1], [0, 0, 1, 1], [], []>} : vector<288x3xf32>, vector<3x32xf32>, vector<288x32xf32> -> vector<288x32xf32>
    %36 = arith.addf %30, %35 : vector<288x32xf32>
    %c0_33 = arith.constant 0 : index
    %c36 = arith.constant 36 : index
    %c0_34 = arith.constant 0 : index
    %37 = vector.load %arg1[%c0_33, %c36, %c0_34] : memref<1x326x3xf32, #tpu.memory_space<vmem>>, vector<1x288x3xf32>
    %38 = vector.shape_cast %37 : vector<1x288x3xf32> to vector<288x3xf32>
    %c6 = arith.constant 6 : index
    %c0_35 = arith.constant 0 : index
    %c0_36 = arith.constant 0 : index
    %39 = vector.load %arg2[%c6, %c0_35, %c0_36] : memref<9x3x32xf32, #tpu.memory_space<vmem>>, vector<1x3x32xf32>
    %40 = vector.shape_cast %39 : vector<1x3x32xf32> to vector<3x32xf32>
    %cst_37 = arith.constant dense<0.000000e+00> : vector<288x32xf32>
    %41 = tpu.matmul %38, %40, %cst_37 {dimension_numbers = #tpu.dot_dimension_numbers<[1], [0], [0], [1], [0, 0, 1, 1], [], []>} : vector<288x3xf32>, vector<3x32xf32>, vector<288x32xf32> -> vector<288x32xf32>
    %42 = arith.addf %36, %41 : vector<288x32xf32>
    %c0_38 = arith.constant 0 : index
    %c37 = arith.constant 37 : index
    %c0_39 = arith.constant 0 : index
    %43 = vector.load %arg1[%c0_38, %c37, %c0_39] : memref<1x326x3xf32, #tpu.memory_space<vmem>>, vector<1x288x3xf32>
    %44 = vector.shape_cast %43 : vector<1x288x3xf32> to vector<288x3xf32>
    %c7 = arith.constant 7 : index
    %c0_40 = arith.constant 0 : index
    %c0_41 = arith.constant 0 : index
    %45 = vector.load %arg2[%c7, %c0_40, %c0_41] : memref<9x3x32xf32, #tpu.memory_space<vmem>>, vector<1x3x32xf32>
    %46 = vector.shape_cast %45 : vector<1x3x32xf32> to vector<3x32xf32>
    %cst_42 = arith.constant dense<0.000000e+00> : vector<288x32xf32>
    %47 = tpu.matmul %44, %46, %cst_42 {dimension_numbers = #tpu.dot_dimension_numbers<[1], [0], [0], [1], [0, 0, 1, 1], [], []>} : vector<288x3xf32>, vector<3x32xf32>, vector<288x32xf32> -> vector<288x32xf32>
    %48 = arith.addf %42, %47 : vector<288x32xf32>
    %c0_43 = arith.constant 0 : index
    %c38 = arith.constant 38 : index
    %c0_44 = arith.constant 0 : index
    %49 = vector.load %arg1[%c0_43, %c38, %c0_44] : memref<1x326x3xf32, #tpu.memory_space<vmem>>, vector<1x288x3xf32>
    %50 = vector.shape_cast %49 : vector<1x288x3xf32> to vector<288x3xf32>
    %c8 = arith.constant 8 : index
    %c0_45 = arith.constant 0 : index
    %c0_46 = arith.constant 0 : index
    %51 = vector.load %arg2[%c8, %c0_45, %c0_46] : memref<9x3x32xf32, #tpu.memory_space<vmem>>, vector<1x3x32xf32>
    %52 = vector.shape_cast %51 : vector<1x3x32xf32> to vector<3x32xf32>
    %cst_47 = arith.constant dense<0.000000e+00> : vector<288x32xf32>
    %53 = tpu.matmul %50, %52, %cst_47 {dimension_numbers = #tpu.dot_dimension_numbers<[1], [0], [0], [1], [0, 0, 1, 1], [], []>} : vector<288x3xf32>, vector<3x32xf32>, vector<288x32xf32> -> vector<288x32xf32>
    %54 = arith.addf %48, %53 : vector<288x32xf32>
    %c0_48 = arith.constant 0 : index
    %c0_49 = arith.constant 0 : index
    %55 = vector.load %arg3[%c0_48, %c0_49] : memref<1x32xf32, #tpu.memory_space<vmem>>, vector<1x32xf32>
    %56 = vector.broadcast %55 : vector<1x32xf32> to vector<288x32xf32>
    %57 = arith.addf %54, %56 : vector<288x32xf32>
    %cst_50 = arith.constant 0.000000e+00 : f32
    %58 = vector.broadcast %cst_50 : f32 to vector<288x32xf32>
    %59 = arith.maximumf %57, %58 : vector<288x32xf32>
    %c0_51 = arith.constant 0 : index
    %c0_52 = arith.constant 0 : index
    %60 = vector.load %arg4[%c0_51, %c0_52] : memref<1x288xf32, #tpu.memory_space<vmem>>, vector<1x288xf32>
    %cst_53 = arith.constant dense<0.000000e+00> : vector<1x32xf32>
    %61 = tpu.matmul %60, %59, %cst_53 {dimension_numbers = #tpu.dot_dimension_numbers<[1], [0], [0], [1], [0, 0, 1, 1], [], []>} : vector<1x288xf32>, vector<288x32xf32>, vector<1x32xf32> -> vector<1x32xf32>
    %c0_54 = arith.constant 0 : index
    %c0_55 = arith.constant 0 : index
    %62 = vector.load %arg5[%c0_54, %c0_55] : memref<32x10xf32, #tpu.memory_space<vmem>>, vector<32x10xf32>
    %cst_56 = arith.constant dense<0.000000e+00> : vector<1x10xf32>
    %63 = tpu.matmul %61, %62, %cst_56 {dimension_numbers = #tpu.dot_dimension_numbers<[1], [0], [0], [1], [0, 0, 1, 1], [], []>} : vector<1x32xf32>, vector<32x10xf32>, vector<1x10xf32> -> vector<1x10xf32>
    %c0_57 = arith.constant 0 : index
    %c0_58 = arith.constant 0 : index
    %64 = vector.load %arg6[%c0_57, %c0_58] : memref<1x10xf32, #tpu.memory_space<vmem>>, vector<1x10xf32>
    %65 = arith.addf %63, %64 : vector<1x10xf32>
    %c0_59 = arith.constant 0 : index
    %c0_60 = arith.constant 0 : index
    %c0_61 = arith.constant 0 : index
    %66 = vector.load %arg7[%c0_59, %c0_60, %c0_61] : memref<1x1x10xf32, #tpu.memory_space<vmem>>, vector<1x1x10xf32>
    %67 = vector.shape_cast %66 : vector<1x1x10xf32> to vector<1x10xf32>
    %68 = vector.shape_cast %65 : vector<1x10xf32> to vector<1x1x10xf32>
    tpu.vector_store %arg7[%c0_59, %c0_60, %c0_61], %68 {strides = array<i32>} : memref<1x1x10xf32, #tpu.memory_space<vmem>>, vector<1x1x10xf32>,
    return
  }
  func.func @transform_0(%arg0: i32) -> (i32, i32, i32) {
    %c0_i32 = arith.constant 0 : i32
    %c0_i32_0 = arith.constant 0 : i32
    %c0_i32_1 = arith.constant 0 : i32
    return %arg0, %c0_i32, %c0_i32_0 : i32, i32, i32
  }
  func.func @transform_1(%arg0: i32) -> (i32, i32, i32) {
    %c0_i32 = arith.constant 0 : i32
    %c0_i32_0 = arith.constant 0 : i32
    %c0_i32_1 = arith.constant 0 : i32
    %c0_i32_2 = arith.constant 0 : i32
    return %c0_i32, %c0_i32_0, %c0_i32_1 : i32, i32, i32
  }
  func.func @transform_2(%arg0: i32) -> (i32, i32) {
    %c0_i32 = arith.constant 0 : i32
    %c0_i32_0 = arith.constant 0 : i32
    %c0_i32_1 = arith.constant 0 : i32
    return %c0_i32, %c0_i32_0 : i32, i32
  }
  func.func @transform_3(%arg0: i32) -> (i32, i32) {
    %c0_i32 = arith.constant 0 : i32
    %c0_i32_0 = arith.constant 0 : i32
    %c0_i32_1 = arith.constant 0 : i32
    return %c0_i32, %c0_i32_0 : i32, i32
  }
  func.func @transform_4(%arg0: i32) -> (i32, i32) {
    %c0_i32 = arith.constant 0 : i32
    %c0_i32_0 = arith.constant 0 : i32
    %c0_i32_1 = arith.constant 0 : i32
    return %c0_i32, %c0_i32_0 : i32, i32
  }
  func.func @transform_5(%arg0: i32) -> (i32, i32) {
    %c0_i32 = arith.constant 0 : i32
    %c0_i32_0 = arith.constant 0 : i32
    %c0_i32_1 = arith.constant 0 : i32
    return %c0_i32, %c0_i32_0 : i32, i32
  }
  func.func @transform_6(%arg0: i32) -> (i32, i32, i32) {
    %c0_i32 = arith.constant 0 : i32
    %c0_i32_0 = arith.constant 0 : i32
    %c0_i32_1 = arith.constant 0 : i32
    return %arg0, %c0_i32, %c0_i32_0 : i32, i32, i32
  }
}

</mosaic_0001>

<llo_original>
// kernel: classifier_forward.1
$region0: #{classifier_forward.1}
  #allocation0 [shape = 'u32[]', space=smem, size = 0x4, offset = 0x4, fixed_abs, tag = 'smem constant byte address 0x4 - core index']
  #allocation1 [shape = 'u32[144,128]{1,0:T(1,128)}', space=vmem, size = 0x12000, scoped, tag = 'internal scratch']
  %s0 = inlined_call_operand.vmem [shape: f32[2,326,3], index: 0, kind: input, shape index: {}]
  %s1 = inlined_call_operand.vmem [shape: f32[9,3,32], index: 1, kind: input, shape index: {}]
  %s2 = inlined_call_operand.vmem [shape: f32[1,32], index: 2, kind: input, shape index: {}]
  %s3 = inlined_call_operand.vmem [shape: f32[1,288], index: 3, kind: input, shape index: {}]
  %s4 = inlined_call_operand.vmem [shape: f32[32,10], index: 4, kind: input, shape index: {}]
  %s5 = inlined_call_operand.vmem [shape: f32[1,10], index: 5, kind: input, shape index: {}]
  %s6 = inlined_call_operand.hbm [shape: f32[2,1,10], index: 6, kind: output, shape index: {}]
  %s7 = sld [smem:[#allocation0]]
  $region57: #{classifier_forward.1} parent=0
    _
  %s9 = ssub.s32 1, %s7
  %s10 = scalar_select 0, %s9, %s7
  $region1: #{classifier_forward.1} parent=0
    #allocation2 [shape = 'u8[1024]{0}', space=vmem, size = 0x400, scoped, tag = 'output window, operand 0']
    #allocation3 [shape = 's32[2]{0}', space=sflag, size = 0x8, scoped, tag = 'scoped memory for classifier_forward.1']
    %11 = vsyncpa [#allocation3], 0
    %s12 = scalar_lea.sflag [#allocation3], 1
    %13 = vsyncpa %s12, 0
    loop: start=0, step=1, limit=4
    $region2: #{classifier_forward.1} parent=1 // loop_pre_header
      _
    $region3: #{classifier_forward.1} parent=1 // loop_header
      %s15 = sphi 0, %s19
      %p16 = scmp.ge.s32.totalorder %s15, 4
      %s25 = sphi 0, %s27
      %s28 = sphi 0, %s25
      %s29 = sphi 0, %s28
      %s45 = sphi 0, %s29
      %s49 = sphi 0, %s49
      %s51 = sphi 0, %s49
      %s52 = sphi 0, %s51
      %s66 = sphi 0, %s52
      %s70 = sphi 0, %s70
      %s72 = sphi 0, %s70
      %s73 = sphi 0, %s72
      %s87 = sphi 0, %s73
      %s91 = sphi 0, %s91
      %s93 = sphi 0, %s91
      %s94 = sphi 0, %s93
      %s108 = sphi 0, %s94
      %s112 = sphi 0, %s112
      %s114 = sphi 0, %s112
      %s115 = sphi 0, %s114
      %s129 = sphi 0, %s115
      %s133 = sphi 0, %s133
      %s135 = sphi 0, %s133
      %s136 = sphi 0, %s135
      %s150 = sphi 0, %s136
      %s156 = sphi 0, %s158
      %s159 = sphi 0, %s156
      %s160 = sphi 0, %s159
      %s176 = sphi 0, %s160
    $region4: #{classifier_forward.1} parent=1 // loop_header_branch
      %18 = sbr.rel (%p16) target = $region8
    $region5: #{classifier_forward.1} parent=1 // loop_body
      %s20 = ssub.s32 %s15, 1
      %s21 = ssub.s32 %s15, 2
      %s22 = sadd.s32 %s15, 1
      %s23 = ssub.s32 %s15, %s22
      %p24 = scmp.eq.s32.totalorder %s23, 0
      %s26 = sadd.s32 %s25, 1
      %s27 = scalar_select %p24, %s25, %s26
      %p30 = pneg %p24
      %p31 = scmp.eq.s32.totalorder %s15, 1
      %p32 = por %p30, %p31
      %p33 = scmp.ne.s32.totalorder %s25, %s28
      %p34 = scmp.eq.s32.totalorder %s15, 0
      %p35 = por %p33, %p34
      %p36 = scmp.ne.s32.totalorder %s25, %s28
      %p37 = scmp.eq.s32.totalorder %s20, 1
      %p38 = por %p36, %p37
      %p39 = scmp.ne.s32.totalorder %s28, %s29
      %p40 = scmp.eq.s32.totalorder %s20, 0
      %p41 = por %p39, %p40
      %p42 = scmp.ne.s32.totalorder %s28, %s29
      %p43 = scmp.eq.s32.totalorder %s21, 1
      %p44 = por %p42, %p43
      %p46 = scmp.ne.s32.totalorder %s29, %s45
      %p47 = scmp.eq.s32.totalorder %s21, 0
      %p48 = por %p46, %p47
      %s50 = sadd.s32 %s49, 1
      %p53 = scmp.eq.s32.totalorder %s15, 1
      %p54 = scmp.ne.s32.totalorder %s49, %s51
      %p55 = scmp.eq.s32.totalorder %s15, 0
      %p56 = por %p54, %p55
      %p57 = scmp.ne.s32.totalorder %s49, %s51
      %p58 = scmp.eq.s32.totalorder %s20, 1
      %p59 = por %p57, %p58
      %p60 = scmp.ne.s32.totalorder %s51, %s52
      %p61 = scmp.eq.s32.totalorder %s20, 0
      %p62 = por %p60, %p61
      %p63 = scmp.ne.s32.totalorder %s51, %s52
      %p64 = scmp.eq.s32.totalorder %s21, 1
      %p65 = por %p63, %p64
      %p67 = scmp.ne.s32.totalorder %s52, %s66
      %p68 = scmp.eq.s32.totalorder %s21, 0
      %p69 = por %p67, %p68
      %s71 = sadd.s32 %s70, 1
      %p74 = scmp.eq.s32.totalorder %s15, 1
      %p75 = scmp.ne.s32.totalorder %s70, %s72
      %p76 = scmp.eq.s32.totalorder %s15, 0
      %p77 = por %p75, %p76
      %p78 = scmp.ne.s32.totalorder %s70, %s72
      %p79 = scmp.eq.s32.totalorder %s20, 1
      %p80 = por %p78, %p79
      %p81 = scmp.ne.s32.totalorder %s72, %s73
      %p82 = scmp.eq.s32.totalorder %s20, 0
      %p83 = por %p81, %p82
      %p84 = scmp.ne.s32.totalorder %s72, %s73
      %p85 = scmp.eq.s32.totalorder %s21, 1
      %p86 = por %p84, %p85
      %p88 = scmp.ne.s32.totalorder %s73, %s87
      %p89 = scmp.eq.s32.totalorder %s21, 0
      %p90 = por %p88, %p89
      %s92 = sadd.s32 %s91, 1
      %p95 = scmp.eq.s32.totalorder %s15, 1
      %p96 = scmp.ne.s32.totalorder %s91, %s93
      %p97 = scmp.eq.s32.totalorder %s15, 0
      %p98 = por %p96, %p97
      %p99 = scmp.ne.s32.totalorder %s91, %s93
      %p100 = scmp.eq.s32.totalorder %s20, 1
      %p101 = por %p99, %p100
      %p102 = scmp.ne.s32.totalorder %s93, %s94
      %p103 = scmp.eq.s32.totalorder %s20, 0
      %p104 = por %p102, %p103
      %p105 = scmp.ne.s32.totalorder %s93, %s94
      %p106 = scmp.eq.s32.totalorder %s21, 1
      %p107 = por %p105, %p106
      %p109 = scmp.ne.s32.totalorder %s94, %s108
      %p110 = scmp.eq.s32.totalorder %s21, 0
      %p111 = por %p109, %p110
      %s113 = sadd.s32 %s112, 1
      %p116 = scmp.eq.s32.totalorder %s15, 1
      %p117 = scmp.ne.s32.totalorder %s112, %s114
      %p118 = scmp.eq.s32.totalorder %s15, 0
      %p119 = por %p117, %p118
      %p120 = scmp.ne.s32.totalorder %s112, %s114
      %p121 = scmp.eq.s32.totalorder %s20, 1
      %p122 = por %p120, %p121
      %p123 = scmp.ne.s32.totalorder %s114, %s115
      %p124 = scmp.eq.s32.totalorder %s20, 0
      %p125 = por %p123, %p124
      %p126 = scmp.ne.s32.totalorder %s114, %s115
      %p127 = scmp.eq.s32.totalorder %s21, 1
      %p128 = por %p126, %p127
      %p130 = scmp.ne.s32.totalorder %s115, %s129
      %p131 = scmp.eq.s32.totalorder %s21, 0
      %p132 = por %p130, %p131
      %s134 = sadd.s32 %s133, 1
      %p137 = scmp.eq.s32.totalorder %s15, 1
      %p138 = scmp.ne.s32.totalorder %s133, %s135
      %p139 = scmp.eq.s32.totalorder %s15, 0
      %p140 = por %p138, %p139
      %p141 = scmp.ne.s32.totalorder %s133, %s135
      %p142 = scmp.eq.s32.totalorder %s20, 1
      %p143 = por %p141, %p142
      %p144 = scmp.ne.s32.totalorder %s135, %s136
      %p145 = scmp.eq.s32.totalorder %s20, 0
      %p146 = por %p144, %p145
      %p147 = scmp.ne.s32.totalorder %s135, %s136
      %p148 = scmp.eq.s32.totalorder %s21, 1
      %p149 = por %p147, %p148
      %p151 = scmp.ne.s32.totalorder %s136, %s150
      %p152 = scmp.eq.s32.totalorder %s21, 0
      %p153 = por %p151, %p152
      %s154 = ssub.s32 %s15, %s22
      %p155 = scmp.eq.s32.totalorder %s154, 0
      %s157 = sadd.s32 %s156, 1
      %s158 = scalar_select %p155, %s156, %s157
      %p161 = pneg %p155
      %p162 = scmp.eq.s32.totalorder %s15, 1
      %p163 = por %p161, %p162
      %p164 = scmp.ne.s32.totalorder %s156, %s159
      %p165 = scmp.eq.s32.totalorder %s15, 0
      %p166 = por %p164, %p165
      %p167 = scmp.ne.s32.totalorder %s156, %s159
      %p168 = scmp.eq.s32.totalorder %s20, 1
      %p169 = por %p167, %p168
      %p170 = scmp.ne.s32.totalorder %s159, %s160
      %p171 = scmp.eq.s32.totalorder %s20, 0
      %p172 = por %p170, %p171
      %p173 = scmp.ne.s32.totalorder %s159, %s160
      %p174 = scmp.eq.s32.totalorder %s21, 1
      %p175 = por %p173, %p174
      %p177 = scmp.ne.s32.totalorder %s160, %s176
      %p178 = scmp.eq.s32.totalorder %s21, 0
      %p179 = por %p177, %p178
      %p180 = scmp.le.s32.totalorder 1, %s15
      %p181 = scmp.lt.s32.totalorder %s15, 3
      %p182 = pnand %p180, %p181
      %p183 = pneg %p182
      // Predicated region
      $region9: #{classifier_forward.1} parent=5 // pred_check
        _
      $region10: #{classifier_forward.1} parent=5 // pred_check_branch
        %185 = sbr.rel (%p182) target = $region12
      $region11: #{classifier_forward.1} parent=5 // pred_region
        %s186 = ssub.s32 %s15, 1
        // Predicated region
        $region13: #{classifier_forward.1} parent=11 // pred_check
          %p187 = pneg %p62
        $region14: #{classifier_forward.1} parent=11 // pred_check_branch
          %189 = sbr.rel (%p187) target = $region16
        $region15: #{classifier_forward.1} parent=11 // pred_region
          _
        $region16: #{classifier_forward.1} parent=11 // pred_fallthru
          _
        // Predicated region
        $region17: #{classifier_forward.1} parent=11 // pred_check
          %p190 = pneg %p83
        $region18: #{classifier_forward.1} parent=11 // pred_check_branch
          %192 = sbr.rel (%p190) target = $region20
        $region19: #{classifier_forward.1} parent=11 // pred_region
          _
        $region20: #{classifier_forward.1} parent=11 // pred_fallthru
          _
        // Predicated region
        $region21: #{classifier_forward.1} parent=11 // pred_check
          %p193 = pneg %p104
        $region22: #{classifier_forward.1} parent=11 // pred_check_branch
          %195 = sbr.rel (%p193) target = $region24
        $region23: #{classifier_forward.1} parent=11 // pred_region
          _
        $region24: #{classifier_forward.1} parent=11 // pred_fallthru
          _
        // Predicated region
        $region25: #{classifier_forward.1} parent=11 // pred_check
          %p196 = pneg %p125
        $region26: #{classifier_forward.1} parent=11 // pred_check_branch
          %198 = sbr.rel (%p196) target = $region28
        $region27: #{classifier_forward.1} parent=11 // pred_region
          _
        $region28: #{classifier_forward.1} parent=11 // pred_fallthru
          _
        // Predicated region
        $region29: #{classifier_forward.1} parent=11 // pred_check
          %p199 = pneg %p146
        $region30: #{classifier_forward.1} parent=11 // pred_check_branch
          %201 = sbr.rel (%p199) target = $region32
        $region31: #{classifier_forward.1} parent=11 // pred_region
          _
        $region32: #{classifier_forward.1} parent=11 // pred_fallthru
          _
      $region12: #{classifier_forward.1} parent=5 // pred_fallthru
        _
      %p202 = scmp.lt.s32.totalorder %s15, 2
      // Predicated region
      $region33: #{classifier_forward.1} parent=5 // pred_check
        %p203 = pneg %p202
      $region34: #{classifier_forward.1} parent=5 // pred_check_branch
        %205 = sbr.rel (%p203) target = $region36
      $region35: #{classifier_forward.1} parent=5 // pred_region
        // Predicated region
        $region37: #{classifier_forward.1} parent=35 // pred_check
          %p206 = pneg %p35
        $region38: #{classifier_forward.1} parent=35 // pred_check_branch
          %208 = sbr.rel (%p206) target = $region40
        $region39: #{classifier_forward.1} parent=35 // pred_region
          %p209 = scmp.lt.s32.totalorder %s15, 1
          %s210 = scalar_select %p209, %s15, 1
          %s211 = smul.addr %s210, 41
          %s212 = smul.addr %s211, 8
          %s213 = scalar_lea.vmem %s0, %s212
        $region40: #{classifier_forward.1} parent=35 // pred_fallthru
          _
      $region36: #{classifier_forward.1} parent=5 // pred_fallthru
        _
      %p214 = scmp.le.s32.totalorder 1, %s15
      %p215 = scmp.lt.s32.totalorder %s15, 3
      %p216 = pnand %p214, %p215
      %p217 = pneg %p216
      // Predicated region
      $region41: #{classifier_forward.1} parent=5 // pred_check
        _
      $region42: #{classifier_forward.1} parent=5 // pred_check_branch
        %219 = sbr.rel (%p216) target = $region44
      $region43: #{classifier_forward.1} parent=5 // pred_region
        %s220 = ssub.s32 %s15, 1
        %p221 = scmp.lt.s32.totalorder %s20, 1
        %s222 = scalar_select %p221, %s20, 1
        %s223 = smul.addr %s222, 41
        %s224 = smul.addr %s223, 8
        %s225 = scalar_lea.vmem %s0, %s224
        %p226 = pneg %p41
        %p227 = pneg %p38
        %p228 = pneg %p62
        %p229 = pneg %p59
        %p230 = pneg %p83
        %p231 = pneg %p80
        %p232 = pneg %p104
        %p233 = pneg %p101
        %p234 = pneg %p125
        %p235 = pneg %p122
        %p236 = pneg %p146
        %p237 = pneg %p143
        %p238 = pneg %p172
        %p239 = pneg %p169
        %s240 = sand.u32 %s159, 1
        %s241 = scalar_lea.sflag [#allocation3], %s240
        %s242 = sand.u32 %s159, 1
        %s243 = scalar_lea.vmem [#allocation2], %s242
        %p244 = scmp.lt.s32.totalorder %s20, 1
        %s245 = scalar_select %p244, %s20, 1
        %s246 = smul.addr %s245, 41
        %s247 = smul.addr %s246, 8
        %s248 = scalar_lea.vmem %s0, %s247
        %v249 = vld [vmem:[%s248] sm:$0xff]
        %v250 = vld [vmem:[%s248 + $0x8] sm:$0xff]
        %v251 = vld [vmem:[%s248 + $0x10] sm:$0xff]
        %v252 = vld [vmem:[%s248 + $0x18] sm:$0xff]
        %v253 = vld [vmem:[%s248 + $0x20] sm:$0xff]
        %v254 = vld [vmem:[%s248 + $0x28] sm:$0xff]
        %v255 = vld [vmem:[%s248 + $0x30] sm:$0xff]
        %v256 = vld [vmem:[%s248 + $0x38] sm:$0xff]
        %v257 = vld [vmem:[%s248 + $0x40] sm:$0xff]
        %v258 = vld [vmem:[%s248 + $0x48] sm:$0xff]
        %v259 = vld [vmem:[%s248 + $0x50] sm:$0xff]
        %v260 = vld [vmem:[%s248 + $0x58] sm:$0xff]
        %v261 = vld [vmem:[%s248 + $0x60] sm:$0xff]
        %v262 = vld [vmem:[%s248 + $0x68] sm:$0xff]
        %v263 = vld [vmem:[%s248 + $0x70] sm:$0xff]
        %v264 = vld [vmem:[%s248 + $0x78] sm:$0xff]
        %v265 = vld [vmem:[%s248 + $0x80] sm:$0xff]
        %v266 = vld [vmem:[%s248 + $0x88] sm:$0xff]
        %v267 = vld [vmem:[%s248 + $0x90] sm:$0xff]
        %v268 = vld [vmem:[%s248 + $0x98] sm:$0xff]
        %v269 = vld [vmem:[%s248 + $0xa0] sm:$0xff]
        %v270 = vld [vmem:[%s248 + $0xa8] sm:$0xff]
        %v271 = vld [vmem:[%s248 + $0xb0] sm:$0xff]
        %v272 = vld [vmem:[%s248 + $0xb8] sm:$0xff]
        %v273 = vld [vmem:[%s248 + $0xc0] sm:$0xff]
        %v274 = vld [vmem:[%s248 + $0xc8] sm:$0xff]
        %v275 = vld [vmem:[%s248 + $0xd0] sm:$0xff]
        %v276 = vld [vmem:[%s248 + $0xd8] sm:$0xff]
        %v277 = vld [vmem:[%s248 + $0xe0] sm:$0xff]
        %v278 = vld [vmem:[%s248 + $0xe8] sm:$0xff]
        %v279 = vld [vmem:[%s248 + $0xf0] sm:$0xff]
        %v280 = vld [vmem:[%s248 + $0xf8] sm:$0xff]
        %v281 = vld [vmem:[%s248 + $0x100] sm:$0xff]
        %v282 = vld [vmem:[%s248 + $0x108] sm:$0xff]
        %v283 = vld [vmem:[%s248 + $0x110] sm:$0xff]
        %v284 = vld [vmem:[%s248 + $0x118] sm:$0xff]
        %v285 = vld [vmem:[%s1] sm:$0x7]
        %v286 = vld [vmem:[%s248 + $0x1] sm:$0xff]
        %v287 = vld [vmem:[%s248 + $0x9] sm:$0xff]
        %v288 = vld [vmem:[%s248 + $0x11] sm:$0xff]
        %v289 = vld [vmem:[%s248 + $0x19] sm:$0xff]
        %v290 = vld [vmem:[%s248 + $0x21] sm:$0xff]
        %v291 = vld [vmem:[%s248 + $0x29] sm:$0xff]
        %v292 = vld [vmem:[%s248 + $0x31] sm:$0xff]
        %v293 = vld [vmem:[%s248 + $0x39] sm:$0xff]
        %v294 = vld [vmem:[%s248 + $0x41] sm:$0xff]
        %v295 = vld [vmem:[%s248 + $0x49] sm:$0xff]
        %v296 = vld [vmem:[%s248 + $0x51] sm:$0xff]
        %v297 = vld [vmem:[%s248 + $0x59] sm:$0xff]
        %v298 = vld [vmem:[%s248 + $0x61] sm:$0xff]
        %v299 = vld [vmem:[%s248 + $0x69] sm:$0xff]
        %v300 = vld [vmem:[%s248 + $0x71] sm:$0xff]
        %v301 = vld [vmem:[%s248 + $0x79] sm:$0xff]
        %v302 = vld [vmem:[%s248 + $0x81] sm:$0xff]
        %v303 = vld [vmem:[%s248 + $0x89] sm:$0xff]
        %v304 = vld [vmem:[%s248 + $0x91] sm:$0xff]
        %v305 = vld [vmem:[%s248 + $0x99] sm:$0xff]
        %v306 = vld [vmem:[%s248 + $0xa1] sm:$0xff]
        %v307 = vld [vmem:[%s248 + $0xa9] sm:$0xff]
        %v308 = vld [vmem:[%s248 + $0xb1] sm:$0xff]
        %v309 = vld [vmem:[%s248 + $0xb9] sm:$0xff]
        %v310 = vld [vmem:[%s248 + $0xc1] sm:$0xff]
        %v311 = vld [vmem:[%s248 + $0xc9] sm:$0xff]
        %v312 = vld [vmem:[%s248 + $0xd1] sm:$0xff]
        %v313 = vld [vmem:[%s248 + $0xd9] sm:$0xff]
        %v314 = vld [vmem:[%s248 + $0xe1] sm:$0xff]
        %v315 = vld [vmem:[%s248 + $0xe9] sm:$0xff]
        %v316 = vld [vmem:[%s248 + $0xf1] sm:$0xff]
        %v317 = vld [vmem:[%s248 + $0xf9] sm:$0xff]
        %v318 = vld [vmem:[%s248 + $0x101] sm:$0xff]
        %v319 = vld [vmem:[%s248 + $0x109] sm:$0xff]
        %v320 = vld [vmem:[%s248 + $0x111] sm:$0xff]
        %v321 = vld [vmem:[%s248 + $0x119] sm:$0xff]
        %s322 = scalar_lea.vmem %s1, 4
        %v323 = vld [vmem:[%s322] sm:$0x7]
        %vm324 = vcmask 23552
        %v326 = vsel %vm324, %v286, 0
        %v329 = vsel %vm324, %v287, 0
        %v332 = vsel %vm324, %v288, 0
        %v335 = vsel %vm324, %v289, 0
        %v338 = vsel %vm324, %v290, 0
        %v341 = vsel %vm324, %v291, 0
        %v344 = vsel %vm324, %v292, 0
        %v347 = vsel %vm324, %v293, 0
        %v350 = vsel %vm324, %v294, 0
        %v353 = vsel %vm324, %v295, 0
        %v356 = vsel %vm324, %v296, 0
        %v359 = vsel %vm324, %v297, 0
        %v362 = vsel %vm324, %v298, 0
        %v365 = vsel %vm324, %v299, 0
        %v368 = vsel %vm324, %v300, 0
        %v371 = vsel %vm324, %v301, 0
        %v374 = vsel %vm324, %v302, 0
        %v377 = vsel %vm324, %v303, 0
        %v380 = vsel %vm324, %v304, 0
        %v383 = vsel %vm324, %v305, 0
        %v386 = vsel %vm324, %v306, 0
        %v389 = vsel %vm324, %v307, 0
        %v392 = vsel %vm324, %v308, 0
        %v395 = vsel %vm324, %v309, 0
        %v398 = vsel %vm324, %v310, 0
        %v401 = vsel %vm324, %v311, 0
        %v404 = vsel %vm324, %v312, 0
        %v407 = vsel %vm324, %v313, 0
        %v410 = vsel %vm324, %v314, 0
        %v413 = vsel %vm324, %v315, 0
        %v416 = vsel %vm324, %v316, 0
        %v419 = vsel %vm324, %v317, 0
        %v422 = vsel %vm324, %v318, 0
        %v425 = vsel %vm324, %v319, 0
        %v428 = vsel %vm324, %v320, 0
        %v431 = vsel %vm324, %v321, 0
        %vm433 = vcmask 1042432
        %v435 = vsel %vm433, %v323, 0
        %437 = vmatprep.subr.mxu0 0.0
        %438 = vmatpush1.msra.mxu0 0.0
        %439 = vmatprep.subr.mxu0 0.0
        %440 = vmatpush1.msra.mxu0 0.0
        %441 = vmatprep.subr.mxu0 0.0
        %442 = vmatpush1.msra.mxu0 0.0
        %443 = vmatprep.subr.mxu0 0.0
        %444 = vmatpush1.msra.mxu0 0.0
        %445 = vmatprep.subr.mxu0 0.0
        %446 = vmatpush1.msra.mxu0 0.0
        %447 = vmatprep.subr.mxu0 0.0
        %448 = vmatpush1.msra.mxu0 0.0
        %449 = vmatprep.subr.mxu0 0.0
        %450 = vmatpush1.msra.mxu0 0.0
        %451 = vmatprep.subr.mxu0 0.0
        %452 = vmatpush1.msra.mxu0 0.0
        %453 = vmatprep.subr.mxu0 0.0
        %454 = vmatpush1.msra.mxu0 0.0
        %455 = vmatprep.subr.mxu0 0.0
        %456 = vmatpush1.msra.mxu0 0.0
        %457 = vmatprep.subr.mxu0 0.0
        %458 = vmatpush1.msra.mxu0 0.0
        %459 = vmatprep.subr.mxu0 0.0
        %460 = vmatpush1.msra.mxu0 0.0
        %461 = vmatprep.subr.mxu0 0.0
        %462 = vmatpush1.msra.mxu0 0.0
        %463 = vmatprep.subr.mxu0 0.0
        %464 = vmatpush1.msra.mxu0 0.0
        %465 = vmatprep.subr.mxu0 0.0
        %466 = vmatpush1.msra.mxu0 0.0
        %467 = vmatprep.subr.mxu0 0.0
        %468 = vmatpush1.msra.mxu0 %v435
        %469 = vmatprep.subr.mxu0 0.0
        %470 = vmatpush2.msra.mxu0 0.0
        %471 = vmatprep.subr.mxu0 0.0
        %472 = vmatpush2.msra.mxu0 0.0
        %473 = vmatprep.subr.mxu0 0.0
        %474 = vmatpush2.msra.mxu0 0.0
        %475 = vmatprep.subr.mxu0 0.0
        %476 = vmatpush2.msra.mxu0 0.0
        %477 = vmatprep.subr.mxu0 0.0
        %478 = vmatpush2.msra.mxu0 0.0
        %479 = vmatprep.subr.mxu0 0.0
        %480 = vmatpush2.msra.mxu0 0.0
        %481 = vmatprep.subr.mxu0 0.0
        %482 = vmatpush2.msra.mxu0 0.0
        %483 = vmatprep.subr.mxu0 0.0
        %484 = vmatpush2.msra.mxu0 0.0
        %485 = vmatprep.subr.mxu0 0.0
        %486 = vmatpush2.msra.mxu0 0.0
        %487 = vmatprep.subr.mxu0 0.0
        %488 = vmatpush2.msra.mxu0 0.0
        %489 = vmatprep.subr.mxu0 0.0
        %490 = vmatpush2.msra.mxu0 0.0
        %491 = vmatprep.subr.mxu0 0.0
        %492 = vmatpush2.msra.mxu0 0.0
        %493 = vmatprep.subr.mxu0 0.0
        %494 = vmatpush2.msra.mxu0 0.0
        %495 = vmatprep.subr.mxu0 0.0
        %496 = vmatpush2.msra.mxu0 0.0
        %497 = vmatprep.subr.mxu0 0.0
        %498 = vmatpush2.msra.mxu0 0.0
        %499 = vmatprep.subr.mxu0 0.0
        %500 = vmatpush2.msra.mxu0 0.0
        %501 = vmatprep.mubr.f32.mxu0 0.0
        %502 = vmatmul.mubr.f32.gmra.mxu0 %v326
        %v503 = vpop.f32.mrf.mxu0
        %v504 = vadd.f32 0.0, %v503
        %v505 = vpop.f32.mrf.mxu0
        %506 = vmatprep.mubr.f32.mxu0 0.0
        %507 = vmatmul.mubr.f32.gmra.mxu0 %v329
        %v508 = vpop.f32.mrf.mxu0
        %v509 = vadd.f32 0.0, %v508
        %v510 = vpop.f32.mrf.mxu0
        %511 = vmatprep.mubr.f32.mxu0 0.0
        %512 = vmatmul.mubr.f32.gmra.mxu0 %v332
        %v513 = vpop.f32.mrf.mxu0
        %v514 = vadd.f32 0.0, %v513
        %v515 = vpop.f32.mrf.mxu0
        %516 = vmatprep.mubr.f32.mxu0 0.0
        %517 = vmatmul.mubr.f32.gmra.mxu0 %v335
        %v518 = vpop.f32.mrf.mxu0
        %v519 = vadd.f32 0.0, %v518
        %v520 = vpop.f32.mrf.mxu0
        %521 = vmatprep.mubr.f32.mxu0 0.0
        %522 = vmatmul.mubr.f32.gmra.mxu0 %v338
        %v523 = vpop.f32.mrf.mxu0
        %v524 = vadd.f32 0.0, %v523
        %v525 = vpop.f32.mrf.mxu0
        %526 = vmatprep.mubr.f32.mxu0 0.0
        %527 = vmatmul.mubr.f32.gmra.mxu0 %v341
        %v528 = vpop.f32.mrf.mxu0
        %v529 = vadd.f32 0.0, %v528
        %v530 = vpop.f32.mrf.mxu0
        %531 = vmatprep.mubr.f32.mxu0 0.0
        %532 = vmatmul.mubr.f32.gmra.mxu0 %v344
        %v533 = vpop.f32.mrf.mxu0
        %v534 = vadd.f32 0.0, %v533
        %v535 = vpop.f32.mrf.mxu0
        %536 = vmatprep.mubr.f32.mxu0 0.0
        %537 = vmatmul.mubr.f32.gmra.mxu0 %v347
        %v538 = vpop.f32.mrf.mxu0
        %v539 = vadd.f32 0.0, %v538
        %v540 = vpop.f32.mrf.mxu0
        %541 = vmatprep.mubr.f32.mxu0 0.0
        %542 = vmatmul.mubr.f32.gmra.mxu0 %v350
        %v543 = vpop.f32.mrf.mxu0
        %v544 = vadd.f32 0.0, %v543
        %v545 = vpop.f32.mrf.mxu0
        %546 = vmatprep.mubr.f32.mxu0 0.0
        %547 = vmatmul.mubr.f32.gmra.mxu0 %v353
        %v548 = vpop.f32.mrf.mxu0
        %v549 = vadd.f32 0.0, %v548
        %v550 = vpop.f32.mrf.mxu0
        %551 = vmatprep.mubr.f32.mxu0 0.0
        %552 = vmatmul.mubr.f32.gmra.mxu0 %v356
        %v553 = vpop.f32.mrf.mxu0
        %v554 = vadd.f32 0.0, %v553
        %v555 = vpop.f32.mrf.mxu0
        %556 = vmatprep.mubr.f32.mxu0 0.0
        %557 = vmatmul.mubr.f32.gmra.mxu0 %v359
        %v558 = vpop.f32.mrf.mxu0
        %v559 = vadd.f32 0.0, %v558
        %v560 = vpop.f32.mrf.mxu0
        %561 = vmatprep.mubr.f32.mxu0 0.0
        %562 = vmatmul.mubr.f32.gmra.mxu0 %v362
        %v563 = vpop.f32.mrf.mxu0
        %v564 = vadd.f32 0.0, %v563
        %v565 = vpop.f32.mrf.mxu0
        %566 = vmatprep.mubr.f32.mxu0 0.0
        %567 = vmatmul.mubr.f32.gmra.mxu0 %v365
        %v568 = vpop.f32.mrf.mxu0
        %v569 = vadd.f32 0.0, %v568
        %v570 = vpop.f32.mrf.mxu0
        %571 = vmatprep.mubr.f32.mxu0 0.0
        %572 = vmatmul.mubr.f32.gmra.mxu0 %v368
        %v573 = vpop.f32.mrf.mxu0
        %v574 = vadd.f32 0.0, %v573
        %v575 = vpop.f32.mrf.mxu0
        %576 = vmatprep.mubr.f32.mxu0 0.0
        %577 = vmatmul.mubr.f32.gmra.mxu0 %v371
        %v578 = vpop.f32.mrf.mxu0
        %v579 = vadd.f32 0.0, %v578
        %v580 = vpop.f32.mrf.mxu0
        %581 = vmatprep.mubr.f32.mxu0 0.0
        %582 = vmatmul.mubr.f32.gmra.mxu0 %v374
        %v583 = vpop.f32.mrf.mxu0
        %v584 = vadd.f32 0.0, %v583
        %v585 = vpop.f32.mrf.mxu0
        %586 = vmatprep.mubr.f32.mxu0 0.0
        %587 = vmatmul.mubr.f32.gmra.mxu0 %v377
        %v588 = vpop.f32.mrf.mxu0
        %v589 = vadd.f32 0.0, %v588
        %v590 = vpop.f32.mrf.mxu0
        %591 = vmatprep.mubr.f32.mxu0 0.0
        %592 = vmatmul.mubr.f32.gmra.mxu0 %v380
        %v593 = vpop.f32.mrf.mxu0
        %v594 = vadd.f32 0.0, %v593
        %v595 = vpop.f32.mrf.mxu0
        %596 = vmatprep.mubr.f32.mxu0 0.0
        %597 = vmatmul.mubr.f32.gmra.mxu0 %v383
        %v598 = vpop.f32.mrf.mxu0
        %v599 = vadd.f32 0.0, %v598
        %v600 = vpop.f32.mrf.mxu0
        %601 = vmatprep.mubr.f32.mxu0 0.0
        %602 = vmatmul.mubr.f32.gmra.mxu0 %v386
        %v603 = vpop.f32.mrf.mxu0
        %v604 = vadd.f32 0.0, %v603
        %v605 = vpop.f32.mrf.mxu0
        %606 = vmatprep.mubr.f32.mxu0 0.0
        %607 = vmatmul.mubr.f32.gmra.mxu0 %v389
        %v608 = vpop.f32.mrf.mxu0
        %v609 = vadd.f32 0.0, %v608
        %v610 = vpop.f32.mrf.mxu0
        %611 = vmatprep.mubr.f32.mxu0 0.0
        %612 = vmatmul.mubr.f32.gmra.mxu0 %v392
        %v613 = vpop.f32.mrf.mxu0
        %v614 = vadd.f32 0.0, %v613
        %v615 = vpop.f32.mrf.mxu0
        %616 = vmatprep.mubr.f32.mxu0 0.0
        %617 = vmatmul.mubr.f32.gmra.mxu0 %v395
        %v618 = vpop.f32.mrf.mxu0
        %v619 = vadd.f32 0.0, %v618
        %v620 = vpop.f32.mrf.mxu0
        %621 = vmatprep.mubr.f32.mxu0 0.0
        %622 = vmatmul.mubr.f32.gmra.mxu0 %v398
        %v623 = vpop.f32.mrf.mxu0
        %v624 = vadd.f32 0.0, %v623
        %v625 = vpop.f32.mrf.mxu0
        %626 = vmatprep.mubr.f32.mxu0 0.0
        %627 = vmatmul.mubr.f32.gmra.mxu0 %v401
        %v628 = vpop.f32.mrf.mxu0
        %v629 = vadd.f32 0.0, %v628
        %v630 = vpop.f32.mrf.mxu0
        %631 = vmatprep.mubr.f32.mxu0 0.0
        %632 = vmatmul.mubr.f32.gmra.mxu0 %v404
        %v633 = vpop.f32.mrf.mxu0
        %v634 = vadd.f32 0.0, %v633
        %v635 = vpop.f32.mrf.mxu0
        %636 = vmatprep.mubr.f32.mxu0 0.0
        %637 = vmatmul.mubr.f32.gmra.mxu0 %v407
        %v638 = vpop.f32.mrf.mxu0
        %v639 = vadd.f32 0.0, %v638
        %v640 = vpop.f32.mrf.mxu0
        %641 = vmatprep.mubr.f32.mxu0 0.0
        %642 = vmatmul.mubr.f32.gmra.mxu0 %v410
        %v643 = vpop.f32.mrf.mxu0
        %v644 = vadd.f32 0.0, %v643
        %v645 = vpop.f32.mrf.mxu0
        %646 = vmatprep.mubr.f32.mxu0 0.0
        %647 = vmatmul.mubr.f32.gmra.mxu0 %v413
        %v648 = vpop.f32.mrf.mxu0
        %v649 = vadd.f32 0.0, %v648
        %v650 = vpop.f32.mrf.mxu0
        %651 = vmatprep.mubr.f32.mxu0 0.0
        %652 = vmatmul.mubr.f32.gmra.mxu0 %v416
        %v653 = vpop.f32.mrf.mxu0
        %v654 = vadd.f32 0.0, %v653
        %v655 = vpop.f32.mrf.mxu0
        %656 = vmatprep.mubr.f32.mxu0 0.0
        %657 = vmatmul.mubr.f32.gmra.mxu0 %v419
        %v658 = vpop.f32.mrf.mxu0
        %v659 = vadd.f32 0.0, %v658
        %v660 = vpop.f32.mrf.mxu0
        %661 = vmatprep.mubr.f32.mxu0 0.0
        %662 = vmatmul.mubr.f32.gmra.mxu0 %v422
        %v663 = vpop.f32.mrf.mxu0
        %v664 = vadd.f32 0.0, %v663
        %v665 = vpop.f32.mrf.mxu0
        %666 = vmatprep.mubr.f32.mxu0 0.0
        %667 = vmatmul.mubr.f32.gmra.mxu0 %v425
        %v668 = vpop.f32.mrf.mxu0
        %v669 = vadd.f32 0.0, %v668
        %v670 = vpop.f32.mrf.mxu0
        %671 = vmatprep.mubr.f32.mxu0 0.0
        %672 = vmatmul.mubr.f32.gmra.mxu0 %v428
        %v673 = vpop.f32.mrf.mxu0
        %v674 = vadd.f32 0.0, %v673
        %v675 = vpop.f32.mrf.mxu0
        %676 = vmatprep.mubr.f32.mxu0 0.0
        %677 = vmatmul.mubr.f32.gmra.mxu0 %v431
        %v678 = vpop.f32.mrf.mxu0
        %v679 = vadd.f32 0.0, %v678
        %v680 = vpop.f32.mrf.mxu0
        %681 = vdwg.mxu0
        %v683 = vsel %vm324, %v249, 0
        %v686 = vsel %vm324, %v250, 0
        %v689 = vsel %vm324, %v251, 0
        %v692 = vsel %vm324, %v252, 0
        %v695 = vsel %vm324, %v253, 0
        %v698 = vsel %vm324, %v254, 0
        %v701 = vsel %vm324, %v255, 0
        %v704 = vsel %vm324, %v256, 0
        %v707 = vsel %vm324, %v257, 0
        %v710 = vsel %vm324, %v258, 0
        %v713 = vsel %vm324, %v259, 0
        %v716 = vsel %vm324, %v260, 0
        %v719 = vsel %vm324, %v261, 0
        %v722 = vsel %vm324, %v262, 0
        %v725 = vsel %vm324, %v263, 0
        %v728 = vsel %vm324, %v264, 0
        %v731 = vsel %vm324, %v265, 0
        %v734 = vsel %vm324, %v266, 0
        %v737 = vsel %vm324, %v267, 0
        %v740 = vsel %vm324, %v268, 0
        %v743 = vsel %vm324, %v269, 0
        %v746 = vsel %vm324, %v270, 0
        %v749 = vsel %vm324, %v271, 0
        %v752 = vsel %vm324, %v272, 0
        %v755 = vsel %vm324, %v273, 0
        %v758 = vsel %vm324, %v274, 0
        %v761 = vsel %vm324, %v275, 0
        %v764 = vsel %vm324, %v276, 0
        %v767 = vsel %vm324, %v277, 0
        %v770 = vsel %vm324, %v278, 0
        %v773 = vsel %vm324, %v279, 0
        %v776 = vsel %vm324, %v280, 0
        %v779 = vsel %vm324, %v281, 0
        %v782 = vsel %vm324, %v282, 0
        %v785 = vsel %vm324, %v283, 0
        %v788 = vsel %vm324, %v284, 0
        %v791 = vsel %vm433, %v285, 0
        %793 = vmatprep.subr.mxu0 0.0
        %794 = vmatpush1.msra.mxu0 0.0
        %795 = vmatprep.subr.mxu0 0.0
        %796 = vmatpush1.msra.mxu0 0.0
        %797 = vmatprep.subr.mxu0 0.0
        %798 = vmatpush1.msra.mxu0 0.0
        %799 = vmatprep.subr.mxu0 0.0
        %800 = vmatpush1.msra.mxu0 0.0
        %801 = vmatprep.subr.mxu0 0.0
        %802 = vmatpush1.msra.mxu0 0.0
        %803 = vmatprep.subr.mxu0 0.0
        %804 = vmatpush1.msra.mxu0 0.0
        %805 = vmatprep.subr.mxu0 0.0
        %806 = vmatpush1.msra.mxu0 0.0
        %807 = vmatprep.subr.mxu0 0.0
        %808 = vmatpush1.msra.mxu0 0.0
        %809 = vmatprep.subr.mxu0 0.0
        %810 = vmatpush1.msra.mxu0 0.0
        %811 = vmatprep.subr.mxu0 0.0
        %812 = vmatpush1.msra.mxu0 0.0
        %813 = vmatprep.subr.mxu0 0.0
        %814 = vmatpush1.msra.mxu0 0.0
        %815 = vmatprep.subr.mxu0 0.0
        %816 = vmatpush1.msra.mxu0 0.0
        %817 = vmatprep.subr.mxu0 0.0
        %818 = vmatpush1.msra.mxu0 0.0
        %819 = vmatprep.subr.mxu0 0.0
        %820 = vmatpush1.msra.mxu0 0.0
        %821 = vmatprep.subr.mxu0 0.0
        %822 = vmatpush1.msra.mxu0 0.0
        %823 = vmatprep.subr.mxu0 0.0
        %824 = vmatpush1.msra.mxu0 %v791
        %825 = vmatprep.subr.mxu0 0.0
        %826 = vmatpush2.msra.mxu0 0.0
        %827 = vmatprep.subr.mxu0 0.0
        %828 = vmatpush2.msra.mxu0 0.0
        %829 = vmatprep.subr.mxu0 0.0
        %830 = vmatpush2.msra.mxu0 0.0
        %831 = vmatprep.subr.mxu0 0.0
        %832 = vmatpush2.msra.mxu0 0.0
        %833 = vmatprep.subr.mxu0 0.0
        %834 = vmatpush2.msra.mxu0 0.0
        %835 = vmatprep.subr.mxu0 0.0
        %836 = vmatpush2.msra.mxu0 0.0
        %837 = vmatprep.subr.mxu0 0.0
        %838 = vmatpush2.msra.mxu0 0.0
        %839 = vmatprep.subr.mxu0 0.0
        %840 = vmatpush2.msra.mxu0 0.0
        %841 = vmatprep.subr.mxu0 0.0
        %842 = vmatpush2.msra.mxu0 0.0
        %843 = vmatprep.subr.mxu0 0.0
        %844 = vmatpush2.msra.mxu0 0.0
        %845 = vmatprep.subr.mxu0 0.0
        %846 = vmatpush2.msra.mxu0 0.0
        %847 = vmatprep.subr.mxu0 0.0
        %848 = vmatpush2.msra.mxu0 0.0
        %849 = vmatprep.subr.mxu0 0.0
        %850 = vmatpush2.msra.mxu0 0.0
        %851 = vmatprep.subr.mxu0 0.0
        %852 = vmatpush2.msra.mxu0 0.0
        %853 = vmatprep.subr.mxu0 0.0
        %854 = vmatpush2.msra.mxu0 0.0
        %855 = vmatprep.subr.mxu0 0.0
        %856 = vmatpush2.msra.mxu0 0.0
        %857 = vmatprep.mubr.f32.mxu0 0.0
        %858 = vmatmul.mubr.f32.gmra.mxu0 %v683
        %v859 = vpop.f32.mrf.mxu0
        %v860 = vadd.f32 %v504, %v859
        %v861 = vpop.f32.mrf.mxu0
        %862 = vmatprep.mubr.f32.mxu0 0.0
        %863 = vmatmul.mubr.f32.gmra.mxu0 %v686
        %v864 = vpop.f32.mrf.mxu0
        %v865 = vadd.f32 %v509, %v864
        %v866 = vpop.f32.mrf.mxu0
        %867 = vmatprep.mubr.f32.mxu0 0.0
        %868 = vmatmul.mubr.f32.gmra.mxu0 %v689
        %v869 = vpop.f32.mrf.mxu0
        %v870 = vadd.f32 %v514, %v869
        %v871 = vpop.f32.mrf.mxu0
        %872 = vmatprep.mubr.f32.mxu0 0.0
        %873 = vmatmul.mubr.f32.gmra.mxu0 %v692
        %v874 = vpop.f32.mrf.mxu0
        %v875 = vadd.f32 %v519, %v874
        %v876 = vpop.f32.mrf.mxu0
        %877 = vmatprep.mubr.f32.mxu0 0.0
        %878 = vmatmul.mubr.f32.gmra.mxu0 %v695
        %v879 = vpop.f32.mrf.mxu0
        %v880 = vadd.f32 %v524, %v879
        %v881 = vpop.f32.mrf.mxu0
        %882 = vmatprep.mubr.f32.mxu0 0.0
        %883 = vmatmul.mubr.f32.gmra.mxu0 %v698
        %v884 = vpop.f32.mrf.mxu0
        %v885 = vadd.f32 %v529, %v884
        %v886 = vpop.f32.mrf.mxu0
        %887 = vmatprep.mubr.f32.mxu0 0.0
        %888 = vmatmul.mubr.f32.gmra.mxu0 %v701
        %v889 = vpop.f32.mrf.mxu0
        %v890 = vadd.f32 %v534, %v889
        %v891 = vpop.f32.mrf.mxu0
        %892 = vmatprep.mubr.f32.mxu0 0.0
        %893 = vmatmul.mubr.f32.gmra.mxu0 %v704
        %v894 = vpop.f32.mrf.mxu0
        %v895 = vadd.f32 %v539, %v894
        %v896 = vpop.f32.mrf.mxu0
        %897 = vmatprep.mubr.f32.mxu0 0.0
        %898 = vmatmul.mubr.f32.gmra.mxu0 %v707
        %v899 = vpop.f32.mrf.mxu0
        %v900 = vadd.f32 %v544, %v899
        %v901 = vpop.f32.mrf.mxu0
        %902 = vmatprep.mubr.f32.mxu0 0.0
        %903 = vmatmul.mubr.f32.gmra.mxu0 %v710
        %v904 = vpop.f32.mrf.mxu0
        %v905 = vadd.f32 %v549, %v904
        %v906 = vpop.f32.mrf.mxu0
        %907 = vmatprep.mubr.f32.mxu0 0.0
        %908 = vmatmul.mubr.f32.gmra.mxu0 %v713
        %v909 = vpop.f32.mrf.mxu0
        %v910 = vadd.f32 %v554, %v909
        %v911 = vpop.f32.mrf.mxu0
        %912 = vmatprep.mubr.f32.mxu0 0.0
        %913 = vmatmul.mubr.f32.gmra.mxu0 %v716
        %v914 = vpop.f32.mrf.mxu0
        %v915 = vadd.f32 %v559, %v914
        %v916 = vpop.f32.mrf.mxu0
        %917 = vmatprep.mubr.f32.mxu0 0.0
        %918 = vmatmul.mubr.f32.gmra.mxu0 %v719
        %v919 = vpop.f32.mrf.mxu0
        %v920 = vadd.f32 %v564, %v919
        %v921 = vpop.f32.mrf.mxu0
        %922 = vmatprep.mubr.f32.mxu0 0.0
        %923 = vmatmul.mubr.f32.gmra.mxu0 %v722
        %v924 = vpop.f32.mrf.mxu0
        %v925 = vadd.f32 %v569, %v924
        %v926 = vpop.f32.mrf.mxu0
        %927 = vmatprep.mubr.f32.mxu0 0.0
        %928 = vmatmul.mubr.f32.gmra.mxu0 %v725
        %v929 = vpop.f32.mrf.mxu0
        %v930 = vadd.f32 %v574, %v929
        %v931 = vpop.f32.mrf.mxu0
        %932 = vmatprep.mubr.f32.mxu0 0.0
        %933 = vmatmul.mubr.f32.gmra.mxu0 %v728
        %v934 = vpop.f32.mrf.mxu0
        %v935 = vadd.f32 %v579, %v934
        %v936 = vpop.f32.mrf.mxu0
        %937 = vmatprep.mubr.f32.mxu0 0.0
        %938 = vmatmul.mubr.f32.gmra.mxu0 %v731
        %v939 = vpop.f32.mrf.mxu0
        %v940 = vadd.f32 %v584, %v939
        %v941 = vpop.f32.mrf.mxu0
        %942 = vmatprep.mubr.f32.mxu0 0.0
        %943 = vmatmul.mubr.f32.gmra.mxu0 %v734
        %v944 = vpop.f32.mrf.mxu0
        %v945 = vadd.f32 %v589, %v944
        %v946 = vpop.f32.mrf.mxu0
        %947 = vmatprep.mubr.f32.mxu0 0.0
        %948 = vmatmul.mubr.f32.gmra.mxu0 %v737
        %v949 = vpop.f32.mrf.mxu0
        %v950 = vadd.f32 %v594, %v949
        %v951 = vpop.f32.mrf.mxu0
        %952 = vmatprep.mubr.f32.mxu0 0.0
        %953 = vmatmul.mubr.f32.gmra.mxu0 %v740
        %v954 = vpop.f32.mrf.mxu0
        %v955 = vadd.f32 %v599, %v954
        %v956 = vpop.f32.mrf.mxu0
        %957 = vmatprep.mubr.f32.mxu0 0.0
        %958 = vmatmul.mubr.f32.gmra.mxu0 %v743
        %v959 = vpop.f32.mrf.mxu0
        %v960 = vadd.f32 %v604, %v959
        %v961 = vpop.f32.mrf.mxu0
        %962 = vmatprep.mubr.f32.mxu0 0.0
        %963 = vmatmul.mubr.f32.gmra.mxu0 %v746
        %v964 = vpop.f32.mrf.mxu0
        %v965 = vadd.f32 %v609, %v964
        %v966 = vpop.f32.mrf.mxu0
        %967 = vmatprep.mubr.f32.mxu0 0.0
        %968 = vmatmul.mubr.f32.gmra.mxu0 %v749
        %v969 = vpop.f32.mrf.mxu0
        %v970 = vadd.f32 %v614, %v969
        %v971 = vpop.f32.mrf.mxu0
        %972 = vmatprep.mubr.f32.mxu0 0.0
        %973 = vmatmul.mubr.f32.gmra.mxu0 %v752
        %v974 = vpop.f32.mrf.mxu0
        %v975 = vadd.f32 %v619, %v974
        %v976 = vpop.f32.mrf.mxu0
        %977 = vmatprep.mubr.f32.mxu0 0.0
        %978 = vmatmul.mubr.f32.gmra.mxu0 %v755
        %v979 = vpop.f32.mrf.mxu0
        %v980 = vadd.f32 %v624, %v979
        %v981 = vpop.f32.mrf.mxu0
        %982 = vmatprep.mubr.f32.mxu0 0.0
        %983 = vmatmul.mubr.f32.gmra.mxu0 %v758
        %v984 = vpop.f32.mrf.mxu0
        %v985 = vadd.f32 %v629, %v984
        %v986 = vpop.f32.mrf.mxu0
        %987 = vmatprep.mubr.f32.mxu0 0.0
        %988 = vmatmul.mubr.f32.gmra.mxu0 %v761
        %v989 = vpop.f32.mrf.mxu0
        %v990 = vadd.f32 %v634, %v989
        %v991 = vpop.f32.mrf.mxu0
        %992 = vmatprep.mubr.f32.mxu0 0.0
        %993 = vmatmul.mubr.f32.gmra.mxu0 %v764
        %v994 = vpop.f32.mrf.mxu0
        %v995 = vadd.f32 %v639, %v994
        %v996 = vpop.f32.mrf.mxu0
        %997 = vmatprep.mubr.f32.mxu0 0.0
        %998 = vmatmul.mubr.f32.gmra.mxu0 %v767
        %v999 = vpop.f32.mrf.mxu0
        %v1000 = vadd.f32 %v644, %v999
        %v1001 = vpop.f32.mrf.mxu0
        %1002 = vmatprep.mubr.f32.mxu0 0.0
        %1003 = vmatmul.mubr.f32.gmra.mxu0 %v770
        %v1004 = vpop.f32.mrf.mxu0
        %v1005 = vadd.f32 %v649, %v1004
        %v1006 = vpop.f32.mrf.mxu0
        %1007 = vmatprep.mubr.f32.mxu0 0.0
        %1008 = vmatmul.mubr.f32.gmra.mxu0 %v773
        %v1009 = vpop.f32.mrf.mxu0
        %v1010 = vadd.f32 %v654, %v1009
        %v1011 = vpop.f32.mrf.mxu0
        %1012 = vmatprep.mubr.f32.mxu0 0.0
        %1013 = vmatmul.mubr.f32.gmra.mxu0 %v776
        %v1014 = vpop.f32.mrf.mxu0
        %v1015 = vadd.f32 %v659, %v1014
        %v1016 = vpop.f32.mrf.mxu0
        %1017 = vmatprep.mubr.f32.mxu0 0.0
        %1018 = vmatmul.mubr.f32.gmra.mxu0 %v779
        %v1019 = vpop.f32.mrf.mxu0
        %v1020 = vadd.f32 %v664, %v1019
        %v1021 = vpop.f32.mrf.mxu0
        %1022 = vmatprep.mubr.f32.mxu0 0.0
        %1023 = vmatmul.mubr.f32.gmra.mxu0 %v782
        %v1024 = vpop.f32.mrf.mxu0
        %v1025 = vadd.f32 %v669, %v1024
        %v1026 = vpop.f32.mrf.mxu0
        %1027 = vmatprep.mubr.f32.mxu0 0.0
        %1028 = vmatmul.mubr.f32.gmra.mxu0 %v785
        %v1029 = vpop.f32.mrf.mxu0
        %v1030 = vadd.f32 %v674, %v1029
        %v1031 = vpop.f32.mrf.mxu0
        %1032 = vmatprep.mubr.f32.mxu0 0.0
        %1033 = vmatmul.mubr.f32.gmra.mxu0 %v788
        %v1034 = vpop.f32.mrf.mxu0
        %v1035 = vadd.f32 %v679, %v1034
        %v1036 = vpop.f32.mrf.mxu0
        %1037 = vdwg.mxu0
        %v1038 = vld [vmem:[%s248 + $0x2] sm:$0xff]
        %v1039 = vld [vmem:[%s248 + $0xa] sm:$0xff]
        %v1040 = vld [vmem:[%s248 + $0x12] sm:$0xff]
        %v1041 = vld [vmem:[%s248 + $0x1a] sm:$0xff]
        %v1042 = vld [vmem:[%s248 + $0x22] sm:$0xff]
        %v1043 = vld [vmem:[%s248 + $0x2a] sm:$0xff]
        %v1044 = vld [vmem:[%s248 + $0x32] sm:$0xff]
        %v1045 = vld [vmem:[%s248 + $0x3a] sm:$0xff]
        %v1046 = vld [vmem:[%s248 + $0x42] sm:$0xff]
        %v1047 = vld [vmem:[%s248 + $0x4a] sm:$0xff]
        %v1048 = vld [vmem:[%s248 + $0x52] sm:$0xff]
        %v1049 = vld [vmem:[%s248 + $0x5a] sm:$0xff]
        %v1050 = vld [vmem:[%s248 + $0x62] sm:$0xff]
        %v1051 = vld [vmem:[%s248 + $0x6a] sm:$0xff]
        %v1052 = vld [vmem:[%s248 + $0x72] sm:$0xff]
        %v1053 = vld [vmem:[%s248 + $0x7a] sm:$0xff]
        %v1054 = vld [vmem:[%s248 + $0x82] sm:$0xff]
        %v1055 = vld [vmem:[%s248 + $0x8a] sm:$0xff]
        %v1056 = vld [vmem:[%s248 + $0x92] sm:$0xff]
        %v1057 = vld [vmem:[%s248 + $0x9a] sm:$0xff]
        %v1058 = vld [vmem:[%s248 + $0xa2] sm:$0xff]
        %v1059 = vld [vmem:[%s248 + $0xaa] sm:$0xff]
        %v1060 = vld [vmem:[%s248 + $0xb2] sm:$0xff]
        %v1061 = vld [vmem:[%s248 + $0xba] sm:$0xff]
        %v1062 = vld [vmem:[%s248 + $0xc2] sm:$0xff]
        %v1063 = vld [vmem:[%s248 + $0xca] sm:$0xff]
        %v1064 = vld [vmem:[%s248 + $0xd2] sm:$0xff]
        %v1065 = vld [vmem:[%s248 + $0xda] sm:$0xff]
        %v1066 = vld [vmem:[%s248 + $0xe2] sm:$0xff]
        %v1067 = vld [vmem:[%s248 + $0xea] sm:$0xff]
        %v1068 = vld [vmem:[%s248 + $0xf2] sm:$0xff]
        %v1069 = vld [vmem:[%s248 + $0xfa] sm:$0xff]
        %v1070 = vld [vmem:[%s248 + $0x102] sm:$0xff]
        %v1071 = vld [vmem:[%s248 + $0x10a] sm:$0xff]
        %v1072 = vld [vmem:[%s248 + $0x112] sm:$0xff]
        %v1073 = vld [vmem:[%s248 + $0x11a] sm:$0xff]
        %s1074 = scalar_lea.vmem %s1, 8
        %v1075 = vld [vmem:[%s1074] sm:$0x7]
        %v1077 = vsel %vm324, %v1038, 0
        %v1080 = vsel %vm324, %v1039, 0
        %v1083 = vsel %vm324, %v1040, 0
        %v1086 = vsel %vm324, %v1041, 0
        %v1089 = vsel %vm324, %v1042, 0
        %v1092 = vsel %vm324, %v1043, 0
        %v1095 = vsel %vm324, %v1044, 0
        %v1098 = vsel %vm324, %v1045, 0
        %v1101 = vsel %vm324, %v1046, 0
        %v1104 = vsel %vm324, %v1047, 0
        %v1107 = vsel %vm324, %v1048, 0
        %v1110 = vsel %vm324, %v1049, 0
        %v1113 = vsel %vm324, %v1050, 0
        %v1116 = vsel %vm324, %v1051, 0
        %v1119 = vsel %vm324, %v1052, 0
        %v1122 = vsel %vm324, %v1053, 0
        %v1125 = vsel %vm324, %v1054, 0
        %v1128 = vsel %vm324, %v1055, 0
        %v1131 = vsel %vm324, %v1056, 0
        %v1134 = vsel %vm324, %v1057, 0
        %v1137 = vsel %vm324, %v1058, 0
        %v1140 = vsel %vm324, %v1059, 0
        %v1143 = vsel %vm324, %v1060, 0
        %v1146 = vsel %vm324, %v1061, 0
        %v1149 = vsel %vm324, %v1062, 0
        %v1152 = vsel %vm324, %v1063, 0
        %v1155 = vsel %vm324, %v1064, 0
        %v1158 = vsel %vm324, %v1065, 0
        %v1161 = vsel %vm324, %v1066, 0
        %v1164 = vsel %vm324, %v1067, 0
        %v1167 = vsel %vm324, %v1068, 0
        %v1170 = vsel %vm324, %v1069, 0
        %v1173 = vsel %vm324, %v1070, 0
        %v1176 = vsel %vm324, %v1071, 0
        %v1179 = vsel %vm324, %v1072, 0
        %v1182 = vsel %vm324, %v1073, 0
        %v1185 = vsel %vm433, %v1075, 0
        %1187 = vmatprep.subr.mxu0 0.0
        %1188 = vmatpush1.msra.mxu0 0.0
        %1189 = vmatprep.subr.mxu0 0.0
        %1190 = vmatpush1.msra.mxu0 0.0
        %1191 = vmatprep.subr.mxu0 0.0
        %1192 = vmatpush1.msra.mxu0 0.0
        %1193 = vmatprep.subr.mxu0 0.0
        %1194 = vmatpush1.msra.mxu0 0.0
        %1195 = vmatprep.subr.mxu0 0.0
        %1196 = vmatpush1.msra.mxu0 0.0
        %1197 = vmatprep.subr.mxu0 0.0
        %1198 = vmatpush1.msra.mxu0 0.0
        %1199 = vmatprep.subr.mxu0 0.0
        %1200 = vmatpush1.msra.mxu0 0.0
        %1201 = vmatprep.subr.mxu0 0.0
        %1202 = vmatpush1.msra.mxu0 0.0
        %1203 = vmatprep.subr.mxu0 0.0
        %1204 = vmatpush1.msra.mxu0 0.0
        %1205 = vmatprep.subr.mxu0 0.0
        %1206 = vmatpush1.msra.mxu0 0.0
        %1207 = vmatprep.subr.mxu0 0.0
        %1208 = vmatpush1.msra.mxu0 0.0
        %1209 = vmatprep.subr.mxu0 0.0
        %1210 = vmatpush1.msra.mxu0 0.0
        %1211 = vmatprep.subr.mxu0 0.0
        %1212 = vmatpush1.msra.mxu0 0.0
        %1213 = vmatprep.subr.mxu0 0.0
        %1214 = vmatpush1.msra.mxu0 0.0
        %1215 = vmatprep.subr.mxu0 0.0
        %1216 = vmatpush1.msra.mxu0 0.0
        %1217 = vmatprep.subr.mxu0 0.0
        %1218 = vmatpush1.msra.mxu0 %v1185
        %1219 = vmatprep.subr.mxu0 0.0
        %1220 = vmatpush2.msra.mxu0 0.0
        %1221 = vmatprep.subr.mxu0 0.0
        %1222 = vmatpush2.msra.mxu0 0.0
        %1223 = vmatprep.subr.mxu0 0.0
        %1224 = vmatpush2.msra.mxu0 0.0
        %1225 = vmatprep.subr.mxu0 0.0
        %1226 = vmatpush2.msra.mxu0 0.0
        %1227 = vmatprep.subr.mxu0 0.0
        %1228 = vmatpush2.msra.mxu0 0.0
        %1229 = vmatprep.subr.mxu0 0.0
        %1230 = vmatpush2.msra.mxu0 0.0
        %1231 = vmatprep.subr.mxu0 0.0
        %1232 = vmatpush2.msra.mxu0 0.0
        %1233 = vmatprep.subr.mxu0 0.0
        %1234 = vmatpush2.msra.mxu0 0.0
        %1235 = vmatprep.subr.mxu0 0.0
        %1236 = vmatpush2.msra.mxu0 0.0
        %1237 = vmatprep.subr.mxu0 0.0
        %1238 = vmatpush2.msra.mxu0 0.0
        %1239 = vmatprep.subr.mxu0 0.0
        %1240 = vmatpush2.msra.mxu0 0.0
        %1241 = vmatprep.subr.mxu0 0.0
        %1242 = vmatpush2.msra.mxu0 0.0
        %1243 = vmatprep.subr.mxu0 0.0
        %1244 = vmatpush2.msra.mxu0 0.0
        %1245 = vmatprep.subr.mxu0 0.0
        %1246 = vmatpush2.msra.mxu0 0.0
        %1247 = vmatprep.subr.mxu0 0.0
        %1248 = vmatpush2.msra.mxu0 0.0
        %1249 = vmatprep.subr.mxu0 0.0
        %1250 = vmatpush2.msra.mxu0 0.0
        %1251 = vmatprep.mubr.f32.mxu0 0.0
        %1252 = vmatmul.mubr.f32.gmra.mxu0 %v1077
        %v1253 = vpop.f32.mrf.mxu0
        %v1254 = vadd.f32 0.0, %v1253
        %v1255 = vpop.f32.mrf.mxu0
        %1256 = vmatprep.mubr.f32.mxu0 0.0
        %1257 = vmatmul.mubr.f32.gmra.mxu0 %v1080
        %v1258 = vpop.f32.mrf.mxu0
        %v1259 = vadd.f32 0.0, %v1258
        %v1260 = vpop.f32.mrf.mxu0
        %1261 = vmatprep.mubr.f32.mxu0 0.0
        %1262 = vmatmul.mubr.f32.gmra.mxu0 %v1083
        %v1263 = vpop.f32.mrf.mxu0
        %v1264 = vadd.f32 0.0, %v1263
        %v1265 = vpop.f32.mrf.mxu0
        %1266 = vmatprep.mubr.f32.mxu0 0.0
        %1267 = vmatmul.mubr.f32.gmra.mxu0 %v1086
        %v1268 = vpop.f32.mrf.mxu0
        %v1269 = vadd.f32 0.0, %v1268
        %v1270 = vpop.f32.mrf.mxu0
        %1271 = vmatprep.mubr.f32.mxu0 0.0
        %1272 = vmatmul.mubr.f32.gmra.mxu0 %v1089
        %v1273 = vpop.f32.mrf.mxu0
        %v1274 = vadd.f32 0.0, %v1273
        %v1275 = vpop.f32.mrf.mxu0
        %1276 = vmatprep.mubr.f32.mxu0 0.0
        %1277 = vmatmul.mubr.f32.gmra.mxu0 %v1092
        %v1278 = vpop.f32.mrf.mxu0
        %v1279 = vadd.f32 0.0, %v1278
        %v1280 = vpop.f32.mrf.mxu0
        %1281 = vmatprep.mubr.f32.mxu0 0.0
        %1282 = vmatmul.mubr.f32.gmra.mxu0 %v1095
        %v1283 = vpop.f32.mrf.mxu0
        %v1284 = vadd.f32 0.0, %v1283
        %v1285 = vpop.f32.mrf.mxu0
        %1286 = vmatprep.mubr.f32.mxu0 0.0
        %1287 = vmatmul.mubr.f32.gmra.mxu0 %v1098
        %v1288 = vpop.f32.mrf.mxu0
        %v1289 = vadd.f32 0.0, %v1288
        %v1290 = vpop.f32.mrf.mxu0
        %1291 = vmatprep.mubr.f32.mxu0 0.0
        %1292 = vmatmul.mubr.f32.gmra.mxu0 %v1101
        %v1293 = vpop.f32.mrf.mxu0
        %v1294 = vadd.f32 0.0, %v1293
        %v1295 = vpop.f32.mrf.mxu0
        %1296 = vmatprep.mubr.f32.mxu0 0.0
        %1297 = vmatmul.mubr.f32.gmra.mxu0 %v1104
        %v1298 = vpop.f32.mrf.mxu0
        %v1299 = vadd.f32 0.0, %v1298
        %v1300 = vpop.f32.mrf.mxu0
        %1301 = vmatprep.mubr.f32.mxu0 0.0
        %1302 = vmatmul.mubr.f32.gmra.mxu0 %v1107
        %v1303 = vpop.f32.mrf.mxu0
        %v1304 = vadd.f32 0.0, %v1303
        %v1305 = vpop.f32.mrf.mxu0
        %1306 = vmatprep.mubr.f32.mxu0 0.0
        %1307 = vmatmul.mubr.f32.gmra.mxu0 %v1110
        %v1308 = vpop.f32.mrf.mxu0
        %v1309 = vadd.f32 0.0, %v1308
        %v1310 = vpop.f32.mrf.mxu0
        %1311 = vmatprep.mubr.f32.mxu0 0.0
        %1312 = vmatmul.mubr.f32.gmra.mxu0 %v1113
        %v1313 = vpop.f32.mrf.mxu0
        %v1314 = vadd.f32 0.0, %v1313
        %v1315 = vpop.f32.mrf.mxu0
        %1316 = vmatprep.mubr.f32.mxu0 0.0
        %1317 = vmatmul.mubr.f32.gmra.mxu0 %v1116
        %v1318 = vpop.f32.mrf.mxu0
        %v1319 = vadd.f32 0.0, %v1318
        %v1320 = vpop.f32.mrf.mxu0
        %1321 = vmatprep.mubr.f32.mxu0 0.0
        %1322 = vmatmul.mubr.f32.gmra.mxu0 %v1119
        %v1323 = vpop.f32.mrf.mxu0
        %v1324 = vadd.f32 0.0, %v1323
        %v1325 = vpop.f32.mrf.mxu0
        %1326 = vmatprep.mubr.f32.mxu0 0.0
        %1327 = vmatmul.mubr.f32.gmra.mxu0 %v1122
        %v1328 = vpop.f32.mrf.mxu0
        %v1329 = vadd.f32 0.0, %v1328
        %v1330 = vpop.f32.mrf.mxu0
        %1331 = vmatprep.mubr.f32.mxu0 0.0
        %1332 = vmatmul.mubr.f32.gmra.mxu0 %v1125
        %v1333 = vpop.f32.mrf.mxu0
        %v1334 = vadd.f32 0.0, %v1333
        %v1335 = vpop.f32.mrf.mxu0
        %1336 = vmatprep.mubr.f32.mxu0 0.0
        %1337 = vmatmul.mubr.f32.gmra.mxu0 %v1128
        %v1338 = vpop.f32.mrf.mxu0
        %v1339 = vadd.f32 0.0, %v1338
        %v1340 = vpop.f32.mrf.mxu0
        %1341 = vmatprep.mubr.f32.mxu0 0.0
        %1342 = vmatmul.mubr.f32.gmra.mxu0 %v1131
        %v1343 = vpop.f32.mrf.mxu0
        %v1344 = vadd.f32 0.0, %v1343
        %v1345 = vpop.f32.mrf.mxu0
        %1346 = vmatprep.mubr.f32.mxu0 0.0
        %1347 = vmatmul.mubr.f32.gmra.mxu0 %v1134
        %v1348 = vpop.f32.mrf.mxu0
        %v1349 = vadd.f32 0.0, %v1348
        %v1350 = vpop.f32.mrf.mxu0
        %1351 = vmatprep.mubr.f32.mxu0 0.0
        %1352 = vmatmul.mubr.f32.gmra.mxu0 %v1137
        %v1353 = vpop.f32.mrf.mxu0
        %v1354 = vadd.f32 0.0, %v1353
        %v1355 = vpop.f32.mrf.mxu0
        %1356 = vmatprep.mubr.f32.mxu0 0.0
        %1357 = vmatmul.mubr.f32.gmra.mxu0 %v1140
        %v1358 = vpop.f32.mrf.mxu0
        %v1359 = vadd.f32 0.0, %v1358
        %v1360 = vpop.f32.mrf.mxu0
        %1361 = vmatprep.mubr.f32.mxu0 0.0
        %1362 = vmatmul.mubr.f32.gmra.mxu0 %v1143
        %v1363 = vpop.f32.mrf.mxu0
        %v1364 = vadd.f32 0.0, %v1363
        %v1365 = vpop.f32.mrf.mxu0
        %1366 = vmatprep.mubr.f32.mxu0 0.0
        %1367 = vmatmul.mubr.f32.gmra.mxu0 %v1146
        %v1368 = vpop.f32.mrf.mxu0
        %v1369 = vadd.f32 0.0, %v1368
        %v1370 = vpop.f32.mrf.mxu0
        %1371 = vmatprep.mubr.f32.mxu0 0.0
        %1372 = vmatmul.mubr.f32.gmra.mxu0 %v1149
        %v1373 = vpop.f32.mrf.mxu0
        %v1374 = vadd.f32 0.0, %v1373
        %v1375 = vpop.f32.mrf.mxu0
        %1376 = vmatprep.mubr.f32.mxu0 0.0
        %1377 = vmatmul.mubr.f32.gmra.mxu0 %v1152
        %v1378 = vpop.f32.mrf.mxu0
        %v1379 = vadd.f32 0.0, %v1378
        %v1380 = vpop.f32.mrf.mxu0
        %1381 = vmatprep.mubr.f32.mxu0 0.0
        %1382 = vmatmul.mubr.f32.gmra.mxu0 %v1155
        %v1383 = vpop.f32.mrf.mxu0
        %v1384 = vadd.f32 0.0, %v1383
        %v1385 = vpop.f32.mrf.mxu0
        %1386 = vmatprep.mubr.f32.mxu0 0.0
        %1387 = vmatmul.mubr.f32.gmra.mxu0 %v1158
        %v1388 = vpop.f32.mrf.mxu0
        %v1389 = vadd.f32 0.0, %v1388
        %v1390 = vpop.f32.mrf.mxu0
        %1391 = vmatprep.mubr.f32.mxu0 0.0
        %1392 = vmatmul.mubr.f32.gmra.mxu0 %v1161
        %v1393 = vpop.f32.mrf.mxu0
        %v1394 = vadd.f32 0.0, %v1393
        %v1395 = vpop.f32.mrf.mxu0
        %1396 = vmatprep.mubr.f32.mxu0 0.0
        %1397 = vmatmul.mubr.f32.gmra.mxu0 %v1164
        %v1398 = vpop.f32.mrf.mxu0
        %v1399 = vadd.f32 0.0, %v1398
        %v1400 = vpop.f32.mrf.mxu0
        %1401 = vmatprep.mubr.f32.mxu0 0.0
        %1402 = vmatmul.mubr.f32.gmra.mxu0 %v1167
        %v1403 = vpop.f32.mrf.mxu0
        %v1404 = vadd.f32 0.0, %v1403
        %v1405 = vpop.f32.mrf.mxu0
        %1406 = vmatprep.mubr.f32.mxu0 0.0
        %1407 = vmatmul.mubr.f32.gmra.mxu0 %v1170
        %v1408 = vpop.f32.mrf.mxu0
        %v1409 = vadd.f32 0.0, %v1408
        %v1410 = vpop.f32.mrf.mxu0
        %1411 = vmatprep.mubr.f32.mxu0 0.0
        %1412 = vmatmul.mubr.f32.gmra.mxu0 %v1173
        %v1413 = vpop.f32.mrf.mxu0
        %v1414 = vadd.f32 0.0, %v1413
        %v1415 = vpop.f32.mrf.mxu0
        %1416 = vmatprep.mubr.f32.mxu0 0.0
        %1417 = vmatmul.mubr.f32.gmra.mxu0 %v1176
        %v1418 = vpop.f32.mrf.mxu0
        %v1419 = vadd.f32 0.0, %v1418
        %v1420 = vpop.f32.mrf.mxu0
        %1421 = vmatprep.mubr.f32.mxu0 0.0
        %1422 = vmatmul.mubr.f32.gmra.mxu0 %v1179
        %v1423 = vpop.f32.mrf.mxu0
        %v1424 = vadd.f32 0.0, %v1423
        %v1425 = vpop.f32.mrf.mxu0
        %1426 = vmatprep.mubr.f32.mxu0 0.0
        %1427 = vmatmul.mubr.f32.gmra.mxu0 %v1182
        %v1428 = vpop.f32.mrf.mxu0
        %v1429 = vadd.f32 0.0, %v1428
        %v1430 = vpop.f32.mrf.mxu0
        %1431 = vdwg.mxu0
        %v1432 = vadd.f32 %v860, %v1254
        %v1433 = vadd.f32 %v865, %v1259
        %v1434 = vadd.f32 %v870, %v1264
        %v1435 = vadd.f32 %v875, %v1269
        %v1436 = vadd.f32 %v880, %v1274
        %v1437 = vadd.f32 %v885, %v1279
        %v1438 = vadd.f32 %v890, %v1284
        %v1439 = vadd.f32 %v895, %v1289
        %v1440 = vadd.f32 %v900, %v1294
        %v1441 = vadd.f32 %v905, %v1299
        %v1442 = vadd.f32 %v910, %v1304
        %v1443 = vadd.f32 %v915, %v1309
        %v1444 = vadd.f32 %v920, %v1314
        %v1445 = vadd.f32 %v925, %v1319
        %v1446 = vadd.f32 %v930, %v1324
        %v1447 = vadd.f32 %v935, %v1329
        %v1448 = vadd.f32 %v940, %v1334
        %v1449 = vadd.f32 %v945, %v1339
        %v1450 = vadd.f32 %v950, %v1344
        %v1451 = vadd.f32 %v955, %v1349
        %v1452 = vadd.f32 %v960, %v1354
        %v1453 = vadd.f32 %v965, %v1359
        %v1454 = vadd.f32 %v970, %v1364
        %v1455 = vadd.f32 %v975, %v1369
        %v1456 = vadd.f32 %v980, %v1374
        %v1457 = vadd.f32 %v985, %v1379
        %v1458 = vadd.f32 %v990, %v1384
        %v1459 = vadd.f32 %v995, %v1389
        %v1460 = vadd.f32 %v1000, %v1394
        %v1461 = vadd.f32 %v1005, %v1399
        %v1462 = vadd.f32 %v1010, %v1404
        %v1463 = vadd.f32 %v1015, %v1409
        %v1464 = vadd.f32 %v1020, %v1414
        %v1465 = vadd.f32 %v1025, %v1419
        %v1466 = vadd.f32 %v1030, %v1424
        %v1467 = vadd.f32 %v1035, %v1429
        %v1468 = vld [vmem:[%s248 + $0x12] sm:$0xff]
        %v1469 = vld [vmem:[%s248 + $0x1a] sm:$0xff]
        %v1470 = vld [vmem:[%s248 + $0x22] sm:$0xff]
        %v1471 = vld [vmem:[%s248 + $0x2a] sm:$0xff]
        %v1472 = vld [vmem:[%s248 + $0x32] sm:$0xff]
        %v1473 = vld [vmem:[%s248 + $0x3a] sm:$0xff]
        %v1474 = vld [vmem:[%s248 + $0x42] sm:$0xff]
        %v1475 = vld [vmem:[%s248 + $0x4a] sm:$0xff]
        %v1476 = vld [vmem:[%s248 + $0x52] sm:$0xff]
        %v1477 = vld [vmem:[%s248 + $0x5a] sm:$0xff]
        %v1478 = vld [vmem:[%s248 + $0x62] sm:$0xff]
        %v1479 = vld [vmem:[%s248 + $0x6a] sm:$0xff]
        %v1480 = vld [vmem:[%s248 + $0x72] sm:$0xff]
        %v1481 = vld [vmem:[%s248 + $0x7a] sm:$0xff]
        %v1482 = vld [vmem:[%s248 + $0x82] sm:$0xff]
        %v1483 = vld [vmem:[%s248 + $0x8a] sm:$0xff]
        %v1484 = vld [vmem:[%s248 + $0x92] sm:$0xff]
        %v1485 = vld [vmem:[%s248 + $0x9a] sm:$0xff]
        %v1486 = vld [vmem:[%s248 + $0xa2] sm:$0xff]
        %v1487 = vld [vmem:[%s248 + $0xaa] sm:$0xff]
        %v1488 = vld [vmem:[%s248 + $0xb2] sm:$0xff]
        %v1489 = vld [vmem:[%s248 + $0xba] sm:$0xff]
        %v1490 = vld [vmem:[%s248 + $0xc2] sm:$0xff]
        %v1491 = vld [vmem:[%s248 + $0xca] sm:$0xff]
        %v1492 = vld [vmem:[%s248 + $0xd2] sm:$0xff]
        %v1493 = vld [vmem:[%s248 + $0xda] sm:$0xff]
        %v1494 = vld [vmem:[%s248 + $0xe2] sm:$0xff]
        %v1495 = vld [vmem:[%s248 + $0xea] sm:$0xff]
        %v1496 = vld [vmem:[%s248 + $0xf2] sm:$0xff]
        %v1497 = vld [vmem:[%s248 + $0xfa] sm:$0xff]
        %v1498 = vld [vmem:[%s248 + $0x102] sm:$0xff]
        %v1499 = vld [vmem:[%s248 + $0x10a] sm:$0xff]
        %v1500 = vld [vmem:[%s248 + $0x112] sm:$0xff]
        %v1501 = vld [vmem:[%s248 + $0x11a] sm:$0xff]
        %v1502 = vld [vmem:[%s248 + $0x122] sm:$0xff]
        %v1503 = vld [vmem:[%s248 + $0x12a] sm:$0xff]
        %s1504 = scalar_lea.vmem %s1, 12
        %v1505 = vld [vmem:[%s1504] sm:$0x7]
        %v1507 = vsel %vm324, %v1468, 0
        %v1510 = vsel %vm324, %v1469, 0
        %v1513 = vsel %vm324, %v1470, 0
        %v1516 = vsel %vm324, %v1471, 0
        %v1519 = vsel %vm324, %v1472, 0
        %v1522 = vsel %vm324, %v1473, 0
        %v1525 = vsel %vm324, %v1474, 0
        %v1528 = vsel %vm324, %v1475, 0
        %v1531 = vsel %vm324, %v1476, 0
        %v1534 = vsel %vm324, %v1477, 0
        %v1537 = vsel %vm324, %v1478, 0
        %v1540 = vsel %vm324, %v1479, 0
        %v1543 = vsel %vm324, %v1480, 0
        %v1546 = vsel %vm324, %v1481, 0
        %v1549 = vsel %vm324, %v1482, 0
        %v1552 = vsel %vm324, %v1483, 0
        %v1555 = vsel %vm324, %v1484, 0
        %v1558 = vsel %vm324, %v1485, 0
        %v1561 = vsel %vm324, %v1486, 0
        %v1564 = vsel %vm324, %v1487, 0
        %v1567 = vsel %vm324, %v1488, 0
        %v1570 = vsel %vm324, %v1489, 0
        %v1573 = vsel %vm324, %v1490, 0
        %v1576 = vsel %vm324, %v1491, 0
        %v1579 = vsel %vm324, %v1492, 0
        %v1582 = vsel %vm324, %v1493, 0
        %v1585 = vsel %vm324, %v1494, 0
        %v1588 = vsel %vm324, %v1495, 0
        %v1591 = vsel %vm324, %v1496, 0
        %v1594 = vsel %vm324, %v1497, 0
        %v1597 = vsel %vm324, %v1498, 0
        %v1600 = vsel %vm324, %v1499, 0
        %v1603 = vsel %vm324, %v1500, 0
        %v1606 = vsel %vm324, %v1501, 0
        %v1609 = vsel %vm324, %v1502, 0
        %v1612 = vsel %vm324, %v1503, 0
        %v1615 = vsel %vm433, %v1505, 0
        %1617 = vmatprep.subr.mxu0 0.0
        %1618 = vmatpush1.msra.mxu0 0.0
        %1619 = vmatprep.subr.mxu0 0.0
        %1620 = vmatpush1.msra.mxu0 0.0
        %1621 = vmatprep.subr.mxu0 0.0
        %1622 = vmatpush1.msra.mxu0 0.0
        %1623 = vmatprep.subr.mxu0 0.0
        %1624 = vmatpush1.msra.mxu0 0.0
        %1625 = vmatprep.subr.mxu0 0.0
        %1626 = vmatpush1.msra.mxu0 0.0
        %1627 = vmatprep.subr.mxu0 0.0
        %1628 = vmatpush1.msra.mxu0 0.0
        %1629 = vmatprep.subr.mxu0 0.0
        %1630 = vmatpush1.msra.mxu0 0.0
        %1631 = vmatprep.subr.mxu0 0.0
        %1632 = vmatpush1.msra.mxu0 0.0
        %1633 = vmatprep.subr.mxu0 0.0
        %1634 = vmatpush1.msra.mxu0 0.0
        %1635 = vmatprep.subr.mxu0 0.0
        %1636 = vmatpush1.msra.mxu0 0.0
        %1637 = vmatprep.subr.mxu0 0.0
        %1638 = vmatpush1.msra.mxu0 0.0
        %1639 = vmatprep.subr.mxu0 0.0
        %1640 = vmatpush1.msra.mxu0 0.0
        %1641 = vmatprep.subr.mxu0 0.0
        %1642 = vmatpush1.msra.mxu0 0.0
        %1643 = vmatprep.subr.mxu0 0.0
        %1644 = vmatpush1.msra.mxu0 0.0
        %1645 = vmatprep.subr.mxu0 0.0
        %1646 = vmatpush1.msra.mxu0 0.0
        %1647 = vmatprep.subr.mxu0 0.0
        %1648 = vmatpush1.msra.mxu0 %v1615
        %1649 = vmatprep.subr.mxu0 0.0
        %1650 = vmatpush2.msra.mxu0 0.0
        %1651 = vmatprep.subr.mxu0 0.0
        %1652 = vmatpush2.msra.mxu0 0.0
        %1653 = vmatprep.subr.mxu0 0.0
        %1654 = vmatpush2.msra.mxu0 0.0
        %1655 = vmatprep.subr.mxu0 0.0
        %1656 = vmatpush2.msra.mxu0 0.0
        %1657 = vmatprep.subr.mxu0 0.0
        %1658 = vmatpush2.msra.mxu0 0.0
        %1659 = vmatprep.subr.mxu0 0.0
        %1660 = vmatpush2.msra.mxu0 0.0
        %1661 = vmatprep.subr.mxu0 0.0
        %1662 = vmatpush2.msra.mxu0 0.0
        %1663 = vmatprep.subr.mxu0 0.0
        %1664 = vmatpush2.msra.mxu0 0.0
        %1665 = vmatprep.subr.mxu0 0.0
        %1666 = vmatpush2.msra.mxu0 0.0
        %1667 = vmatprep.subr.mxu0 0.0
        %1668 = vmatpush2.msra.mxu0 0.0
        %1669 = vmatprep.subr.mxu0 0.0
        %1670 = vmatpush2.msra.mxu0 0.0
        %1671 = vmatprep.subr.mxu0 0.0
        %1672 = vmatpush2.msra.mxu0 0.0
        %1673 = vmatprep.subr.mxu0 0.0
        %1674 = vmatpush2.msra.mxu0 0.0
        %1675 = vmatprep.subr.mxu0 0.0
        %1676 = vmatpush2.msra.mxu0 0.0
        %1677 = vmatprep.subr.mxu0 0.0
        %1678 = vmatpush2.msra.mxu0 0.0
        %1679 = vmatprep.subr.mxu0 0.0
        %1680 = vmatpush2.msra.mxu0 0.0
        %1681 = vmatprep.mubr.f32.mxu0 0.0
        %1682 = vmatmul.mubr.f32.gmra.mxu0 %v1507
        %v1683 = vpop.f32.mrf.mxu0
        %v1684 = vadd.f32 0.0, %v1683
        %v1685 = vpop.f32.mrf.mxu0
        %1686 = vmatprep.mubr.f32.mxu0 0.0
        %1687 = vmatmul.mubr.f32.gmra.mxu0 %v1510
        %v1688 = vpop.f32.mrf.mxu0
        %v1689 = vadd.f32 0.0, %v1688
        %v1690 = vpop.f32.mrf.mxu0
        %1691 = vmatprep.mubr.f32.mxu0 0.0
        %1692 = vmatmul.mubr.f32.gmra.mxu0 %v1513
        %v1693 = vpop.f32.mrf.mxu0
        %v1694 = vadd.f32 0.0, %v1693
        %v1695 = vpop.f32.mrf.mxu0
        %1696 = vmatprep.mubr.f32.mxu0 0.0
        %1697 = vmatmul.mubr.f32.gmra.mxu0 %v1516
        %v1698 = vpop.f32.mrf.mxu0
        %v1699 = vadd.f32 0.0, %v1698
        %v1700 = vpop.f32.mrf.mxu0
        %1701 = vmatprep.mubr.f32.mxu0 0.0
        %1702 = vmatmul.mubr.f32.gmra.mxu0 %v1519
        %v1703 = vpop.f32.mrf.mxu0
        %v1704 = vadd.f32 0.0, %v1703
        %v1705 = vpop.f32.mrf.mxu0
        %1706 = vmatprep.mubr.f32.mxu0 0.0
        %1707 = vmatmul.mubr.f32.gmra.mxu0 %v1522
        %v1708 = vpop.f32.mrf.mxu0
        %v1709 = vadd.f32 0.0, %v1708
        %v1710 = vpop.f32.mrf.mxu0
        %1711 = vmatprep.mubr.f32.mxu0 0.0
        %1712 = vmatmul.mubr.f32.gmra.mxu0 %v1525
        %v1713 = vpop.f32.mrf.mxu0
        %v1714 = vadd.f32 0.0, %v1713
        %v1715 = vpop.f32.mrf.mxu0
        %1716 = vmatprep.mubr.f32.mxu0 0.0
        %1717 = vmatmul.mubr.f32.gmra.mxu0 %v1528
        %v1718 = vpop.f32.mrf.mxu0
        %v1719 = vadd.f32 0.0, %v1718
        %v1720 = vpop.f32.mrf.mxu0
        %1721 = vmatprep.mubr.f32.mxu0 0.0
        %1722 = vmatmul.mubr.f32.gmra.mxu0 %v1531
        %v1723 = vpop.f32.mrf.mxu0
        %v1724 = vadd.f32 0.0, %v1723
        %v1725 = vpop.f32.mrf.mxu0
        %1726 = vmatprep.mubr.f32.mxu0 0.0
        %1727 = vmatmul.mubr.f32.gmra.mxu0 %v1534
        %v1728 = vpop.f32.mrf.mxu0
        %v1729 = vadd.f32 0.0, %v1728
        %v1730 = vpop.f32.mrf.mxu0
        %1731 = vmatprep.mubr.f32.mxu0 0.0
        %1732 = vmatmul.mubr.f32.gmra.mxu0 %v1537
        %v1733 = vpop.f32.mrf.mxu0
        %v1734 = vadd.f32 0.0, %v1733
        %v1735 = vpop.f32.mrf.mxu0
        %1736 = vmatprep.mubr.f32.mxu0 0.0
        %1737 = vmatmul.mubr.f32.gmra.mxu0 %v1540
        %v1738 = vpop.f32.mrf.mxu0
        %v1739 = vadd.f32 0.0, %v1738
        %v1740 = vpop.f32.mrf.mxu0
        %1741 = vmatprep.mubr.f32.mxu0 0.0
        %1742 = vmatmul.mubr.f32.gmra.mxu0 %v1543
        %v1743 = vpop.f32.mrf.mxu0
        %v1744 = vadd.f32 0.0, %v1743
        %v1745 = vpop.f32.mrf.mxu0
        %1746 = vmatprep.mubr.f32.mxu0 0.0
        %1747 = vmatmul.mubr.f32.gmra.mxu0 %v1546
        %v1748 = vpop.f32.mrf.mxu0
        %v1749 = vadd.f32 0.0, %v1748
        %v1750 = vpop.f32.mrf.mxu0
        %1751 = vmatprep.mubr.f32.mxu0 0.0
        %1752 = vmatmul.mubr.f32.gmra.mxu0 %v1549
        %v1753 = vpop.f32.mrf.mxu0
        %v1754 = vadd.f32 0.0, %v1753
        %v1755 = vpop.f32.mrf.mxu0
        %1756 = vmatprep.mubr.f32.mxu0 0.0
        %1757 = vmatmul.mubr.f32.gmra.mxu0 %v1552
        %v1758 = vpop.f32.mrf.mxu0
        %v1759 = vadd.f32 0.0, %v1758
        %v1760 = vpop.f32.mrf.mxu0
        %1761 = vmatprep.mubr.f32.mxu0 0.0
        %1762 = vmatmul.mubr.f32.gmra.mxu0 %v1555
        %v1763 = vpop.f32.mrf.mxu0
        %v1764 = vadd.f32 0.0, %v1763
        %v1765 = vpop.f32.mrf.mxu0
        %1766 = vmatprep.mubr.f32.mxu0 0.0
        %1767 = vmatmul.mubr.f32.gmra.mxu0 %v1558
        %v1768 = vpop.f32.mrf.mxu0
        %v1769 = vadd.f32 0.0, %v1768
        %v1770 = vpop.f32.mrf.mxu0
        %1771 = vmatprep.mubr.f32.mxu0 0.0
        %1772 = vmatmul.mubr.f32.gmra.mxu0 %v1561
        %v1773 = vpop.f32.mrf.mxu0
        %v1774 = vadd.f32 0.0, %v1773
        %v1775 = vpop.f32.mrf.mxu0
        %1776 = vmatprep.mubr.f32.mxu0 0.0
        %1777 = vmatmul.mubr.f32.gmra.mxu0 %v1564
        %v1778 = vpop.f32.mrf.mxu0
        %v1779 = vadd.f32 0.0, %v1778
        %v1780 = vpop.f32.mrf.mxu0
        %1781 = vmatprep.mubr.f32.mxu0 0.0
        %1782 = vmatmul.mubr.f32.gmra.mxu0 %v1567
        %v1783 = vpop.f32.mrf.mxu0
        %v1784 = vadd.f32 0.0, %v1783
        %v1785 = vpop.f32.mrf.mxu0
        %1786 = vmatprep.mubr.f32.mxu0 0.0
        %1787 = vmatmul.mubr.f32.gmra.mxu0 %v1570
        %v1788 = vpop.f32.mrf.mxu0
        %v1789 = vadd.f32 0.0, %v1788
        %v1790 = vpop.f32.mrf.mxu0
        %1791 = vmatprep.mubr.f32.mxu0 0.0
        %1792 = vmatmul.mubr.f32.gmra.mxu0 %v1573
        %v1793 = vpop.f32.mrf.mxu0
        %v1794 = vadd.f32 0.0, %v1793
        %v1795 = vpop.f32.mrf.mxu0
        %1796 = vmatprep.mubr.f32.mxu0 0.0
        %1797 = vmatmul.mubr.f32.gmra.mxu0 %v1576
        %v1798 = vpop.f32.mrf.mxu0
        %v1799 = vadd.f32 0.0, %v1798
        %v1800 = vpop.f32.mrf.mxu0
        %1801 = vmatprep.mubr.f32.mxu0 0.0
        %1802 = vmatmul.mubr.f32.gmra.mxu0 %v1579
        %v1803 = vpop.f32.mrf.mxu0
        %v1804 = vadd.f32 0.0, %v1803
        %v1805 = vpop.f32.mrf.mxu0
        %1806 = vmatprep.mubr.f32.mxu0 0.0
        %1807 = vmatmul.mubr.f32.gmra.mxu0 %v1582
        %v1808 = vpop.f32.mrf.mxu0
        %v1809 = vadd.f32 0.0, %v1808
        %v1810 = vpop.f32.mrf.mxu0
        %1811 = vmatprep.mubr.f32.mxu0 0.0
        %1812 = vmatmul.mubr.f32.gmra.mxu0 %v1585
        %v1813 = vpop.f32.mrf.mxu0
        %v1814 = vadd.f32 0.0, %v1813
        %v1815 = vpop.f32.mrf.mxu0
        %1816 = vmatprep.mubr.f32.mxu0 0.0
        %1817 = vmatmul.mubr.f32.gmra.mxu0 %v1588
        %v1818 = vpop.f32.mrf.mxu0
        %v1819 = vadd.f32 0.0, %v1818
        %v1820 = vpop.f32.mrf.mxu0
        %1821 = vmatprep.mubr.f32.mxu0 0.0
        %1822 = vmatmul.mubr.f32.gmra.mxu0 %v1591
        %v1823 = vpop.f32.mrf.mxu0
        %v1824 = vadd.f32 0.0, %v1823
        %v1825 = vpop.f32.mrf.mxu0
        %1826 = vmatprep.mubr.f32.mxu0 0.0
        %1827 = vmatmul.mubr.f32.gmra.mxu0 %v1594
        %v1828 = vpop.f32.mrf.mxu0
        %v1829 = vadd.f32 0.0, %v1828
        %v1830 = vpop.f32.mrf.mxu0
        %1831 = vmatprep.mubr.f32.mxu0 0.0
        %1832 = vmatmul.mubr.f32.gmra.mxu0 %v1597
        %v1833 = vpop.f32.mrf.mxu0
        %v1834 = vadd.f32 0.0, %v1833
        %v1835 = vpop.f32.mrf.mxu0
        %1836 = vmatprep.mubr.f32.mxu0 0.0
        %1837 = vmatmul.mubr.f32.gmra.mxu0 %v1600
        %v1838 = vpop.f32.mrf.mxu0
        %v1839 = vadd.f32 0.0, %v1838
        %v1840 = vpop.f32.mrf.mxu0
        %1841 = vmatprep.mubr.f32.mxu0 0.0
        %1842 = vmatmul.mubr.f32.gmra.mxu0 %v1603
        %v1843 = vpop.f32.mrf.mxu0
        %v1844 = vadd.f32 0.0, %v1843
        %v1845 = vpop.f32.mrf.mxu0
        %1846 = vmatprep.mubr.f32.mxu0 0.0
        %1847 = vmatmul.mubr.f32.gmra.mxu0 %v1606
        %v1848 = vpop.f32.mrf.mxu0
        %v1849 = vadd.f32 0.0, %v1848
        %v1850 = vpop.f32.mrf.mxu0
        %1851 = vmatprep.mubr.f32.mxu0 0.0
        %1852 = vmatmul.mubr.f32.gmra.mxu0 %v1609
        %v1853 = vpop.f32.mrf.mxu0
        %v1854 = vadd.f32 0.0, %v1853
        %v1855 = vpop.f32.mrf.mxu0
        %1856 = vmatprep.mubr.f32.mxu0 0.0
        %1857 = vmatmul.mubr.f32.gmra.mxu0 %v1612
        %v1858 = vpop.f32.mrf.mxu0
        %v1859 = vadd.f32 0.0, %v1858
        %v1860 = vpop.f32.mrf.mxu0
        %1861 = vdwg.mxu0
        %v1862 = vadd.f32 %v1432, %v1684
        %v1863 = vadd.f32 %v1433, %v1689
        %v1864 = vadd.f32 %v1434, %v1694
        %v1865 = vadd.f32 %v1435, %v1699
        %v1866 = vadd.f32 %v1436, %v1704
        %v1867 = vadd.f32 %v1437, %v1709
        %v1868 = vadd.f32 %v1438, %v1714
        %v1869 = vadd.f32 %v1439, %v1719
        %v1870 = vadd.f32 %v1440, %v1724
        %v1871 = vadd.f32 %v1441, %v1729
        %v1872 = vadd.f32 %v1442, %v1734
        %v1873 = vadd.f32 %v1443, %v1739
        %v1874 = vadd.f32 %v1444, %v1744
        %v1875 = vadd.f32 %v1445, %v1749
        %v1876 = vadd.f32 %v1446, %v1754
        %v1877 = vadd.f32 %v1447, %v1759
        %v1878 = vadd.f32 %v1448, %v1764
        %v1879 = vadd.f32 %v1449, %v1769
        %v1880 = vadd.f32 %v1450, %v1774
        %v1881 = vadd.f32 %v1451, %v1779
        %v1882 = vadd.f32 %v1452, %v1784
        %v1883 = vadd.f32 %v1453, %v1789
        %v1884 = vadd.f32 %v1454, %v1794
        %v1885 = vadd.f32 %v1455, %v1799
        %v1886 = vadd.f32 %v1456, %v1804
        %v1887 = vadd.f32 %v1457, %v1809
        %v1888 = vadd.f32 %v1458, %v1814
        %v1889 = vadd.f32 %v1459, %v1819
        %v1890 = vadd.f32 %v1460, %v1824
        %v1891 = vadd.f32 %v1461, %v1829
        %v1892 = vadd.f32 %v1462, %v1834
        %v1893 = vadd.f32 %v1463, %v1839
        %v1894 = vadd.f32 %v1464, %v1844
        %v1895 = vadd.f32 %v1465, %v1849
        %v1896 = vadd.f32 %v1466, %v1854
        %v1897 = vadd.f32 %v1467, %v1859
        %v1898 = vld [vmem:[%s248 + $0x13] sm:$0xff]
        %v1899 = vld [vmem:[%s248 + $0x1b] sm:$0xff]
        %v1900 = vld [vmem:[%s248 + $0x23] sm:$0xff]
        %v1901 = vld [vmem:[%s248 + $0x2b] sm:$0xff]
        %v1902 = vld [vmem:[%s248 + $0x33] sm:$0xff]
        %v1903 = vld [vmem:[%s248 + $0x3b] sm:$0xff]
        %v1904 = vld [vmem:[%s248 + $0x43] sm:$0xff]
        %v1905 = vld [vmem:[%s248 + $0x4b] sm:$0xff]
        %v1906 = vld [vmem:[%s248 + $0x53] sm:$0xff]
        %v1907 = vld [vmem:[%s248 + $0x5b] sm:$0xff]
        %v1908 = vld [vmem:[%s248 + $0x63] sm:$0xff]
        %v1909 = vld [vmem:[%s248 + $0x6b] sm:$0xff]
        %v1910 = vld [vmem:[%s248 + $0x73] sm:$0xff]
        %v1911 = vld [vmem:[%s248 + $0x7b] sm:$0xff]
        %v1912 = vld [vmem:[%s248 + $0x83] sm:$0xff]
        %v1913 = vld [vmem:[%s248 + $0x8b] sm:$0xff]
        %v1914 = vld [vmem:[%s248 + $0x93] sm:$0xff]
        %v1915 = vld [vmem:[%s248 + $0x9b] sm:$0xff]
        %v1916 = vld [vmem:[%s248 + $0xa3] sm:$0xff]
        %v1917 = vld [vmem:[%s248 + $0xab] sm:$0xff]
        %v1918 = vld [vmem:[%s248 + $0xb3] sm:$0xff]
        %v1919 = vld [vmem:[%s248 + $0xbb] sm:$0xff]
        %v1920 = vld [vmem:[%s248 + $0xc3] sm:$0xff]
        %v1921 = vld [vmem:[%s248 + $0xcb] sm:$0xff]
        %v1922 = vld [vmem:[%s248 + $0xd3] sm:$0xff]
        %v1923 = vld [vmem:[%s248 + $0xdb] sm:$0xff]
        %v1924 = vld [vmem:[%s248 + $0xe3] sm:$0xff]
        %v1925 = vld [vmem:[%s248 + $0xeb] sm:$0xff]
        %v1926 = vld [vmem:[%s248 + $0xf3] sm:$0xff]
        %v1927 = vld [vmem:[%s248 + $0xfb] sm:$0xff]
        %v1928 = vld [vmem:[%s248 + $0x103] sm:$0xff]
        %v1929 = vld [vmem:[%s248 + $0x10b] sm:$0xff]
        %v1930 = vld [vmem:[%s248 + $0x113] sm:$0xff]
        %v1931 = vld [vmem:[%s248 + $0x11b] sm:$0xff]
        %v1932 = vld [vmem:[%s248 + $0x123] sm:$0xff]
        %v1933 = vld [vmem:[%s248 + $0x12b] sm:$0xff]
        %s1934 = scalar_lea.vmem %s1, 16
        %v1935 = vld [vmem:[%s1934] sm:$0x7]
        %v1937 = vsel %vm324, %v1898, 0
        %v1940 = vsel %vm324, %v1899, 0
        %v1943 = vsel %vm324, %v1900, 0
        %v1946 = vsel %vm324, %v1901, 0
        %v1949 = vsel %vm324, %v1902, 0
        %v1952 = vsel %vm324, %v1903, 0
        %v1955 = vsel %vm324, %v1904, 0
        %v1958 = vsel %vm324, %v1905, 0
        %v1961 = vsel %vm324, %v1906, 0
        %v1964 = vsel %vm324, %v1907, 0
        %v1967 = vsel %vm324, %v1908, 0
        %v1970 = vsel %vm324, %v1909, 0
        %v1973 = vsel %vm324, %v1910, 0
        %v1976 = vsel %vm324, %v1911, 0
        %v1979 = vsel %vm324, %v1912, 0
        %v1982 = vsel %vm324, %v1913, 0
        %v1985 = vsel %vm324, %v1914, 0
        %v1988 = vsel %vm324, %v1915, 0
        %v1991 = vsel %vm324, %v1916, 0
        %v1994 = vsel %vm324, %v1917, 0
        %v1997 = vsel %vm324, %v1918, 0
        %v2000 = vsel %vm324, %v1919, 0
        %v2003 = vsel %vm324, %v1920, 0
        %v2006 = vsel %vm324, %v1921, 0
        %v2009 = vsel %vm324, %v1922, 0
        %v2012 = vsel %vm324, %v1923, 0
        %v2015 = vsel %vm324, %v1924, 0
        %v2018 = vsel %vm324, %v1925, 0
        %v2021 = vsel %vm324, %v1926, 0
        %v2024 = vsel %vm324, %v1927, 0
        %v2027 = vsel %vm324, %v1928, 0
        %v2030 = vsel %vm324, %v1929, 0
        %v2033 = vsel %vm324, %v1930, 0
        %v2036 = vsel %vm324, %v1931, 0
        %v2039 = vsel %vm324, %v1932, 0
        %v2042 = vsel %vm324, %v1933, 0
        %v2045 = vsel %vm433, %v1935, 0
        %2047 = vmatprep.subr.mxu0 0.0
        %2048 = vmatpush1.msra.mxu0 0.0
        %2049 = vmatprep.subr.mxu0 0.0
        %2050 = vmatpush1.msra.mxu0 0.0
        %2051 = vmatprep.subr.mxu0 0.0
        %2052 = vmatpush1.msra.mxu0 0.0
        %2053 = vmatprep.subr.mxu0 0.0
        %2054 = vmatpush1.msra.mxu0 0.0
        %2055 = vmatprep.subr.mxu0 0.0
        %2056 = vmatpush1.msra.mxu0 0.0
        %2057 = vmatprep.subr.mxu0 0.0
        %2058 = vmatpush1.msra.mxu0 0.0
        %2059 = vmatprep.subr.mxu0 0.0
        %2060 = vmatpush1.msra.mxu0 0.0
        %2061 = vmatprep.subr.mxu0 0.0
        %2062 = vmatpush1.msra.mxu0 0.0
        %2063 = vmatprep.subr.mxu0 0.0
        %2064 = vmatpush1.msra.mxu0 0.0
        %2065 = vmatprep.subr.mxu0 0.0
        %2066 = vmatpush1.msra.mxu0 0.0
        %2067 = vmatprep.subr.mxu0 0.0
        %2068 = vmatpush1.msra.mxu0 0.0
        %2069 = vmatprep.subr.mxu0 0.0
        %2070 = vmatpush1.msra.mxu0 0.0
        %2071 = vmatprep.subr.mxu0 0.0
        %2072 = vmatpush1.msra.mxu0 0.0
        %2073 = vmatprep.subr.mxu0 0.0
        %2074 = vmatpush1.msra.mxu0 0.0
        %2075 = vmatprep.subr.mxu0 0.0
        %2076 = vmatpush1.msra.mxu0 0.0
        %2077 = vmatprep.subr.mxu0 0.0
        %2078 = vmatpush1.msra.mxu0 %v2045
        %2079 = vmatprep.subr.mxu0 0.0
        %2080 = vmatpush2.msra.mxu0 0.0
        %2081 = vmatprep.subr.mxu0 0.0
        %2082 = vmatpush2.msra.mxu0 0.0
        %2083 = vmatprep.subr.mxu0 0.0
        %2084 = vmatpush2.msra.mxu0 0.0
        %2085 = vmatprep.subr.mxu0 0.0
        %2086 = vmatpush2.msra.mxu0 0.0
        %2087 = vmatprep.subr.mxu0 0.0
        %2088 = vmatpush2.msra.mxu0 0.0
        %2089 = vmatprep.subr.mxu0 0.0
        %2090 = vmatpush2.msra.mxu0 0.0
        %2091 = vmatprep.subr.mxu0 0.0
        %2092 = vmatpush2.msra.mxu0 0.0
        %2093 = vmatprep.subr.mxu0 0.0
        %2094 = vmatpush2.msra.mxu0 0.0
        %2095 = vmatprep.subr.mxu0 0.0
        %2096 = vmatpush2.msra.mxu0 0.0
        %2097 = vmatprep.subr.mxu0 0.0
        %2098 = vmatpush2.msra.mxu0 0.0
        %2099 = vmatprep.subr.mxu0 0.0
        %2100 = vmatpush2.msra.mxu0 0.0
        %2101 = vmatprep.subr.mxu0 0.0
        %2102 = vmatpush2.msra.mxu0 0.0
        %2103 = vmatprep.subr.mxu0 0.0
        %2104 = vmatpush2.msra.mxu0 0.0
        %2105 = vmatprep.subr.mxu0 0.0
        %2106 = vmatpush2.msra.mxu0 0.0
        %2107 = vmatprep.subr.mxu0 0.0
        %2108 = vmatpush2.msra.mxu0 0.0
        %2109 = vmatprep.subr.mxu0 0.0
        %2110 = vmatpush2.msra.mxu0 0.0
        %2111 = vmatprep.mubr.f32.mxu0 0.0
        %2112 = vmatmul.mubr.f32.gmra.mxu0 %v1937
        %v2113 = vpop.f32.mrf.mxu0
        %v2114 = vadd.f32 0.0, %v2113
        %v2115 = vpop.f32.mrf.mxu0
        %2116 = vmatprep.mubr.f32.mxu0 0.0
        %2117 = vmatmul.mubr.f32.gmra.mxu0 %v1940
        %v2118 = vpop.f32.mrf.mxu0
        %v2119 = vadd.f32 0.0, %v2118
        %v2120 = vpop.f32.mrf.mxu0
        %2121 = vmatprep.mubr.f32.mxu0 0.0
        %2122 = vmatmul.mubr.f32.gmra.mxu0 %v1943
        %v2123 = vpop.f32.mrf.mxu0
        %v2124 = vadd.f32 0.0, %v2123
        %v2125 = vpop.f32.mrf.mxu0
        %2126 = vmatprep.mubr.f32.mxu0 0.0
        %2127 = vmatmul.mubr.f32.gmra.mxu0 %v1946
        %v2128 = vpop.f32.mrf.mxu0
        %v2129 = vadd.f32 0.0, %v2128
        %v2130 = vpop.f32.mrf.mxu0
        %2131 = vmatprep.mubr.f32.mxu0 0.0
        %2132 = vmatmul.mubr.f32.gmra.mxu0 %v1949
        %v2133 = vpop.f32.mrf.mxu0
        %v2134 = vadd.f32 0.0, %v2133
        %v2135 = vpop.f32.mrf.mxu0
        %2136 = vmatprep.mubr.f32.mxu0 0.0
        %2137 = vmatmul.mubr.f32.gmra.mxu0 %v1952
        %v2138 = vpop.f32.mrf.mxu0
        %v2139 = vadd.f32 0.0, %v2138
        %v2140 = vpop.f32.mrf.mxu0
        %2141 = vmatprep.mubr.f32.mxu0 0.0
        %2142 = vmatmul.mubr.f32.gmra.mxu0 %v1955
        %v2143 = vpop.f32.mrf.mxu0
        %v2144 = vadd.f32 0.0, %v2143
        %v2145 = vpop.f32.mrf.mxu0
        %2146 = vmatprep.mubr.f32.mxu0 0.0
        %2147 = vmatmul.mubr.f32.gmra.mxu0 %v1958
        %v2148 = vpop.f32.mrf.mxu0
        %v2149 = vadd.f32 0.0, %v2148
        %v2150 = vpop.f32.mrf.mxu0
        %2151 = vmatprep.mubr.f32.mxu0 0.0
        %2152 = vmatmul.mubr.f32.gmra.mxu0 %v1961
        %v2153 = vpop.f32.mrf.mxu0
        %v2154 = vadd.f32 0.0, %v2153
        %v2155 = vpop.f32.mrf.mxu0
        %2156 = vmatprep.mubr.f32.mxu0 0.0
        %2157 = vmatmul.mubr.f32.gmra.mxu0 %v1964
        %v2158 = vpop.f32.mrf.mxu0
        %v2159 = vadd.f32 0.0, %v2158
        %v2160 = vpop.f32.mrf.mxu0
        %2161 = vmatprep.mubr.f32.mxu0 0.0
        %2162 = vmatmul.mubr.f32.gmra.mxu0 %v1967
        %v2163 = vpop.f32.mrf.mxu0
        %v2164 = vadd.f32 0.0, %v2163
        %v2165 = vpop.f32.mrf.mxu0
        %2166 = vmatprep.mubr.f32.mxu0 0.0
        %2167 = vmatmul.mubr.f32.gmra.mxu0 %v1970
        %v2168 = vpop.f32.mrf.mxu0
        %v2169 = vadd.f32 0.0, %v2168
        %v2170 = vpop.f32.mrf.mxu0
        %2171 = vmatprep.mubr.f32.mxu0 0.0
        %2172 = vmatmul.mubr.f32.gmra.mxu0 %v1973
        %v2173 = vpop.f32.mrf.mxu0
        %v2174 = vadd.f32 0.0, %v2173
        %v2175 = vpop.f32.mrf.mxu0
        %2176 = vmatprep.mubr.f32.mxu0 0.0
        %2177 = vmatmul.mubr.f32.gmra.mxu0 %v1976
        %v2178 = vpop.f32.mrf.mxu0
        %v2179 = vadd.f32 0.0, %v2178
        %v2180 = vpop.f32.mrf.mxu0
        %2181 = vmatprep.mubr.f32.mxu0 0.0
        %2182 = vmatmul.mubr.f32.gmra.mxu0 %v1979
        %v2183 = vpop.f32.mrf.mxu0
        %v2184 = vadd.f32 0.0, %v2183
        %v2185 = vpop.f32.mrf.mxu0
        %2186 = vmatprep.mubr.f32.mxu0 0.0
        %2187 = vmatmul.mubr.f32.gmra.mxu0 %v1982
        %v2188 = vpop.f32.mrf.mxu0
        %v2189 = vadd.f32 0.0, %v2188
        %v2190 = vpop.f32.mrf.mxu0
        %2191 = vmatprep.mubr.f32.mxu0 0.0
        %2192 = vmatmul.mubr.f32.gmra.mxu0 %v1985
        %v2193 = vpop.f32.mrf.mxu0
        %v2194 = vadd.f32 0.0, %v2193
        %v2195 = vpop.f32.mrf.mxu0
        %2196 = vmatprep.mubr.f32.mxu0 0.0
        %2197 = vmatmul.mubr.f32.gmra.mxu0 %v1988
        %v2198 = vpop.f32.mrf.mxu0
        %v2199 = vadd.f32 0.0, %v2198
        %v2200 = vpop.f32.mrf.mxu0
        %2201 = vmatprep.mubr.f32.mxu0 0.0
        %2202 = vmatmul.mubr.f32.gmra.mxu0 %v1991
        %v2203 = vpop.f32.mrf.mxu0
        %v2204 = vadd.f32 0.0, %v2203
        %v2205 = vpop.f32.mrf.mxu0
        %2206 = vmatprep.mubr.f32.mxu0 0.0
        %2207 = vmatmul.mubr.f32.gmra.mxu0 %v1994
        %v2208 = vpop.f32.mrf.mxu0
        %v2209 = vadd.f32 0.0, %v2208
        %v2210 = vpop.f32.mrf.mxu0
        %2211 = vmatprep.mubr.f32.mxu0 0.0
        %2212 = vmatmul.mubr.f32.gmra.mxu0 %v1997
        %v2213 = vpop.f32.mrf.mxu0
        %v2214 = vadd.f32 0.0, %v2213
        %v2215 = vpop.f32.mrf.mxu0
        %2216 = vmatprep.mubr.f32.mxu0 0.0
        %2217 = vmatmul.mubr.f32.gmra.mxu0 %v2000
        %v2218 = vpop.f32.mrf.mxu0
        %v2219 = vadd.f32 0.0, %v2218
        %v2220 = vpop.f32.mrf.mxu0
        %2221 = vmatprep.mubr.f32.mxu0 0.0
        %2222 = vmatmul.mubr.f32.gmra.mxu0 %v2003
        %v2223 = vpop.f32.mrf.mxu0
        %v2224 = vadd.f32 0.0, %v2223
        %v2225 = vpop.f32.mrf.mxu0
        %2226 = vmatprep.mubr.f32.mxu0 0.0
        %2227 = vmatmul.mubr.f32.gmra.mxu0 %v2006
        %v2228 = vpop.f32.mrf.mxu0
        %v2229 = vadd.f32 0.0, %v2228
        %v2230 = vpop.f32.mrf.mxu0
        %2231 = vmatprep.mubr.f32.mxu0 0.0
        %2232 = vmatmul.mubr.f32.gmra.mxu0 %v2009
        %v2233 = vpop.f32.mrf.mxu0
        %v2234 = vadd.f32 0.0, %v2233
        %v2235 = vpop.f32.mrf.mxu0
        %2236 = vmatprep.mubr.f32.mxu0 0.0
        %2237 = vmatmul.mubr.f32.gmra.mxu0 %v2012
        %v2238 = vpop.f32.mrf.mxu0
        %v2239 = vadd.f32 0.0, %v2238
        %v2240 = vpop.f32.mrf.mxu0
        %2241 = vmatprep.mubr.f32.mxu0 0.0
        %2242 = vmatmul.mubr.f32.gmra.mxu0 %v2015
        %v2243 = vpop.f32.mrf.mxu0
        %v2244 = vadd.f32 0.0, %v2243
        %v2245 = vpop.f32.mrf.mxu0
        %2246 = vmatprep.mubr.f32.mxu0 0.0
        %2247 = vmatmul.mubr.f32.gmra.mxu0 %v2018
        %v2248 = vpop.f32.mrf.mxu0
        %v2249 = vadd.f32 0.0, %v2248
        %v2250 = vpop.f32.mrf.mxu0
        %2251 = vmatprep.mubr.f32.mxu0 0.0
        %2252 = vmatmul.mubr.f32.gmra.mxu0 %v2021
        %v2253 = vpop.f32.mrf.mxu0
        %v2254 = vadd.f32 0.0, %v2253
        %v2255 = vpop.f32.mrf.mxu0
        %2256 = vmatprep.mubr.f32.mxu0 0.0
        %2257 = vmatmul.mubr.f32.gmra.mxu0 %v2024
        %v2258 = vpop.f32.mrf.mxu0
        %v2259 = vadd.f32 0.0, %v2258
        %v2260 = vpop.f32.mrf.mxu0
        %2261 = vmatprep.mubr.f32.mxu0 0.0
        %2262 = vmatmul.mubr.f32.gmra.mxu0 %v2027
        %v2263 = vpop.f32.mrf.mxu0
        %v2264 = vadd.f32 0.0, %v2263
        %v2265 = vpop.f32.mrf.mxu0
        %2266 = vmatprep.mubr.f32.mxu0 0.0
        %2267 = vmatmul.mubr.f32.gmra.mxu0 %v2030
        %v2268 = vpop.f32.mrf.mxu0
        %v2269 = vadd.f32 0.0, %v2268
        %v2270 = vpop.f32.mrf.mxu0
        %2271 = vmatprep.mubr.f32.mxu0 0.0
        %2272 = vmatmul.mubr.f32.gmra.mxu0 %v2033
        %v2273 = vpop.f32.mrf.mxu0
        %v2274 = vadd.f32 0.0, %v2273
        %v2275 = vpop.f32.mrf.mxu0
        %2276 = vmatprep.mubr.f32.mxu0 0.0
        %2277 = vmatmul.mubr.f32.gmra.mxu0 %v2036
        %v2278 = vpop.f32.mrf.mxu0
        %v2279 = vadd.f32 0.0, %v2278
        %v2280 = vpop.f32.mrf.mxu0
        %2281 = vmatprep.mubr.f32.mxu0 0.0
        %2282 = vmatmul.mubr.f32.gmra.mxu0 %v2039
        %v2283 = vpop.f32.mrf.mxu0
        %v2284 = vadd.f32 0.0, %v2283
        %v2285 = vpop.f32.mrf.mxu0
        %2286 = vmatprep.mubr.f32.mxu0 0.0
        %2287 = vmatmul.mubr.f32.gmra.mxu0 %v2042
        %v2288 = vpop.f32.mrf.mxu0
        %v2289 = vadd.f32 0.0, %v2288
        %v2290 = vpop.f32.mrf.mxu0
        %2291 = vdwg.mxu0
        %v2292 = vadd.f32 %v1862, %v2114
        %v2293 = vadd.f32 %v1863, %v2119
        %v2294 = vadd.f32 %v1864, %v2124
        %v2295 = vadd.f32 %v1865, %v2129
        %v2296 = vadd.f32 %v1866, %v2134
        %v2297 = vadd.f32 %v1867, %v2139
        %v2298 = vadd.f32 %v1868, %v2144
        %v2299 = vadd.f32 %v1869, %v2149
        %v2300 = vadd.f32 %v1870, %v2154
        %v2301 = vadd.f32 %v1871, %v2159
        %v2302 = vadd.f32 %v1872, %v2164
        %v2303 = vadd.f32 %v1873, %v2169
        %v2304 = vadd.f32 %v1874, %v2174
        %v2305 = vadd.f32 %v1875, %v2179
        %v2306 = vadd.f32 %v1876, %v2184
        %v2307 = vadd.f32 %v1877, %v2189
        %v2308 = vadd.f32 %v1878, %v2194
        %v2309 = vadd.f32 %v1879, %v2199
        %v2310 = vadd.f32 %v1880, %v2204
        %v2311 = vadd.f32 %v1881, %v2209
        %v2312 = vadd.f32 %v1882, %v2214
        %v2313 = vadd.f32 %v1883, %v2219
        %v2314 = vadd.f32 %v1884, %v2224
        %v2315 = vadd.f32 %v1885, %v2229
        %v2316 = vadd.f32 %v1886, %v2234
        %v2317 = vadd.f32 %v1887, %v2239
        %v2318 = vadd.f32 %v1888, %v2244
        %v2319 = vadd.f32 %v1889, %v2249
        %v2320 = vadd.f32 %v1890, %v2254
        %v2321 = vadd.f32 %v1891, %v2259
        %v2322 = vadd.f32 %v1892, %v2264
        %v2323 = vadd.f32 %v1893, %v2269
        %v2324 = vadd.f32 %v1894, %v2274
        %v2325 = vadd.f32 %v1895, %v2279
        %v2326 = vadd.f32 %v1896, %v2284
        %v2327 = vadd.f32 %v1897, %v2289
        %v2328 = vld [vmem:[%s248 + $0x14] sm:$0xff]
        %v2329 = vld [vmem:[%s248 + $0x1c] sm:$0xff]
        %v2330 = vld [vmem:[%s248 + $0x24] sm:$0xff]
        %v2331 = vld [vmem:[%s248 + $0x2c] sm:$0xff]
        %v2332 = vld [vmem:[%s248 + $0x34] sm:$0xff]
        %v2333 = vld [vmem:[%s248 + $0x3c] sm:$0xff]
        %v2334 = vld [vmem:[%s248 + $0x44] sm:$0xff]
        %v2335 = vld [vmem:[%s248 + $0x4c] sm:$0xff]
        %v2336 = vld [vmem:[%s248 + $0x54] sm:$0xff]
        %v2337 = vld [vmem:[%s248 + $0x5c] sm:$0xff]
        %v2338 = vld [vmem:[%s248 + $0x64] sm:$0xff]
        %v2339 = vld [vmem:[%s248 + $0x6c] sm:$0xff]
        %v2340 = vld [vmem:[%s248 + $0x74] sm:$0xff]
        %v2341 = vld [vmem:[%s248 + $0x7c] sm:$0xff]
        %v2342 = vld [vmem:[%s248 + $0x84] sm:$0xff]
        %v2343 = vld [vmem:[%s248 + $0x8c] sm:$0xff]
        %v2344 = vld [vmem:[%s248 + $0x94] sm:$0xff]
        %v2345 = vld [vmem:[%s248 + $0x9c] sm:$0xff]
        %v2346 = vld [vmem:[%s248 + $0xa4] sm:$0xff]
        %v2347 = vld [vmem:[%s248 + $0xac] sm:$0xff]
        %v2348 = vld [vmem:[%s248 + $0xb4] sm:$0xff]
        %v2349 = vld [vmem:[%s248 + $0xbc] sm:$0xff]
        %v2350 = vld [vmem:[%s248 + $0xc4] sm:$0xff]
        %v2351 = vld [vmem:[%s248 + $0xcc] sm:$0xff]
        %v2352 = vld [vmem:[%s248 + $0xd4] sm:$0xff]
        %v2353 = vld [vmem:[%s248 + $0xdc] sm:$0xff]
        %v2354 = vld [vmem:[%s248 + $0xe4] sm:$0xff]
        %v2355 = vld [vmem:[%s248 + $0xec] sm:$0xff]
        %v2356 = vld [vmem:[%s248 + $0xf4] sm:$0xff]
        %v2357 = vld [vmem:[%s248 + $0xfc] sm:$0xff]
        %v2358 = vld [vmem:[%s248 + $0x104] sm:$0xff]
        %v2359 = vld [vmem:[%s248 + $0x10c] sm:$0xff]
        %v2360 = vld [vmem:[%s248 + $0x114] sm:$0xff]
        %v2361 = vld [vmem:[%s248 + $0x11c] sm:$0xff]
        %v2362 = vld [vmem:[%s248 + $0x124] sm:$0xff]
        %v2363 = vld [vmem:[%s248 + $0x12c] sm:$0xff]
        %s2364 = scalar_lea.vmem %s1, 20
        %v2365 = vld [vmem:[%s2364] sm:$0x7]
        %v2367 = vsel %vm324, %v2328, 0
        %v2370 = vsel %vm324, %v2329, 0
        %v2373 = vsel %vm324, %v2330, 0
        %v2376 = vsel %vm324, %v2331, 0
        %v2379 = vsel %vm324, %v2332, 0
        %v2382 = vsel %vm324, %v2333, 0
        %v2385 = vsel %vm324, %v2334, 0
        %v2388 = vsel %vm324, %v2335, 0
        %v2391 = vsel %vm324, %v2336, 0
        %v2394 = vsel %vm324, %v2337, 0
        %v2397 = vsel %vm324, %v2338, 0
        %v2400 = vsel %vm324, %v2339, 0
        %v2403 = vsel %vm324, %v2340, 0
        %v2406 = vsel %vm324, %v2341, 0
        %v2409 = vsel %vm324, %v2342, 0
        %v2412 = vsel %vm324, %v2343, 0
        %v2415 = vsel %vm324, %v2344, 0
        %v2418 = vsel %vm324, %v2345, 0
        %v2421 = vsel %vm324, %v2346, 0
        %v2424 = vsel %vm324, %v2347, 0
        %v2427 = vsel %vm324, %v2348, 0
        %v2430 = vsel %vm324, %v2349, 0
        %v2433 = vsel %vm324, %v2350, 0
        %v2436 = vsel %vm324, %v2351, 0
        %v2439 = vsel %vm324, %v2352, 0
        %v2442 = vsel %vm324, %v2353, 0
        %v2445 = vsel %vm324, %v2354, 0
        %v2448 = vsel %vm324, %v2355, 0
        %v2451 = vsel %vm324, %v2356, 0
        %v2454 = vsel %vm324, %v2357, 0
        %v2457 = vsel %vm324, %v2358, 0
        %v2460 = vsel %vm324, %v2359, 0
        %v2463 = vsel %vm324, %v2360, 0
        %v2466 = vsel %vm324, %v2361, 0
        %v2469 = vsel %vm324, %v2362, 0
        %v2472 = vsel %vm324, %v2363, 0
        %v2475 = vsel %vm433, %v2365, 0
        %2477 = vmatprep.subr.mxu0 0.0
        %2478 = vmatpush1.msra.mxu0 0.0
        %2479 = vmatprep.subr.mxu0 0.0
        %2480 = vmatpush1.msra.mxu0 0.0
        %2481 = vmatprep.subr.mxu0 0.0
        %2482 = vmatpush1.msra.mxu0 0.0
        %2483 = vmatprep.subr.mxu0 0.0
        %2484 = vmatpush1.msra.mxu0 0.0
        %2485 = vmatprep.subr.mxu0 0.0
        %2486 = vmatpush1.msra.mxu0 0.0
        %2487 = vmatprep.subr.mxu0 0.0
        %2488 = vmatpush1.msra.mxu0 0.0
        %2489 = vmatprep.subr.mxu0 0.0
        %2490 = vmatpush1.msra.mxu0 0.0
        %2491 = vmatprep.subr.mxu0 0.0
        %2492 = vmatpush1.msra.mxu0 0.0
        %2493 = vmatprep.subr.mxu0 0.0
        %2494 = vmatpush1.msra.mxu0 0.0
        %2495 = vmatprep.subr.mxu0 0.0
        %2496 = vmatpush1.msra.mxu0 0.0
        %2497 = vmatprep.subr.mxu0 0.0
        %2498 = vmatpush1.msra.mxu0 0.0
        %2499 = vmatprep.subr.mxu0 0.0
        %2500 = vmatpush1.msra.mxu0 0.0
        %2501 = vmatprep.subr.mxu0 0.0
        %2502 = vmatpush1.msra.mxu0 0.0
        %2503 = vmatprep.subr.mxu0 0.0
        %2504 = vmatpush1.msra.mxu0 0.0
        %2505 = vmatprep.subr.mxu0 0.0
        %2506 = vmatpush1.msra.mxu0 0.0
        %2507 = vmatprep.subr.mxu0 0.0
        %2508 = vmatpush1.msra.mxu0 %v2475
        %2509 = vmatprep.subr.mxu0 0.0
        %2510 = vmatpush2.msra.mxu0 0.0
        %2511 = vmatprep.subr.mxu0 0.0
        %2512 = vmatpush2.msra.mxu0 0.0
        %2513 = vmatprep.subr.mxu0 0.0
        %2514 = vmatpush2.msra.mxu0 0.0
        %2515 = vmatprep.subr.mxu0 0.0
        %2516 = vmatpush2.msra.mxu0 0.0
        %2517 = vmatprep.subr.mxu0 0.0
        %2518 = vmatpush2.msra.mxu0 0.0
        %2519 = vmatprep.subr.mxu0 0.0
        %2520 = vmatpush2.msra.mxu0 0.0
        %2521 = vmatprep.subr.mxu0 0.0
        %2522 = vmatpush2.msra.mxu0 0.0
        %2523 = vmatprep.subr.mxu0 0.0
        %2524 = vmatpush2.msra.mxu0 0.0
        %2525 = vmatprep.subr.mxu0 0.0
        %2526 = vmatpush2.msra.mxu0 0.0
        %2527 = vmatprep.subr.mxu0 0.0
        %2528 = vmatpush2.msra.mxu0 0.0
        %2529 = vmatprep.subr.mxu0 0.0
        %2530 = vmatpush2.msra.mxu0 0.0
        %2531 = vmatprep.subr.mxu0 0.0
        %2532 = vmatpush2.msra.mxu0 0.0
        %2533 = vmatprep.subr.mxu0 0.0
        %2534 = vmatpush2.msra.mxu0 0.0
        %2535 = vmatprep.subr.mxu0 0.0
        %2536 = vmatpush2.msra.mxu0 0.0
        %2537 = vmatprep.subr.mxu0 0.0
        %2538 = vmatpush2.msra.mxu0 0.0
        %2539 = vmatprep.subr.mxu0 0.0
        %2540 = vmatpush2.msra.mxu0 0.0
        %2541 = vmatprep.mubr.f32.mxu0 0.0
        %2542 = vmatmul.mubr.f32.gmra.mxu0 %v2367
        %v2543 = vpop.f32.mrf.mxu0
        %v2544 = vadd.f32 0.0, %v2543
        %v2545 = vpop.f32.mrf.mxu0
        %2546 = vmatprep.mubr.f32.mxu0 0.0
        %2547 = vmatmul.mubr.f32.gmra.mxu0 %v2370
        %v2548 = vpop.f32.mrf.mxu0
        %v2549 = vadd.f32 0.0, %v2548
        %v2550 = vpop.f32.mrf.mxu0
        %2551 = vmatprep.mubr.f32.mxu0 0.0
        %2552 = vmatmul.mubr.f32.gmra.mxu0 %v2373
        %v2553 = vpop.f32.mrf.mxu0
        %v2554 = vadd.f32 0.0, %v2553
        %v2555 = vpop.f32.mrf.mxu0
        %2556 = vmatprep.mubr.f32.mxu0 0.0
        %2557 = vmatmul.mubr.f32.gmra.mxu0 %v2376
        %v2558 = vpop.f32.mrf.mxu0
        %v2559 = vadd.f32 0.0, %v2558
        %v2560 = vpop.f32.mrf.mxu0
        %2561 = vmatprep.mubr.f32.mxu0 0.0
        %2562 = vmatmul.mubr.f32.gmra.mxu0 %v2379
        %v2563 = vpop.f32.mrf.mxu0
        %v2564 = vadd.f32 0.0, %v2563
        %v2565 = vpop.f32.mrf.mxu0
        %2566 = vmatprep.mubr.f32.mxu0 0.0
        %2567 = vmatmul.mubr.f32.gmra.mxu0 %v2382
        %v2568 = vpop.f32.mrf.mxu0
        %v2569 = vadd.f32 0.0, %v2568
        %v2570 = vpop.f32.mrf.mxu0
        %2571 = vmatprep.mubr.f32.mxu0 0.0
        %2572 = vmatmul.mubr.f32.gmra.mxu0 %v2385
        %v2573 = vpop.f32.mrf.mxu0
        %v2574 = vadd.f32 0.0, %v2573
        %v2575 = vpop.f32.mrf.mxu0
        %2576 = vmatprep.mubr.f32.mxu0 0.0
        %2577 = vmatmul.mubr.f32.gmra.mxu0 %v2388
        %v2578 = vpop.f32.mrf.mxu0
        %v2579 = vadd.f32 0.0, %v2578
        %v2580 = vpop.f32.mrf.mxu0
        %2581 = vmatprep.mubr.f32.mxu0 0.0
        %2582 = vmatmul.mubr.f32.gmra.mxu0 %v2391
        %v2583 = vpop.f32.mrf.mxu0
        %v2584 = vadd.f32 0.0, %v2583
        %v2585 = vpop.f32.mrf.mxu0
        %2586 = vmatprep.mubr.f32.mxu0 0.0
        %2587 = vmatmul.mubr.f32.gmra.mxu0 %v2394
        %v2588 = vpop.f32.mrf.mxu0
        %v2589 = vadd.f32 0.0, %v2588
        %v2590 = vpop.f32.mrf.mxu0
        %2591 = vmatprep.mubr.f32.mxu0 0.0
        %2592 = vmatmul.mubr.f32.gmra.mxu0 %v2397
        %v2593 = vpop.f32.mrf.mxu0
        %v2594 = vadd.f32 0.0, %v2593
        %v2595 = vpop.f32.mrf.mxu0
        %2596 = vmatprep.mubr.f32.mxu0 0.0
        %2597 = vmatmul.mubr.f32.gmra.mxu0 %v2400
        %v2598 = vpop.f32.mrf.mxu0
        %v2599 = vadd.f32 0.0, %v2598
        %v2600 = vpop.f32.mrf.mxu0
        %2601 = vmatprep.mubr.f32.mxu0 0.0
        %2602 = vmatmul.mubr.f32.gmra.mxu0 %v2403
        %v2603 = vpop.f32.mrf.mxu0
        %v2604 = vadd.f32 0.0, %v2603
        %v2605 = vpop.f32.mrf.mxu0
        %2606 = vmatprep.mubr.f32.mxu0 0.0
        %2607 = vmatmul.mubr.f32.gmra.mxu0 %v2406
        %v2608 = vpop.f32.mrf.mxu0
        %v2609 = vadd.f32 0.0, %v2608
        %v2610 = vpop.f32.mrf.mxu0
        %2611 = vmatprep.mubr.f32.mxu0 0.0
        %2612 = vmatmul.mubr.f32.gmra.mxu0 %v2409
        %v2613 = vpop.f32.mrf.mxu0
        %v2614 = vadd.f32 0.0, %v2613
        %v2615 = vpop.f32.mrf.mxu0
        %2616 = vmatprep.mubr.f32.mxu0 0.0
        %2617 = vmatmul.mubr.f32.gmra.mxu0 %v2412
        %v2618 = vpop.f32.mrf.mxu0
        %v2619 = vadd.f32 0.0, %v2618
        %v2620 = vpop.f32.mrf.mxu0
        %2621 = vmatprep.mubr.f32.mxu0 0.0
        %2622 = vmatmul.mubr.f32.gmra.mxu0 %v2415
        %v2623 = vpop.f32.mrf.mxu0
        %v2624 = vadd.f32 0.0, %v2623
        %v2625 = vpop.f32.mrf.mxu0
        %2626 = vmatprep.mubr.f32.mxu0 0.0
        %2627 = vmatmul.mubr.f32.gmra.mxu0 %v2418
        %v2628 = vpop.f32.mrf.mxu0
        %v2629 = vadd.f32 0.0, %v2628
        %v2630 = vpop.f32.mrf.mxu0
        %2631 = vmatprep.mubr.f32.mxu0 0.0
        %2632 = vmatmul.mubr.f32.gmra.mxu0 %v2421
        %v2633 = vpop.f32.mrf.mxu0
        %v2634 = vadd.f32 0.0, %v2633
        %v2635 = vpop.f32.mrf.mxu0
        %2636 = vmatprep.mubr.f32.mxu0 0.0
        %2637 = vmatmul.mubr.f32.gmra.mxu0 %v2424
        %v2638 = vpop.f32.mrf.mxu0
        %v2639 = vadd.f32 0.0, %v2638
        %v2640 = vpop.f32.mrf.mxu0
        %2641 = vmatprep.mubr.f32.mxu0 0.0
        %2642 = vmatmul.mubr.f32.gmra.mxu0 %v2427
        %v2643 = vpop.f32.mrf.mxu0
        %v2644 = vadd.f32 0.0, %v2643
        %v2645 = vpop.f32.mrf.mxu0
        %2646 = vmatprep.mubr.f32.mxu0 0.0
        %2647 = vmatmul.mubr.f32.gmra.mxu0 %v2430
        %v2648 = vpop.f32.mrf.mxu0
        %v2649 = vadd.f32 0.0, %v2648
        %v2650 = vpop.f32.mrf.mxu0
        %2651 = vmatprep.mubr.f32.mxu0 0.0
        %2652 = vmatmul.mubr.f32.gmra.mxu0 %v2433
        %v2653 = vpop.f32.mrf.mxu0
        %v2654 = vadd.f32 0.0, %v2653
        %v2655 = vpop.f32.mrf.mxu0
        %2656 = vmatprep.mubr.f32.mxu0 0.0
        %2657 = vmatmul.mubr.f32.gmra.mxu0 %v2436
        %v2658 = vpop.f32.mrf.mxu0
        %v2659 = vadd.f32 0.0, %v2658
        %v2660 = vpop.f32.mrf.mxu0
        %2661 = vmatprep.mubr.f32.mxu0 0.0
        %2662 = vmatmul.mubr.f32.gmra.mxu0 %v2439
        %v2663 = vpop.f32.mrf.mxu0
        %v2664 = vadd.f32 0.0, %v2663
        %v2665 = vpop.f32.mrf.mxu0
        %2666 = vmatprep.mubr.f32.mxu0 0.0
        %2667 = vmatmul.mubr.f32.gmra.mxu0 %v2442
        %v2668 = vpop.f32.mrf.mxu0
        %v2669 = vadd.f32 0.0, %v2668
        %v2670 = vpop.f32.mrf.mxu0
        %2671 = vmatprep.mubr.f32.mxu0 0.0
        %2672 = vmatmul.mubr.f32.gmra.mxu0 %v2445
        %v2673 = vpop.f32.mrf.mxu0
        %v2674 = vadd.f32 0.0, %v2673
        %v2675 = vpop.f32.mrf.mxu0
        %2676 = vmatprep.mubr.f32.mxu0 0.0
        %2677 = vmatmul.mubr.f32.gmra.mxu0 %v2448
        %v2678 = vpop.f32.mrf.mxu0
        %v2679 = vadd.f32 0.0, %v2678
        %v2680 = vpop.f32.mrf.mxu0
        %2681 = vmatprep.mubr.f32.mxu0 0.0
        %2682 = vmatmul.mubr.f32.gmra.mxu0 %v2451
        %v2683 = vpop.f32.mrf.mxu0
        %v2684 = vadd.f32 0.0, %v2683
        %v2685 = vpop.f32.mrf.mxu0
        %2686 = vmatprep.mubr.f32.mxu0 0.0
        %2687 = vmatmul.mubr.f32.gmra.mxu0 %v2454
        %v2688 = vpop.f32.mrf.mxu0
        %v2689 = vadd.f32 0.0, %v2688
        %v2690 = vpop.f32.mrf.mxu0
        %2691 = vmatprep.mubr.f32.mxu0 0.0
        %2692 = vmatmul.mubr.f32.gmra.mxu0 %v2457
        %v2693 = vpop.f32.mrf.mxu0
        %v2694 = vadd.f32 0.0, %v2693
        %v2695 = vpop.f32.mrf.mxu0
        %2696 = vmatprep.mubr.f32.mxu0 0.0
        %2697 = vmatmul.mubr.f32.gmra.mxu0 %v2460
        %v2698 = vpop.f32.mrf.mxu0
        %v2699 = vadd.f32 0.0, %v2698
        %v2700 = vpop.f32.mrf.mxu0
        %2701 = vmatprep.mubr.f32.mxu0 0.0
        %2702 = vmatmul.mubr.f32.gmra.mxu0 %v2463
        %v2703 = vpop.f32.mrf.mxu0
        %v2704 = vadd.f32 0.0, %v2703
        %v2705 = vpop.f32.mrf.mxu0
        %2706 = vmatprep.mubr.f32.mxu0 0.0
        %2707 = vmatmul.mubr.f32.gmra.mxu0 %v2466
        %v2708 = vpop.f32.mrf.mxu0
        %v2709 = vadd.f32 0.0, %v2708
        %v2710 = vpop.f32.mrf.mxu0
        %2711 = vmatprep.mubr.f32.mxu0 0.0
        %2712 = vmatmul.mubr.f32.gmra.mxu0 %v2469
        %v2713 = vpop.f32.mrf.mxu0
        %v2714 = vadd.f32 0.0, %v2713
        %v2715 = vpop.f32.mrf.mxu0
        %2716 = vmatprep.mubr.f32.mxu0 0.0
        %2717 = vmatmul.mubr.f32.gmra.mxu0 %v2472
        %v2718 = vpop.f32.mrf.mxu0
        %v2719 = vadd.f32 0.0, %v2718
        %v2720 = vpop.f32.mrf.mxu0
        %2721 = vdwg.mxu0
        %v2722 = vadd.f32 %v2292, %v2544
        %v2723 = vadd.f32 %v2293, %v2549
        %v2724 = vadd.f32 %v2294, %v2554
        %v2725 = vadd.f32 %v2295, %v2559
        %v2726 = vadd.f32 %v2296, %v2564
        %v2727 = vadd.f32 %v2297, %v2569
        %v2728 = vadd.f32 %v2298, %v2574
        %v2729 = vadd.f32 %v2299, %v2579
        %v2730 = vadd.f32 %v2300, %v2584
        %v2731 = vadd.f32 %v2301, %v2589
        %v2732 = vadd.f32 %v2302, %v2594
        %v2733 = vadd.f32 %v2303, %v2599
        %v2734 = vadd.f32 %v2304, %v2604
        %v2735 = vadd.f32 %v2305, %v2609
        %v2736 = vadd.f32 %v2306, %v2614
        %v2737 = vadd.f32 %v2307, %v2619
        %v2738 = vadd.f32 %v2308, %v2624
        %v2739 = vadd.f32 %v2309, %v2629
        %v2740 = vadd.f32 %v2310, %v2634
        %v2741 = vadd.f32 %v2311, %v2639
        %v2742 = vadd.f32 %v2312, %v2644
        %v2743 = vadd.f32 %v2313, %v2649
        %v2744 = vadd.f32 %v2314, %v2654
        %v2745 = vadd.f32 %v2315, %v2659
        %v2746 = vadd.f32 %v2316, %v2664
        %v2747 = vadd.f32 %v2317, %v2669
        %v2748 = vadd.f32 %v2318, %v2674
        %v2749 = vadd.f32 %v2319, %v2679
        %v2750 = vadd.f32 %v2320, %v2684
        %v2751 = vadd.f32 %v2321, %v2689
        %v2752 = vadd.f32 %v2322, %v2694
        %v2753 = vadd.f32 %v2323, %v2699
        %v2754 = vadd.f32 %v2324, %v2704
        %v2755 = vadd.f32 %v2325, %v2709
        %v2756 = vadd.f32 %v2326, %v2714
        %v2757 = vadd.f32 %v2327, %v2719
        %v2758 = vld [vmem:[%s248 + $0x24] sm:$0xff]
        %v2759 = vld [vmem:[%s248 + $0x2c] sm:$0xff]
        %v2760 = vld [vmem:[%s248 + $0x34] sm:$0xff]
        %v2761 = vld [vmem:[%s248 + $0x3c] sm:$0xff]
        %v2762 = vld [vmem:[%s248 + $0x44] sm:$0xff]
        %v2763 = vld [vmem:[%s248 + $0x4c] sm:$0xff]
        %v2764 = vld [vmem:[%s248 + $0x54] sm:$0xff]
        %v2765 = vld [vmem:[%s248 + $0x5c] sm:$0xff]
        %v2766 = vld [vmem:[%s248 + $0x64] sm:$0xff]
        %v2767 = vld [vmem:[%s248 + $0x6c] sm:$0xff]
        %v2768 = vld [vmem:[%s248 + $0x74] sm:$0xff]
        %v2769 = vld [vmem:[%s248 + $0x7c] sm:$0xff]
        %v2770 = vld [vmem:[%s248 + $0x84] sm:$0xff]
        %v2771 = vld [vmem:[%s248 + $0x8c] sm:$0xff]
        %v2772 = vld [vmem:[%s248 + $0x94] sm:$0xff]
        %v2773 = vld [vmem:[%s248 + $0x9c] sm:$0xff]
        %v2774 = vld [vmem:[%s248 + $0xa4] sm:$0xff]
        %v2775 = vld [vmem:[%s248 + $0xac] sm:$0xff]
        %v2776 = vld [vmem:[%s248 + $0xb4] sm:$0xff]
        %v2777 = vld [vmem:[%s248 + $0xbc] sm:$0xff]
        %v2778 = vld [vmem:[%s248 + $0xc4] sm:$0xff]
        %v2779 = vld [vmem:[%s248 + $0xcc] sm:$0xff]
        %v2780 = vld [vmem:[%s248 + $0xd4] sm:$0xff]
        %v2781 = vld [vmem:[%s248 + $0xdc] sm:$0xff]
        %v2782 = vld [vmem:[%s248 + $0xe4] sm:$0xff]
        %v2783 = vld [vmem:[%s248 + $0xec] sm:$0xff]
        %v2784 = vld [vmem:[%s248 + $0xf4] sm:$0xff]
        %v2785 = vld [vmem:[%s248 + $0xfc] sm:$0xff]
        %v2786 = vld [vmem:[%s248 + $0x104] sm:$0xff]
        %v2787 = vld [vmem:[%s248 + $0x10c] sm:$0xff]
        %v2788 = vld [vmem:[%s248 + $0x114] sm:$0xff]
        %v2789 = vld [vmem:[%s248 + $0x11c] sm:$0xff]
        %v2790 = vld [vmem:[%s248 + $0x124] sm:$0xff]
        %v2791 = vld [vmem:[%s248 + $0x12c] sm:$0xff]
        %v2792 = vld [vmem:[%s248 + $0x134] sm:$0xff]
        %v2793 = vld [vmem:[%s248 + $0x13c] sm:$0xff]
        %s2794 = scalar_lea.vmem %s1, 24
        %v2795 = vld [vmem:[%s2794] sm:$0x7]
        %v2797 = vsel %vm324, %v2758, 0
        %v2800 = vsel %vm324, %v2759, 0
        %v2803 = vsel %vm324, %v2760, 0
        %v2806 = vsel %vm324, %v2761, 0
        %v2809 = vsel %vm324, %v2762, 0
        %v2812 = vsel %vm324, %v2763, 0
        %v2815 = vsel %vm324, %v2764, 0
        %v2818 = vsel %vm324, %v2765, 0
        %v2821 = vsel %vm324, %v2766, 0
        %v2824 = vsel %vm324, %v2767, 0
        %v2827 = vsel %vm324, %v2768, 0
        %v2830 = vsel %vm324, %v2769, 0
        %v2833 = vsel %vm324, %v2770, 0
        %v2836 = vsel %vm324, %v2771, 0
        %v2839 = vsel %vm324, %v2772, 0
        %v2842 = vsel %vm324, %v2773, 0
        %v2845 = vsel %vm324, %v2774, 0
        %v2848 = vsel %vm324, %v2775, 0
        %v2851 = vsel %vm324, %v2776, 0
        %v2854 = vsel %vm324, %v2777, 0
        %v2857 = vsel %vm324, %v2778, 0
        %v2860 = vsel %vm324, %v2779, 0
        %v2863 = vsel %vm324, %v2780, 0
        %v2866 = vsel %vm324, %v2781, 0
        %v2869 = vsel %vm324, %v2782, 0
        %v2872 = vsel %vm324, %v2783, 0
        %v2875 = vsel %vm324, %v2784, 0
        %v2878 = vsel %vm324, %v2785, 0
        %v2881 = vsel %vm324, %v2786, 0
        %v2884 = vsel %vm324, %v2787, 0
        %v2887 = vsel %vm324, %v2788, 0
        %v2890 = vsel %vm324, %v2789, 0
        %v2893 = vsel %vm324, %v2790, 0
        %v2896 = vsel %vm324, %v2791, 0
        %v2899 = vsel %vm324, %v2792, 0
        %v2902 = vsel %vm324, %v2793, 0
        %v2905 = vsel %vm433, %v2795, 0
        %2907 = vmatprep.subr.mxu0 0.0
        %2908 = vmatpush1.msra.mxu0 0.0
        %2909 = vmatprep.subr.mxu0 0.0
        %2910 = vmatpush1.msra.mxu0 0.0
        %2911 = vmatprep.subr.mxu0 0.0
        %2912 = vmatpush1.msra.mxu0 0.0
        %2913 = vmatprep.subr.mxu0 0.0
        %2914 = vmatpush1.msra.mxu0 0.0
        %2915 = vmatprep.subr.mxu0 0.0
        %2916 = vmatpush1.msra.mxu0 0.0
        %2917 = vmatprep.subr.mxu0 0.0
        %2918 = vmatpush1.msra.mxu0 0.0
        %2919 = vmatprep.subr.mxu0 0.0
        %2920 = vmatpush1.msra.mxu0 0.0
        %2921 = vmatprep.subr.mxu0 0.0
        %2922 = vmatpush1.msra.mxu0 0.0
        %2923 = vmatprep.subr.mxu0 0.0
        %2924 = vmatpush1.msra.mxu0 0.0
        %2925 = vmatprep.subr.mxu0 0.0
        %2926 = vmatpush1.msra.mxu0 0.0
        %2927 = vmatprep.subr.mxu0 0.0
        %2928 = vmatpush1.msra.mxu0 0.0
        %2929 = vmatprep.subr.mxu0 0.0
        %2930 = vmatpush1.msra.mxu0 0.0
        %2931 = vmatprep.subr.mxu0 0.0
        %2932 = vmatpush1.msra.mxu0 0.0
        %2933 = vmatprep.subr.mxu0 0.0
        %2934 = vmatpush1.msra.mxu0 0.0
        %2935 = vmatprep.subr.mxu0 0.0
        %2936 = vmatpush1.msra.mxu0 0.0
        %2937 = vmatprep.subr.mxu0 0.0
        %2938 = vmatpush1.msra.mxu0 %v2905
        %2939 = vmatprep.subr.mxu0 0.0
        %2940 = vmatpush2.msra.mxu0 0.0
        %2941 = vmatprep.subr.mxu0 0.0
        %2942 = vmatpush2.msra.mxu0 0.0
        %2943 = vmatprep.subr.mxu0 0.0
        %2944 = vmatpush2.msra.mxu0 0.0
        %2945 = vmatprep.subr.mxu0 0.0
        %2946 = vmatpush2.msra.mxu0 0.0
        %2947 = vmatprep.subr.mxu0 0.0
        %2948 = vmatpush2.msra.mxu0 0.0
        %2949 = vmatprep.subr.mxu0 0.0
        %2950 = vmatpush2.msra.mxu0 0.0
        %2951 = vmatprep.subr.mxu0 0.0
        %2952 = vmatpush2.msra.mxu0 0.0
        %2953 = vmatprep.subr.mxu0 0.0
        %2954 = vmatpush2.msra.mxu0 0.0
        %2955 = vmatprep.subr.mxu0 0.0
        %2956 = vmatpush2.msra.mxu0 0.0
        %2957 = vmatprep.subr.mxu0 0.0
        %2958 = vmatpush2.msra.mxu0 0.0
        %2959 = vmatprep.subr.mxu0 0.0
        %2960 = vmatpush2.msra.mxu0 0.0
        %2961 = vmatprep.subr.mxu0 0.0
        %2962 = vmatpush2.msra.mxu0 0.0
        %2963 = vmatprep.subr.mxu0 0.0
        %2964 = vmatpush2.msra.mxu0 0.0
        %2965 = vmatprep.subr.mxu0 0.0
        %2966 = vmatpush2.msra.mxu0 0.0
        %2967 = vmatprep.subr.mxu0 0.0
        %2968 = vmatpush2.msra.mxu0 0.0
        %2969 = vmatprep.subr.mxu0 0.0
        %2970 = vmatpush2.msra.mxu0 0.0
        %2971 = vmatprep.mubr.f32.mxu0 0.0
        %2972 = vmatmul.mubr.f32.gmra.mxu0 %v2797
        %v2973 = vpop.f32.mrf.mxu0
        %v2974 = vadd.f32 0.0, %v2973
        %v2975 = vpop.f32.mrf.mxu0
        %2976 = vmatprep.mubr.f32.mxu0 0.0
        %2977 = vmatmul.mubr.f32.gmra.mxu0 %v2800
        %v2978 = vpop.f32.mrf.mxu0
        %v2979 = vadd.f32 0.0, %v2978
        %v2980 = vpop.f32.mrf.mxu0
        %2981 = vmatprep.mubr.f32.mxu0 0.0
        %2982 = vmatmul.mubr.f32.gmra.mxu0 %v2803
        %v2983 = vpop.f32.mrf.mxu0
        %v2984 = vadd.f32 0.0, %v2983
        %v2985 = vpop.f32.mrf.mxu0
        %2986 = vmatprep.mubr.f32.mxu0 0.0
        %2987 = vmatmul.mubr.f32.gmra.mxu0 %v2806
        %v2988 = vpop.f32.mrf.mxu0
        %v2989 = vadd.f32 0.0, %v2988
        %v2990 = vpop.f32.mrf.mxu0
        %2991 = vmatprep.mubr.f32.mxu0 0.0
        %2992 = vmatmul.mubr.f32.gmra.mxu0 %v2809
        %v2993 = vpop.f32.mrf.mxu0
        %v2994 = vadd.f32 0.0, %v2993
        %v2995 = vpop.f32.mrf.mxu0
        %2996 = vmatprep.mubr.f32.mxu0 0.0
        %2997 = vmatmul.mubr.f32.gmra.mxu0 %v2812
        %v2998 = vpop.f32.mrf.mxu0
        %v2999 = vadd.f32 0.0, %v2998
        %v3000 = vpop.f32.mrf.mxu0
        %3001 = vmatprep.mubr.f32.mxu0 0.0
        %3002 = vmatmul.mubr.f32.gmra.mxu0 %v2815
        %v3003 = vpop.f32.mrf.mxu0
        %v3004 = vadd.f32 0.0, %v3003
        %v3005 = vpop.f32.mrf.mxu0
        %3006 = vmatprep.mubr.f32.mxu0 0.0
        %3007 = vmatmul.mubr.f32.gmra.mxu0 %v2818
        %v3008 = vpop.f32.mrf.mxu0
        %v3009 = vadd.f32 0.0, %v3008
        %v3010 = vpop.f32.mrf.mxu0
        %3011 = vmatprep.mubr.f32.mxu0 0.0
        %3012 = vmatmul.mubr.f32.gmra.mxu0 %v2821
        %v3013 = vpop.f32.mrf.mxu0
        %v3014 = vadd.f32 0.0, %v3013
        %v3015 = vpop.f32.mrf.mxu0
        %3016 = vmatprep.mubr.f32.mxu0 0.0
        %3017 = vmatmul.mubr.f32.gmra.mxu0 %v2824
        %v3018 = vpop.f32.mrf.mxu0
        %v3019 = vadd.f32 0.0, %v3018
        %v3020 = vpop.f32.mrf.mxu0
        %3021 = vmatprep.mubr.f32.mxu0 0.0
        %3022 = vmatmul.mubr.f32.gmra.mxu0 %v2827
        %v3023 = vpop.f32.mrf.mxu0
        %v3024 = vadd.f32 0.0, %v3023
        %v3025 = vpop.f32.mrf.mxu0
        %3026 = vmatprep.mubr.f32.mxu0 0.0
        %3027 = vmatmul.mubr.f32.gmra.mxu0 %v2830
        %v3028 = vpop.f32.mrf.mxu0
        %v3029 = vadd.f32 0.0, %v3028
        %v3030 = vpop.f32.mrf.mxu0
        %3031 = vmatprep.mubr.f32.mxu0 0.0
        %3032 = vmatmul.mubr.f32.gmra.mxu0 %v2833
        %v3033 = vpop.f32.mrf.mxu0
        %v3034 = vadd.f32 0.0, %v3033
        %v3035 = vpop.f32.mrf.mxu0
        %3036 = vmatprep.mubr.f32.mxu0 0.0
        %3037 = vmatmul.mubr.f32.gmra.mxu0 %v2836
        %v3038 = vpop.f32.mrf.mxu0
        %v3039 = vadd.f32 0.0, %v3038
        %v3040 = vpop.f32.mrf.mxu0
        %3041 = vmatprep.mubr.f32.mxu0 0.0
        %3042 = vmatmul.mubr.f32.gmra.mxu0 %v2839
        %v3043 = vpop.f32.mrf.mxu0
        %v3044 = vadd.f32 0.0, %v3043
        %v3045 = vpop.f32.mrf.mxu0
        %3046 = vmatprep.mubr.f32.mxu0 0.0
        %3047 = vmatmul.mubr.f32.gmra.mxu0 %v2842
        %v3048 = vpop.f32.mrf.mxu0
        %v3049 = vadd.f32 0.0, %v3048
        %v3050 = vpop.f32.mrf.mxu0
        %3051 = vmatprep.mubr.f32.mxu0 0.0
        %3052 = vmatmul.mubr.f32.gmra.mxu0 %v2845
        %v3053 = vpop.f32.mrf.mxu0
        %v3054 = vadd.f32 0.0, %v3053
        %v3055 = vpop.f32.mrf.mxu0
        %3056 = vmatprep.mubr.f32.mxu0 0.0
        %3057 = vmatmul.mubr.f32.gmra.mxu0 %v2848
        %v3058 = vpop.f32.mrf.mxu0
        %v3059 = vadd.f32 0.0, %v3058
        %v3060 = vpop.f32.mrf.mxu0
        %3061 = vmatprep.mubr.f32.mxu0 0.0
        %3062 = vmatmul.mubr.f32.gmra.mxu0 %v2851
        %v3063 = vpop.f32.mrf.mxu0
        %v3064 = vadd.f32 0.0, %v3063
        %v3065 = vpop.f32.mrf.mxu0
        %3066 = vmatprep.mubr.f32.mxu0 0.0
        %3067 = vmatmul.mubr.f32.gmra.mxu0 %v2854
        %v3068 = vpop.f32.mrf.mxu0
        %v3069 = vadd.f32 0.0, %v3068
        %v3070 = vpop.f32.mrf.mxu0
        %3071 = vmatprep.mubr.f32.mxu0 0.0
        %3072 = vmatmul.mubr.f32.gmra.mxu0 %v2857
        %v3073 = vpop.f32.mrf.mxu0
        %v3074 = vadd.f32 0.0, %v3073
        %v3075 = vpop.f32.mrf.mxu0
        %3076 = vmatprep.mubr.f32.mxu0 0.0
        %3077 = vmatmul.mubr.f32.gmra.mxu0 %v2860
        %v3078 = vpop.f32.mrf.mxu0
        %v3079 = vadd.f32 0.0, %v3078
        %v3080 = vpop.f32.mrf.mxu0
        %3081 = vmatprep.mubr.f32.mxu0 0.0
        %3082 = vmatmul.mubr.f32.gmra.mxu0 %v2863
        %v3083 = vpop.f32.mrf.mxu0
        %v3084 = vadd.f32 0.0, %v3083
        %v3085 = vpop.f32.mrf.mxu0
        %3086 = vmatprep.mubr.f32.mxu0 0.0
        %3087 = vmatmul.mubr.f32.gmra.mxu0 %v2866
        %v3088 = vpop.f32.mrf.mxu0
        %v3089 = vadd.f32 0.0, %v3088
        %v3090 = vpop.f32.mrf.mxu0
        %3091 = vmatprep.mubr.f32.mxu0 0.0
        %3092 = vmatmul.mubr.f32.gmra.mxu0 %v2869
        %v3093 = vpop.f32.mrf.mxu0
        %v3094 = vadd.f32 0.0, %v3093
        %v3095 = vpop.f32.mrf.mxu0
        %3096 = vmatprep.mubr.f32.mxu0 0.0
        %3097 = vmatmul.mubr.f32.gmra.mxu0 %v2872
        %v3098 = vpop.f32.mrf.mxu0
        %v3099 = vadd.f32 0.0, %v3098
        %v3100 = vpop.f32.mrf.mxu0
        %3101 = vmatprep.mubr.f32.mxu0 0.0
        %3102 = vmatmul.mubr.f32.gmra.mxu0 %v2875
        %v3103 = vpop.f32.mrf.mxu0
        %v3104 = vadd.f32 0.0, %v3103
        %v3105 = vpop.f32.mrf.mxu0
        %3106 = vmatprep.mubr.f32.mxu0 0.0
        %3107 = vmatmul.mubr.f32.gmra.mxu0 %v2878
        %v3108 = vpop.f32.mrf.mxu0
        %v3109 = vadd.f32 0.0, %v3108
        %v3110 = vpop.f32.mrf.mxu0
        %3111 = vmatprep.mubr.f32.mxu0 0.0
        %3112 = vmatmul.mubr.f32.gmra.mxu0 %v2881
        %v3113 = vpop.f32.mrf.mxu0
        %v3114 = vadd.f32 0.0, %v3113
        %v3115 = vpop.f32.mrf.mxu0
        %3116 = vmatprep.mubr.f32.mxu0 0.0
        %3117 = vmatmul.mubr.f32.gmra.mxu0 %v2884
        %v3118 = vpop.f32.mrf.mxu0
        %v3119 = vadd.f32 0.0, %v3118
        %v3120 = vpop.f32.mrf.mxu0
        %3121 = vmatprep.mubr.f32.mxu0 0.0
        %3122 = vmatmul.mubr.f32.gmra.mxu0 %v2887
        %v3123 = vpop.f32.mrf.mxu0
        %v3124 = vadd.f32 0.0, %v3123
        %v3125 = vpop.f32.mrf.mxu0
        %3126 = vmatprep.mubr.f32.mxu0 0.0
        %3127 = vmatmul.mubr.f32.gmra.mxu0 %v2890
        %v3128 = vpop.f32.mrf.mxu0
        %v3129 = vadd.f32 0.0, %v3128
        %v3130 = vpop.f32.mrf.mxu0
        %3131 = vmatprep.mubr.f32.mxu0 0.0
        %3132 = vmatmul.mubr.f32.gmra.mxu0 %v2893
        %v3133 = vpop.f32.mrf.mxu0
        %v3134 = vadd.f32 0.0, %v3133
        %v3135 = vpop.f32.mrf.mxu0
        %3136 = vmatprep.mubr.f32.mxu0 0.0
        %3137 = vmatmul.mubr.f32.gmra.mxu0 %v2896
        %v3138 = vpop.f32.mrf.mxu0
        %v3139 = vadd.f32 0.0, %v3138
        %v3140 = vpop.f32.mrf.mxu0
        %3141 = vmatprep.mubr.f32.mxu0 0.0
        %3142 = vmatmul.mubr.f32.gmra.mxu0 %v2899
        %v3143 = vpop.f32.mrf.mxu0
        %v3144 = vadd.f32 0.0, %v3143
        %v3145 = vpop.f32.mrf.mxu0
        %3146 = vmatprep.mubr.f32.mxu0 0.0
        %3147 = vmatmul.mubr.f32.gmra.mxu0 %v2902
        %v3148 = vpop.f32.mrf.mxu0
        %v3149 = vadd.f32 0.0, %v3148
        %v3150 = vpop.f32.mrf.mxu0
        %3151 = vdwg.mxu0
        %v3152 = vadd.f32 %v2722, %v2974
        %v3153 = vadd.f32 %v2723, %v2979
        %v3154 = vadd.f32 %v2724, %v2984
        %v3155 = vadd.f32 %v2725, %v2989
        %v3156 = vadd.f32 %v2726, %v2994
        %v3157 = vadd.f32 %v2727, %v2999
        %v3158 = vadd.f32 %v2728, %v3004
        %v3159 = vadd.f32 %v2729, %v3009
        %v3160 = vadd.f32 %v2730, %v3014
        %v3161 = vadd.f32 %v2731, %v3019
        %v3162 = vadd.f32 %v2732, %v3024
        %v3163 = vadd.f32 %v2733, %v3029
        %v3164 = vadd.f32 %v2734, %v3034
        %v3165 = vadd.f32 %v2735, %v3039
        %v3166 = vadd.f32 %v2736, %v3044
        %v3167 = vadd.f32 %v2737, %v3049
        %v3168 = vadd.f32 %v2738, %v3054
        %v3169 = vadd.f32 %v2739, %v3059
        %v3170 = vadd.f32 %v2740, %v3064
        %v3171 = vadd.f32 %v2741, %v3069
        %v3172 = vadd.f32 %v2742, %v3074
        %v3173 = vadd.f32 %v2743, %v3079
        %v3174 = vadd.f32 %v2744, %v3084
        %v3175 = vadd.f32 %v2745, %v3089
        %v3176 = vadd.f32 %v2746, %v3094
        %v3177 = vadd.f32 %v2747, %v3099
        %v3178 = vadd.f32 %v2748, %v3104
        %v3179 = vadd.f32 %v2749, %v3109
        %v3180 = vadd.f32 %v2750, %v3114
        %v3181 = vadd.f32 %v2751, %v3119
        %v3182 = vadd.f32 %v2752, %v3124
        %v3183 = vadd.f32 %v2753, %v3129
        %v3184 = vadd.f32 %v2754, %v3134
        %v3185 = vadd.f32 %v2755, %v3139
        %v3186 = vadd.f32 %v2756, %v3144
        %v3187 = vadd.f32 %v2757, %v3149
        %v3188 = vld [vmem:[%s248 + $0x25] sm:$0xff]
        %v3189 = vld [vmem:[%s248 + $0x2d] sm:$0xff]
        %v3190 = vld [vmem:[%s248 + $0x35] sm:$0xff]
        %v3191 = vld [vmem:[%s248 + $0x3d] sm:$0xff]
        %v3192 = vld [vmem:[%s248 + $0x45] sm:$0xff]
        %v3193 = vld [vmem:[%s248 + $0x4d] sm:$0xff]
        %v3194 = vld [vmem:[%s248 + $0x55] sm:$0xff]
        %v3195 = vld [vmem:[%s248 + $0x5d] sm:$0xff]
        %v3196 = vld [vmem:[%s248 + $0x65] sm:$0xff]
        %v3197 = vld [vmem:[%s248 + $0x6d] sm:$0xff]
        %v3198 = vld [vmem:[%s248 + $0x75] sm:$0xff]
        %v3199 = vld [vmem:[%s248 + $0x7d] sm:$0xff]
        %v3200 = vld [vmem:[%s248 + $0x85] sm:$0xff]
        %v3201 = vld [vmem:[%s248 + $0x8d] sm:$0xff]
        %v3202 = vld [vmem:[%s248 + $0x95] sm:$0xff]
        %v3203 = vld [vmem:[%s248 + $0x9d] sm:$0xff]
        %v3204 = vld [vmem:[%s248 + $0xa5] sm:$0xff]
        %v3205 = vld [vmem:[%s248 + $0xad] sm:$0xff]
        %v3206 = vld [vmem:[%s248 + $0xb5] sm:$0xff]
        %v3207 = vld [vmem:[%s248 + $0xbd] sm:$0xff]
        %v3208 = vld [vmem:[%s248 + $0xc5] sm:$0xff]
        %v3209 = vld [vmem:[%s248 + $0xcd] sm:$0xff]
        %v3210 = vld [vmem:[%s248 + $0xd5] sm:$0xff]
        %v3211 = vld [vmem:[%s248 + $0xdd] sm:$0xff]
        %v3212 = vld [vmem:[%s248 + $0xe5] sm:$0xff]
        %v3213 = vld [vmem:[%s248 + $0xed] sm:$0xff]
        %v3214 = vld [vmem:[%s248 + $0xf5] sm:$0xff]
        %v3215 = vld [vmem:[%s248 + $0xfd] sm:$0xff]
        %v3216 = vld [vmem:[%s248 + $0x105] sm:$0xff]
        %v3217 = vld [vmem:[%s248 + $0x10d] sm:$0xff]
        %v3218 = vld [vmem:[%s248 + $0x115] sm:$0xff]
        %v3219 = vld [vmem:[%s248 + $0x11d] sm:$0xff]
        %v3220 = vld [vmem:[%s248 + $0x125] sm:$0xff]
        %v3221 = vld [vmem:[%s248 + $0x12d] sm:$0xff]
        %v3222 = vld [vmem:[%s248 + $0x135] sm:$0xff]
        %v3223 = vld [vmem:[%s248 + $0x13d] sm:$0xff]
        %s3224 = scalar_lea.vmem %s1, 28
        %v3225 = vld [vmem:[%s3224] sm:$0x7]
        %v3227 = vsel %vm324, %v3188, 0
        %v3230 = vsel %vm324, %v3189, 0
        %v3233 = vsel %vm324, %v3190, 0
        %v3236 = vsel %vm324, %v3191, 0
        %v3239 = vsel %vm324, %v3192, 0
        %v3242 = vsel %vm324, %v3193, 0
        %v3245 = vsel %vm324, %v3194, 0
        %v3248 = vsel %vm324, %v3195, 0
        %v3251 = vsel %vm324, %v3196, 0
        %v3254 = vsel %vm324, %v3197, 0
        %v3257 = vsel %vm324, %v3198, 0
        %v3260 = vsel %vm324, %v3199, 0
        %v3263 = vsel %vm324, %v3200, 0
        %v3266 = vsel %vm324, %v3201, 0
        %v3269 = vsel %vm324, %v3202, 0
        %v3272 = vsel %vm324, %v3203, 0
        %v3275 = vsel %vm324, %v3204, 0
        %v3278 = vsel %vm324, %v3205, 0
        %v3281 = vsel %vm324, %v3206, 0
        %v3284 = vsel %vm324, %v3207, 0
        %v3287 = vsel %vm324, %v3208, 0
        %v3290 = vsel %vm324, %v3209, 0
        %v3293 = vsel %vm324, %v3210, 0
        %v3296 = vsel %vm324, %v3211, 0
        %v3299 = vsel %vm324, %v3212, 0
        %v3302 = vsel %vm324, %v3213, 0
        %v3305 = vsel %vm324, %v3214, 0
        %v3308 = vsel %vm324, %v3215, 0
        %v3311 = vsel %vm324, %v3216, 0
        %v3314 = vsel %vm324, %v3217, 0
        %v3317 = vsel %vm324, %v3218, 0
        %v3320 = vsel %vm324, %v3219, 0
        %v3323 = vsel %vm324, %v3220, 0
        %v3326 = vsel %vm324, %v3221, 0
        %v3329 = vsel %vm324, %v3222, 0
        %v3332 = vsel %vm324, %v3223, 0
        %v3335 = vsel %vm433, %v3225, 0
        %3337 = vmatprep.subr.mxu0 0.0
        %3338 = vmatpush1.msra.mxu0 0.0
        %3339 = vmatprep.subr.mxu0 0.0
        %3340 = vmatpush1.msra.mxu0 0.0
        %3341 = vmatprep.subr.mxu0 0.0
        %3342 = vmatpush1.msra.mxu0 0.0
        %3343 = vmatprep.subr.mxu0 0.0
        %3344 = vmatpush1.msra.mxu0 0.0
        %3345 = vmatprep.subr.mxu0 0.0
        %3346 = vmatpush1.msra.mxu0 0.0
        %3347 = vmatprep.subr.mxu0 0.0
        %3348 = vmatpush1.msra.mxu0 0.0
        %3349 = vmatprep.subr.mxu0 0.0
        %3350 = vmatpush1.msra.mxu0 0.0
        %3351 = vmatprep.subr.mxu0 0.0
        %3352 = vmatpush1.msra.mxu0 0.0
        %3353 = vmatprep.subr.mxu0 0.0
        %3354 = vmatpush1.msra.mxu0 0.0
        %3355 = vmatprep.subr.mxu0 0.0
        %3356 = vmatpush1.msra.mxu0 0.0
        %3357 = vmatprep.subr.mxu0 0.0
        %3358 = vmatpush1.msra.mxu0 0.0
        %3359 = vmatprep.subr.mxu0 0.0
        %3360 = vmatpush1.msra.mxu0 0.0
        %3361 = vmatprep.subr.mxu0 0.0
        %3362 = vmatpush1.msra.mxu0 0.0
        %3363 = vmatprep.subr.mxu0 0.0
        %3364 = vmatpush1.msra.mxu0 0.0
        %3365 = vmatprep.subr.mxu0 0.0
        %3366 = vmatpush1.msra.mxu0 0.0
        %3367 = vmatprep.subr.mxu0 0.0
        %3368 = vmatpush1.msra.mxu0 %v3335
        %3369 = vmatprep.subr.mxu0 0.0
        %3370 = vmatpush2.msra.mxu0 0.0
        %3371 = vmatprep.subr.mxu0 0.0
        %3372 = vmatpush2.msra.mxu0 0.0
        %3373 = vmatprep.subr.mxu0 0.0
        %3374 = vmatpush2.msra.mxu0 0.0
        %3375 = vmatprep.subr.mxu0 0.0
        %3376 = vmatpush2.msra.mxu0 0.0
        %3377 = vmatprep.subr.mxu0 0.0
        %3378 = vmatpush2.msra.mxu0 0.0
        %3379 = vmatprep.subr.mxu0 0.0
        %3380 = vmatpush2.msra.mxu0 0.0
        %3381 = vmatprep.subr.mxu0 0.0
        %3382 = vmatpush2.msra.mxu0 0.0
        %3383 = vmatprep.subr.mxu0 0.0
        %3384 = vmatpush2.msra.mxu0 0.0
        %3385 = vmatprep.subr.mxu0 0.0
        %3386 = vmatpush2.msra.mxu0 0.0
        %3387 = vmatprep.subr.mxu0 0.0
        %3388 = vmatpush2.msra.mxu0 0.0
        %3389 = vmatprep.subr.mxu0 0.0
        %3390 = vmatpush2.msra.mxu0 0.0
        %3391 = vmatprep.subr.mxu0 0.0
        %3392 = vmatpush2.msra.mxu0 0.0
        %3393 = vmatprep.subr.mxu0 0.0
        %3394 = vmatpush2.msra.mxu0 0.0
        %3395 = vmatprep.subr.mxu0 0.0
        %3396 = vmatpush2.msra.mxu0 0.0
        %3397 = vmatprep.subr.mxu0 0.0
        %3398 = vmatpush2.msra.mxu0 0.0
        %3399 = vmatprep.subr.mxu0 0.0
        %3400 = vmatpush2.msra.mxu0 0.0
        %3401 = vmatprep.mubr.f32.mxu0 0.0
        %3402 = vmatmul.mubr.f32.gmra.mxu0 %v3227
        %v3403 = vpop.f32.mrf.mxu0
        %v3404 = vadd.f32 0.0, %v3403
        %v3405 = vpop.f32.mrf.mxu0
        %3406 = vmatprep.mubr.f32.mxu0 0.0
        %3407 = vmatmul.mubr.f32.gmra.mxu0 %v3230
        %v3408 = vpop.f32.mrf.mxu0
        %v3409 = vadd.f32 0.0, %v3408
        %v3410 = vpop.f32.mrf.mxu0
        %3411 = vmatprep.mubr.f32.mxu0 0.0
        %3412 = vmatmul.mubr.f32.gmra.mxu0 %v3233
        %v3413 = vpop.f32.mrf.mxu0
        %v3414 = vadd.f32 0.0, %v3413
        %v3415 = vpop.f32.mrf.mxu0
        %3416 = vmatprep.mubr.f32.mxu0 0.0
        %3417 = vmatmul.mubr.f32.gmra.mxu0 %v3236
        %v3418 = vpop.f32.mrf.mxu0
        %v3419 = vadd.f32 0.0, %v3418
        %v3420 = vpop.f32.mrf.mxu0
        %3421 = vmatprep.mubr.f32.mxu0 0.0
        %3422 = vmatmul.mubr.f32.gmra.mxu0 %v3239
        %v3423 = vpop.f32.mrf.mxu0
        %v3424 = vadd.f32 0.0, %v3423
        %v3425 = vpop.f32.mrf.mxu0
        %3426 = vmatprep.mubr.f32.mxu0 0.0
        %3427 = vmatmul.mubr.f32.gmra.mxu0 %v3242
        %v3428 = vpop.f32.mrf.mxu0
        %v3429 = vadd.f32 0.0, %v3428
        %v3430 = vpop.f32.mrf.mxu0
        %3431 = vmatprep.mubr.f32.mxu0 0.0
        %3432 = vmatmul.mubr.f32.gmra.mxu0 %v3245
        %v3433 = vpop.f32.mrf.mxu0
        %v3434 = vadd.f32 0.0, %v3433
        %v3435 = vpop.f32.mrf.mxu0
        %3436 = vmatprep.mubr.f32.mxu0 0.0
        %3437 = vmatmul.mubr.f32.gmra.mxu0 %v3248
        %v3438 = vpop.f32.mrf.mxu0
        %v3439 = vadd.f32 0.0, %v3438
        %v3440 = vpop.f32.mrf.mxu0
        %3441 = vmatprep.mubr.f32.mxu0 0.0
        %3442 = vmatmul.mubr.f32.gmra.mxu0 %v3251
        %v3443 = vpop.f32.mrf.mxu0
        %v3444 = vadd.f32 0.0, %v3443
        %v3445 = vpop.f32.mrf.mxu0
        %3446 = vmatprep.mubr.f32.mxu0 0.0
        %3447 = vmatmul.mubr.f32.gmra.mxu0 %v3254
        %v3448 = vpop.f32.mrf.mxu0
        %v3449 = vadd.f32 0.0, %v3448
        %v3450 = vpop.f32.mrf.mxu0
        %3451 = vmatprep.mubr.f32.mxu0 0.0
        %3452 = vmatmul.mubr.f32.gmra.mxu0 %v3257
        %v3453 = vpop.f32.mrf.mxu0
        %v3454 = vadd.f32 0.0, %v3453
        %v3455 = vpop.f32.mrf.mxu0
        %3456 = vmatprep.mubr.f32.mxu0 0.0
        %3457 = vmatmul.mubr.f32.gmra.mxu0 %v3260
        %v3458 = vpop.f32.mrf.mxu0
        %v3459 = vadd.f32 0.0, %v3458
        %v3460 = vpop.f32.mrf.mxu0
        %3461 = vmatprep.mubr.f32.mxu0 0.0
        %3462 = vmatmul.mubr.f32.gmra.mxu0 %v3263
        %v3463 = vpop.f32.mrf.mxu0
        %v3464 = vadd.f32 0.0, %v3463
        %v3465 = vpop.f32.mrf.mxu0
        %3466 = vmatprep.mubr.f32.mxu0 0.0
        %3467 = vmatmul.mubr.f32.gmra.mxu0 %v3266
        %v3468 = vpop.f32.mrf.mxu0
        %v3469 = vadd.f32 0.0, %v3468
        %v3470 = vpop.f32.mrf.mxu0
        %3471 = vmatprep.mubr.f32.mxu0 0.0
        %3472 = vmatmul.mubr.f32.gmra.mxu0 %v3269
        %v3473 = vpop.f32.mrf.mxu0
        %v3474 = vadd.f32 0.0, %v3473
        %v3475 = vpop.f32.mrf.mxu0
        %3476 = vmatprep.mubr.f32.mxu0 0.0
        %3477 = vmatmul.mubr.f32.gmra.mxu0 %v3272
        %v3478 = vpop.f32.mrf.mxu0
        %v3479 = vadd.f32 0.0, %v3478
        %v3480 = vpop.f32.mrf.mxu0
        %3481 = vmatprep.mubr.f32.mxu0 0.0
        %3482 = vmatmul.mubr.f32.gmra.mxu0 %v3275
        %v3483 = vpop.f32.mrf.mxu0
        %v3484 = vadd.f32 0.0, %v3483
        %v3485 = vpop.f32.mrf.mxu0
        %3486 = vmatprep.mubr.f32.mxu0 0.0
        %3487 = vmatmul.mubr.f32.gmra.mxu0 %v3278
        %v3488 = vpop.f32.mrf.mxu0
        %v3489 = vadd.f32 0.0, %v3488
        %v3490 = vpop.f32.mrf.mxu0
        %3491 = vmatprep.mubr.f32.mxu0 0.0
        %3492 = vmatmul.mubr.f32.gmra.mxu0 %v3281
        %v3493 = vpop.f32.mrf.mxu0
        %v3494 = vadd.f32 0.0, %v3493
        %v3495 = vpop.f32.mrf.mxu0
        %3496 = vmatprep.mubr.f32.mxu0 0.0
        %3497 = vmatmul.mubr.f32.gmra.mxu0 %v3284
        %v3498 = vpop.f32.mrf.mxu0
        %v3499 = vadd.f32 0.0, %v3498
        %v3500 = vpop.f32.mrf.mxu0
        %3501 = vmatprep.mubr.f32.mxu0 0.0
        %3502 = vmatmul.mubr.f32.gmra.mxu0 %v3287
        %v3503 = vpop.f32.mrf.mxu0
        %v3504 = vadd.f32 0.0, %v3503
        %v3505 = vpop.f32.mrf.mxu0
        %3506 = vmatprep.mubr.f32.mxu0 0.0
        %3507 = vmatmul.mubr.f32.gmra.mxu0 %v3290
        %v3508 = vpop.f32.mrf.mxu0
        %v3509 = vadd.f32 0.0, %v3508
        %v3510 = vpop.f32.mrf.mxu0
        %3511 = vmatprep.mubr.f32.mxu0 0.0
        %3512 = vmatmul.mubr.f32.gmra.mxu0 %v3293
        %v3513 = vpop.f32.mrf.mxu0
        %v3514 = vadd.f32 0.0, %v3513
        %v3515 = vpop.f32.mrf.mxu0
        %3516 = vmatprep.mubr.f32.mxu0 0.0
        %3517 = vmatmul.mubr.f32.gmra.mxu0 %v3296
        %v3518 = vpop.f32.mrf.mxu0
        %v3519 = vadd.f32 0.0, %v3518
        %v3520 = vpop.f32.mrf.mxu0
        %3521 = vmatprep.mubr.f32.mxu0 0.0
        %3522 = vmatmul.mubr.f32.gmra.mxu0 %v3299
        %v3523 = vpop.f32.mrf.mxu0
        %v3524 = vadd.f32 0.0, %v3523
        %v3525 = vpop.f32.mrf.mxu0
        %3526 = vmatprep.mubr.f32.mxu0 0.0
        %3527 = vmatmul.mubr.f32.gmra.mxu0 %v3302
        %v3528 = vpop.f32.mrf.mxu0
        %v3529 = vadd.f32 0.0, %v3528
        %v3530 = vpop.f32.mrf.mxu0
        %3531 = vmatprep.mubr.f32.mxu0 0.0
        %3532 = vmatmul.mubr.f32.gmra.mxu0 %v3305
        %v3533 = vpop.f32.mrf.mxu0
        %v3534 = vadd.f32 0.0, %v3533
        %v3535 = vpop.f32.mrf.mxu0
        %3536 = vmatprep.mubr.f32.mxu0 0.0
        %3537 = vmatmul.mubr.f32.gmra.mxu0 %v3308
        %v3538 = vpop.f32.mrf.mxu0
        %v3539 = vadd.f32 0.0, %v3538
        %v3540 = vpop.f32.mrf.mxu0
        %3541 = vmatprep.mubr.f32.mxu0 0.0
        %3542 = vmatmul.mubr.f32.gmra.mxu0 %v3311
        %v3543 = vpop.f32.mrf.mxu0
        %v3544 = vadd.f32 0.0, %v3543
        %v3545 = vpop.f32.mrf.mxu0
        %3546 = vmatprep.mubr.f32.mxu0 0.0
        %3547 = vmatmul.mubr.f32.gmra.mxu0 %v3314
        %v3548 = vpop.f32.mrf.mxu0
        %v3549 = vadd.f32 0.0, %v3548
        %v3550 = vpop.f32.mrf.mxu0
        %3551 = vmatprep.mubr.f32.mxu0 0.0
        %3552 = vmatmul.mubr.f32.gmra.mxu0 %v3317
        %v3553 = vpop.f32.mrf.mxu0
        %v3554 = vadd.f32 0.0, %v3553
        %v3555 = vpop.f32.mrf.mxu0
        %3556 = vmatprep.mubr.f32.mxu0 0.0
        %3557 = vmatmul.mubr.f32.gmra.mxu0 %v3320
        %v3558 = vpop.f32.mrf.mxu0
        %v3559 = vadd.f32 0.0, %v3558
        %v3560 = vpop.f32.mrf.mxu0
        %3561 = vmatprep.mubr.f32.mxu0 0.0
        %3562 = vmatmul.mubr.f32.gmra.mxu0 %v3323
        %v3563 = vpop.f32.mrf.mxu0
        %v3564 = vadd.f32 0.0, %v3563
        %v3565 = vpop.f32.mrf.mxu0
        %3566 = vmatprep.mubr.f32.mxu0 0.0
        %3567 = vmatmul.mubr.f32.gmra.mxu0 %v3326
        %v3568 = vpop.f32.mrf.mxu0
        %v3569 = vadd.f32 0.0, %v3568
        %v3570 = vpop.f32.mrf.mxu0
        %3571 = vmatprep.mubr.f32.mxu0 0.0
        %3572 = vmatmul.mubr.f32.gmra.mxu0 %v3329
        %v3573 = vpop.f32.mrf.mxu0
        %v3574 = vadd.f32 0.0, %v3573
        %v3575 = vpop.f32.mrf.mxu0
        %3576 = vmatprep.mubr.f32.mxu0 0.0
        %3577 = vmatmul.mubr.f32.gmra.mxu0 %v3332
        %v3578 = vpop.f32.mrf.mxu0
        %v3579 = vadd.f32 0.0, %v3578
        %v3580 = vpop.f32.mrf.mxu0
        %3581 = vdwg.mxu0
        %v3582 = vadd.f32 %v3152, %v3404
        %v3583 = vadd.f32 %v3153, %v3409
        %v3584 = vadd.f32 %v3154, %v3414
        %v3585 = vadd.f32 %v3155, %v3419
        %v3586 = vadd.f32 %v3156, %v3424
        %v3587 = vadd.f32 %v3157, %v3429
        %v3588 = vadd.f32 %v3158, %v3434
        %v3589 = vadd.f32 %v3159, %v3439
        %v3590 = vadd.f32 %v3160, %v3444
        %v3591 = vadd.f32 %v3161, %v3449
        %v3592 = vadd.f32 %v3162, %v3454
        %v3593 = vadd.f32 %v3163, %v3459
        %v3594 = vadd.f32 %v3164, %v3464
        %v3595 = vadd.f32 %v3165, %v3469
        %v3596 = vadd.f32 %v3166, %v3474
        %v3597 = vadd.f32 %v3167, %v3479
        %v3598 = vadd.f32 %v3168, %v3484
        %v3599 = vadd.f32 %v3169, %v3489
        %v3600 = vadd.f32 %v3170, %v3494
        %v3601 = vadd.f32 %v3171, %v3499
        %v3602 = vadd.f32 %v3172, %v3504
        %v3603 = vadd.f32 %v3173, %v3509
        %v3604 = vadd.f32 %v3174, %v3514
        %v3605 = vadd.f32 %v3175, %v3519
        %v3606 = vadd.f32 %v3176, %v3524
        %v3607 = vadd.f32 %v3177, %v3529
        %v3608 = vadd.f32 %v3178, %v3534
        %v3609 = vadd.f32 %v3179, %v3539
        %v3610 = vadd.f32 %v3180, %v3544
        %v3611 = vadd.f32 %v3181, %v3549
        %v3612 = vadd.f32 %v3182, %v3554
        %v3613 = vadd.f32 %v3183, %v3559
        %v3614 = vadd.f32 %v3184, %v3564
        %v3615 = vadd.f32 %v3185, %v3569
        %v3616 = vadd.f32 %v3186, %v3574
        %v3617 = vadd.f32 %v3187, %v3579
        %v3618 = vld [vmem:[%s248 + $0x26] sm:$0xff]
        %v3619 = vld [vmem:[%s248 + $0x2e] sm:$0xff]
        %v3620 = vld [vmem:[%s248 + $0x36] sm:$0xff]
        %v3621 = vld [vmem:[%s248 + $0x3e] sm:$0xff]
        %v3622 = vld [vmem:[%s248 + $0x46] sm:$0xff]
        %v3623 = vld [vmem:[%s248 + $0x4e] sm:$0xff]
        %v3624 = vld [vmem:[%s248 + $0x56] sm:$0xff]
        %v3625 = vld [vmem:[%s248 + $0x5e] sm:$0xff]
        %v3626 = vld [vmem:[%s248 + $0x66] sm:$0xff]
        %v3627 = vld [vmem:[%s248 + $0x6e] sm:$0xff]
        %v3628 = vld [vmem:[%s248 + $0x76] sm:$0xff]
        %v3629 = vld [vmem:[%s248 + $0x7e] sm:$0xff]
        %v3630 = vld [vmem:[%s248 + $0x86] sm:$0xff]
        %v3631 = vld [vmem:[%s248 + $0x8e] sm:$0xff]
        %v3632 = vld [vmem:[%s248 + $0x96] sm:$0xff]
        %v3633 = vld [vmem:[%s248 + $0x9e] sm:$0xff]
        %v3634 = vld [vmem:[%s248 + $0xa6] sm:$0xff]
        %v3635 = vld [vmem:[%s248 + $0xae] sm:$0xff]
        %v3636 = vld [vmem:[%s248 + $0xb6] sm:$0xff]
        %v3637 = vld [vmem:[%s248 + $0xbe] sm:$0xff]
        %v3638 = vld [vmem:[%s248 + $0xc6] sm:$0xff]
        %v3639 = vld [vmem:[%s248 + $0xce] sm:$0xff]
        %v3640 = vld [vmem:[%s248 + $0xd6] sm:$0xff]
        %v3641 = vld [vmem:[%s248 + $0xde] sm:$0xff]
        %v3642 = vld [vmem:[%s248 + $0xe6] sm:$0xff]
        %v3643 = vld [vmem:[%s248 + $0xee] sm:$0xff]
        %v3644 = vld [vmem:[%s248 + $0xf6] sm:$0xff]
        %v3645 = vld [vmem:[%s248 + $0xfe] sm:$0xff]
        %v3646 = vld [vmem:[%s248 + $0x106] sm:$0xff]
        %v3647 = vld [vmem:[%s248 + $0x10e] sm:$0xff]
        %v3648 = vld [vmem:[%s248 + $0x116] sm:$0xff]
        %v3649 = vld [vmem:[%s248 + $0x11e] sm:$0xff]
        %v3650 = vld [vmem:[%s248 + $0x126] sm:$0xff]
        %v3651 = vld [vmem:[%s248 + $0x12e] sm:$0xff]
        %v3652 = vld [vmem:[%s248 + $0x136] sm:$0xff]
        %v3653 = vld [vmem:[%s248 + $0x13e] sm:$0xff]
        %s3654 = scalar_lea.vmem %s1, 32
        %v3655 = vld [vmem:[%s3654] sm:$0x7]
        %v3657 = vsel %vm324, %v3618, 0
        %v3660 = vsel %vm324, %v3619, 0
        %v3663 = vsel %vm324, %v3620, 0
        %v3666 = vsel %vm324, %v3621, 0
        %v3669 = vsel %vm324, %v3622, 0
        %v3672 = vsel %vm324, %v3623, 0
        %v3675 = vsel %vm324, %v3624, 0
        %v3678 = vsel %vm324, %v3625, 0
        %v3681 = vsel %vm324, %v3626, 0
        %v3684 = vsel %vm324, %v3627, 0
        %v3687 = vsel %vm324, %v3628, 0
        %v3690 = vsel %vm324, %v3629, 0
        %v3693 = vsel %vm324, %v3630, 0
        %v3696 = vsel %vm324, %v3631, 0
        %v3699 = vsel %vm324, %v3632, 0
        %v3702 = vsel %vm324, %v3633, 0
        %v3705 = vsel %vm324, %v3634, 0
        %v3708 = vsel %vm324, %v3635, 0
        %v3711 = vsel %vm324, %v3636, 0
        %v3714 = vsel %vm324, %v3637, 0
        %v3717 = vsel %vm324, %v3638, 0
        %v3720 = vsel %vm324, %v3639, 0
        %v3723 = vsel %vm324, %v3640, 0
        %v3726 = vsel %vm324, %v3641, 0
        %v3729 = vsel %vm324, %v3642, 0
        %v3732 = vsel %vm324, %v3643, 0
        %v3735 = vsel %vm324, %v3644, 0
        %v3738 = vsel %vm324, %v3645, 0
        %v3741 = vsel %vm324, %v3646, 0
        %v3744 = vsel %vm324, %v3647, 0
        %v3747 = vsel %vm324, %v3648, 0
        %v3750 = vsel %vm324, %v3649, 0
        %v3753 = vsel %vm324, %v3650, 0
        %v3756 = vsel %vm324, %v3651, 0
        %v3759 = vsel %vm324, %v3652, 0
        %v3762 = vsel %vm324, %v3653, 0
        %v3765 = vsel %vm433, %v3655, 0
        %3767 = vmatprep.subr.mxu0 0.0
        %3768 = vmatpush1.msra.mxu0 0.0
        %3769 = vmatprep.subr.mxu0 0.0
        %3770 = vmatpush1.msra.mxu0 0.0
        %3771 = vmatprep.subr.mxu0 0.0
        %3772 = vmatpush1.msra.mxu0 0.0
        %3773 = vmatprep.subr.mxu0 0.0
        %3774 = vmatpush1.msra.mxu0 0.0
        %3775 = vmatprep.subr.mxu0 0.0
        %3776 = vmatpush1.msra.mxu0 0.0
        %3777 = vmatprep.subr.mxu0 0.0
        %3778 = vmatpush1.msra.mxu0 0.0
        %3779 = vmatprep.subr.mxu0 0.0
        %3780 = vmatpush1.msra.mxu0 0.0
        %3781 = vmatprep.subr.mxu0 0.0
        %3782 = vmatpush1.msra.mxu0 0.0
        %3783 = vmatprep.subr.mxu0 0.0
        %3784 = vmatpush1.msra.mxu0 0.0
        %3785 = vmatprep.subr.mxu0 0.0
        %3786 = vmatpush1.msra.mxu0 0.0
        %3787 = vmatprep.subr.mxu0 0.0
        %3788 = vmatpush1.msra.mxu0 0.0
        %3789 = vmatprep.subr.mxu0 0.0
        %3790 = vmatpush1.msra.mxu0 0.0
        %3791 = vmatprep.subr.mxu0 0.0
        %3792 = vmatpush1.msra.mxu0 0.0
        %3793 = vmatprep.subr.mxu0 0.0
        %3794 = vmatpush1.msra.mxu0 0.0
        %3795 = vmatprep.subr.mxu0 0.0
        %3796 = vmatpush1.msra.mxu0 0.0
        %3797 = vmatprep.subr.mxu0 0.0
        %3798 = vmatpush1.msra.mxu0 %v3765
        %3799 = vmatprep.subr.mxu0 0.0
        %3800 = vmatpush2.msra.mxu0 0.0
        %3801 = vmatprep.subr.mxu0 0.0
        %3802 = vmatpush2.msra.mxu0 0.0
        %3803 = vmatprep.subr.mxu0 0.0
        %3804 = vmatpush2.msra.mxu0 0.0
        %3805 = vmatprep.subr.mxu0 0.0
        %3806 = vmatpush2.msra.mxu0 0.0
        %3807 = vmatprep.subr.mxu0 0.0
        %3808 = vmatpush2.msra.mxu0 0.0
        %3809 = vmatprep.subr.mxu0 0.0
        %3810 = vmatpush2.msra.mxu0 0.0
        %3811 = vmatprep.subr.mxu0 0.0
        %3812 = vmatpush2.msra.mxu0 0.0
        %3813 = vmatprep.subr.mxu0 0.0
        %3814 = vmatpush2.msra.mxu0 0.0
        %3815 = vmatprep.subr.mxu0 0.0
        %3816 = vmatpush2.msra.mxu0 0.0
        %3817 = vmatprep.subr.mxu0 0.0
        %3818 = vmatpush2.msra.mxu0 0.0
        %3819 = vmatprep.subr.mxu0 0.0
        %3820 = vmatpush2.msra.mxu0 0.0
        %3821 = vmatprep.subr.mxu0 0.0
        %3822 = vmatpush2.msra.mxu0 0.0
        %3823 = vmatprep.subr.mxu0 0.0
        %3824 = vmatpush2.msra.mxu0 0.0
        %3825 = vmatprep.subr.mxu0 0.0
        %3826 = vmatpush2.msra.mxu0 0.0
        %3827 = vmatprep.subr.mxu0 0.0
        %3828 = vmatpush2.msra.mxu0 0.0
        %3829 = vmatprep.subr.mxu0 0.0
        %3830 = vmatpush2.msra.mxu0 0.0
        %3831 = vmatprep.mubr.f32.mxu0 0.0
        %3832 = vmatmul.mubr.f32.gmra.mxu0 %v3657
        %v3833 = vpop.f32.mrf.mxu0
        %v3834 = vadd.f32 0.0, %v3833
        %v3835 = vpop.f32.mrf.mxu0
        %3836 = vmatprep.mubr.f32.mxu0 0.0
        %3837 = vmatmul.mubr.f32.gmra.mxu0 %v3660
        %v3838 = vpop.f32.mrf.mxu0
        %v3839 = vadd.f32 0.0, %v3838
        %v3840 = vpop.f32.mrf.mxu0
        %3841 = vmatprep.mubr.f32.mxu0 0.0
        %3842 = vmatmul.mubr.f32.gmra.mxu0 %v3663
        %v3843 = vpop.f32.mrf.mxu0
        %v3844 = vadd.f32 0.0, %v3843
        %v3845 = vpop.f32.mrf.mxu0
        %3846 = vmatprep.mubr.f32.mxu0 0.0
        %3847 = vmatmul.mubr.f32.gmra.mxu0 %v3666
        %v3848 = vpop.f32.mrf.mxu0
        %v3849 = vadd.f32 0.0, %v3848
        %v3850 = vpop.f32.mrf.mxu0
        %3851 = vmatprep.mubr.f32.mxu0 0.0
        %3852 = vmatmul.mubr.f32.gmra.mxu0 %v3669
        %v3853 = vpop.f32.mrf.mxu0
        %v3854 = vadd.f32 0.0, %v3853
        %v3855 = vpop.f32.mrf.mxu0
        %3856 = vmatprep.mubr.f32.mxu0 0.0
        %3857 = vmatmul.mubr.f32.gmra.mxu0 %v3672
        %v3858 = vpop.f32.mrf.mxu0
        %v3859 = vadd.f32 0.0, %v3858
        %v3860 = vpop.f32.mrf.mxu0
        %3861 = vmatprep.mubr.f32.mxu0 0.0
        %3862 = vmatmul.mubr.f32.gmra.mxu0 %v3675
        %v3863 = vpop.f32.mrf.mxu0
        %v3864 = vadd.f32 0.0, %v3863
        %v3865 = vpop.f32.mrf.mxu0
        %3866 = vmatprep.mubr.f32.mxu0 0.0
        %3867 = vmatmul.mubr.f32.gmra.mxu0 %v3678
        %v3868 = vpop.f32.mrf.mxu0
        %v3869 = vadd.f32 0.0, %v3868
        %v3870 = vpop.f32.mrf.mxu0
        %3871 = vmatprep.mubr.f32.mxu0 0.0
        %3872 = vmatmul.mubr.f32.gmra.mxu0 %v3681
        %v3873 = vpop.f32.mrf.mxu0
        %v3874 = vadd.f32 0.0, %v3873
        %v3875 = vpop.f32.mrf.mxu0
        %3876 = vmatprep.mubr.f32.mxu0 0.0
        %3877 = vmatmul.mubr.f32.gmra.mxu0 %v3684
        %v3878 = vpop.f32.mrf.mxu0
        %v3879 = vadd.f32 0.0, %v3878
        %v3880 = vpop.f32.mrf.mxu0
        %3881 = vmatprep.mubr.f32.mxu0 0.0
        %3882 = vmatmul.mubr.f32.gmra.mxu0 %v3687
        %v3883 = vpop.f32.mrf.mxu0
        %v3884 = vadd.f32 0.0, %v3883
        %v3885 = vpop.f32.mrf.mxu0
        %3886 = vmatprep.mubr.f32.mxu0 0.0
        %3887 = vmatmul.mubr.f32.gmra.mxu0 %v3690
        %v3888 = vpop.f32.mrf.mxu0
        %v3889 = vadd.f32 0.0, %v3888
        %v3890 = vpop.f32.mrf.mxu0
        %3891 = vmatprep.mubr.f32.mxu0 0.0
        %3892 = vmatmul.mubr.f32.gmra.mxu0 %v3693
        %v3893 = vpop.f32.mrf.mxu0
        %v3894 = vadd.f32 0.0, %v3893
        %v3895 = vpop.f32.mrf.mxu0
        %3896 = vmatprep.mubr.f32.mxu0 0.0
        %3897 = vmatmul.mubr.f32.gmra.mxu0 %v3696
        %v3898 = vpop.f32.mrf.mxu0
        %v3899 = vadd.f32 0.0, %v3898
        %v3900 = vpop.f32.mrf.mxu0
        %3901 = vmatprep.mubr.f32.mxu0 0.0
        %3902 = vmatmul.mubr.f32.gmra.mxu0 %v3699
        %v3903 = vpop.f32.mrf.mxu0
        %v3904 = vadd.f32 0.0, %v3903
        %v3905 = vpop.f32.mrf.mxu0
        %3906 = vmatprep.mubr.f32.mxu0 0.0
        %3907 = vmatmul.mubr.f32.gmra.mxu0 %v3702
        %v3908 = vpop.f32.mrf.mxu0
        %v3909 = vadd.f32 0.0, %v3908
        %v3910 = vpop.f32.mrf.mxu0
        %3911 = vmatprep.mubr.f32.mxu0 0.0
        %3912 = vmatmul.mubr.f32.gmra.mxu0 %v3705
        %v3913 = vpop.f32.mrf.mxu0
        %v3914 = vadd.f32 0.0, %v3913
        %v3915 = vpop.f32.mrf.mxu0
        %3916 = vmatprep.mubr.f32.mxu0 0.0
        %3917 = vmatmul.mubr.f32.gmra.mxu0 %v3708
        %v3918 = vpop.f32.mrf.mxu0
        %v3919 = vadd.f32 0.0, %v3918
        %v3920 = vpop.f32.mrf.mxu0
        %3921 = vmatprep.mubr.f32.mxu0 0.0
        %3922 = vmatmul.mubr.f32.gmra.mxu0 %v3711
        %v3923 = vpop.f32.mrf.mxu0
        %v3924 = vadd.f32 0.0, %v3923
        %v3925 = vpop.f32.mrf.mxu0
        %3926 = vmatprep.mubr.f32.mxu0 0.0
        %3927 = vmatmul.mubr.f32.gmra.mxu0 %v3714
        %v3928 = vpop.f32.mrf.mxu0
        %v3929 = vadd.f32 0.0, %v3928
        %v3930 = vpop.f32.mrf.mxu0
        %3931 = vmatprep.mubr.f32.mxu0 0.0
        %3932 = vmatmul.mubr.f32.gmra.mxu0 %v3717
        %v3933 = vpop.f32.mrf.mxu0
        %v3934 = vadd.f32 0.0, %v3933
        %v3935 = vpop.f32.mrf.mxu0
        %3936 = vmatprep.mubr.f32.mxu0 0.0
        %3937 = vmatmul.mubr.f32.gmra.mxu0 %v3720
        %v3938 = vpop.f32.mrf.mxu0
        %v3939 = vadd.f32 0.0, %v3938
        %v3940 = vpop.f32.mrf.mxu0
        %3941 = vmatprep.mubr.f32.mxu0 0.0
        %3942 = vmatmul.mubr.f32.gmra.mxu0 %v3723
        %v3943 = vpop.f32.mrf.mxu0
        %v3944 = vadd.f32 0.0, %v3943
        %v3945 = vpop.f32.mrf.mxu0
        %3946 = vmatprep.mubr.f32.mxu0 0.0
        %3947 = vmatmul.mubr.f32.gmra.mxu0 %v3726
        %v3948 = vpop.f32.mrf.mxu0
        %v3949 = vadd.f32 0.0, %v3948
        %v3950 = vpop.f32.mrf.mxu0
        %3951 = vmatprep.mubr.f32.mxu0 0.0
        %3952 = vmatmul.mubr.f32.gmra.mxu0 %v3729
        %v3953 = vpop.f32.mrf.mxu0
        %v3954 = vadd.f32 0.0, %v3953
        %v3955 = vpop.f32.mrf.mxu0
        %3956 = vmatprep.mubr.f32.mxu0 0.0
        %3957 = vmatmul.mubr.f32.gmra.mxu0 %v3732
        %v3958 = vpop.f32.mrf.mxu0
        %v3959 = vadd.f32 0.0, %v3958
        %v3960 = vpop.f32.mrf.mxu0
        %3961 = vmatprep.mubr.f32.mxu0 0.0
        %3962 = vmatmul.mubr.f32.gmra.mxu0 %v3735
        %v3963 = vpop.f32.mrf.mxu0
        %v3964 = vadd.f32 0.0, %v3963
        %v3965 = vpop.f32.mrf.mxu0
        %3966 = vmatprep.mubr.f32.mxu0 0.0
        %3967 = vmatmul.mubr.f32.gmra.mxu0 %v3738
        %v3968 = vpop.f32.mrf.mxu0
        %v3969 = vadd.f32 0.0, %v3968
        %v3970 = vpop.f32.mrf.mxu0
        %3971 = vmatprep.mubr.f32.mxu0 0.0
        %3972 = vmatmul.mubr.f32.gmra.mxu0 %v3741
        %v3973 = vpop.f32.mrf.mxu0
        %v3974 = vadd.f32 0.0, %v3973
        %v3975 = vpop.f32.mrf.mxu0
        %3976 = vmatprep.mubr.f32.mxu0 0.0
        %3977 = vmatmul.mubr.f32.gmra.mxu0 %v3744
        %v3978 = vpop.f32.mrf.mxu0
        %v3979 = vadd.f32 0.0, %v3978
        %v3980 = vpop.f32.mrf.mxu0
        %3981 = vmatprep.mubr.f32.mxu0 0.0
        %3982 = vmatmul.mubr.f32.gmra.mxu0 %v3747
        %v3983 = vpop.f32.mrf.mxu0
        %v3984 = vadd.f32 0.0, %v3983
        %v3985 = vpop.f32.mrf.mxu0
        %3986 = vmatprep.mubr.f32.mxu0 0.0
        %3987 = vmatmul.mubr.f32.gmra.mxu0 %v3750
        %v3988 = vpop.f32.mrf.mxu0
        %v3989 = vadd.f32 0.0, %v3988
        %v3990 = vpop.f32.mrf.mxu0
        %3991 = vmatprep.mubr.f32.mxu0 0.0
        %3992 = vmatmul.mubr.f32.gmra.mxu0 %v3753
        %v3993 = vpop.f32.mrf.mxu0
        %v3994 = vadd.f32 0.0, %v3993
        %v3995 = vpop.f32.mrf.mxu0
        %3996 = vmatprep.mubr.f32.mxu0 0.0
        %3997 = vmatmul.mubr.f32.gmra.mxu0 %v3756
        %v3998 = vpop.f32.mrf.mxu0
        %v3999 = vadd.f32 0.0, %v3998
        %v4000 = vpop.f32.mrf.mxu0
        %4001 = vmatprep.mubr.f32.mxu0 0.0
        %4002 = vmatmul.mubr.f32.gmra.mxu0 %v3759
        %v4003 = vpop.f32.mrf.mxu0
        %v4004 = vadd.f32 0.0, %v4003
        %v4005 = vpop.f32.mrf.mxu0
        %4006 = vmatprep.mubr.f32.mxu0 0.0
        %4007 = vmatmul.mubr.f32.gmra.mxu0 %v3762
        %v4008 = vpop.f32.mrf.mxu0
        %v4009 = vadd.f32 0.0, %v4008
        %v4010 = vpop.f32.mrf.mxu0
        %4011 = vdwg.mxu0
        %v4012 = vadd.f32 %v3582, %v3834
        %v4013 = vadd.f32 %v3583, %v3839
        %v4014 = vadd.f32 %v3584, %v3844
        %v4015 = vadd.f32 %v3585, %v3849
        %v4016 = vadd.f32 %v3586, %v3854
        %v4017 = vadd.f32 %v3587, %v3859
        %v4018 = vadd.f32 %v3588, %v3864
        %v4019 = vadd.f32 %v3589, %v3869
        %v4020 = vadd.f32 %v3590, %v3874
        %v4021 = vadd.f32 %v3591, %v3879
        %v4022 = vadd.f32 %v3592, %v3884
        %v4023 = vadd.f32 %v3593, %v3889
        %v4024 = vadd.f32 %v3594, %v3894
        %v4025 = vadd.f32 %v3595, %v3899
        %v4026 = vadd.f32 %v3596, %v3904
        %v4027 = vadd.f32 %v3597, %v3909
        %v4028 = vadd.f32 %v3598, %v3914
        %v4029 = vadd.f32 %v3599, %v3919
        %v4030 = vadd.f32 %v3600, %v3924
        %v4031 = vadd.f32 %v3601, %v3929
        %v4032 = vadd.f32 %v3602, %v3934
        %v4033 = vadd.f32 %v3603, %v3939
        %v4034 = vadd.f32 %v3604, %v3944
        %v4035 = vadd.f32 %v3605, %v3949
        %v4036 = vadd.f32 %v3606, %v3954
        %v4037 = vadd.f32 %v3607, %v3959
        %v4038 = vadd.f32 %v3608, %v3964
        %v4039 = vadd.f32 %v3609, %v3969
        %v4040 = vadd.f32 %v3610, %v3974
        %v4041 = vadd.f32 %v3611, %v3979
        %v4042 = vadd.f32 %v3612, %v3984
        %v4043 = vadd.f32 %v3613, %v3989
        %v4044 = vadd.f32 %v3614, %v3994
        %v4045 = vadd.f32 %v3615, %v3999
        %v4046 = vadd.f32 %v3616, %v4004
        %v4047 = vadd.f32 %v3617, %v4009
        %v4048 = vld [vmem:[%s2] sm:$0x1]
        %v4050 = vlaneseq
        %v4051 = vshrl.u32 %v4050, 7
        %v4052 = vsub.s32 0, %v4051
        %v4053 = vrot.slane %v4048, %v4052
        %v4055 = vadd.f32 %v4012, %v4053
        %v4056 = vadd.f32 %v4013, %v4053
        %v4057 = vadd.f32 %v4014, %v4053
        %v4058 = vadd.f32 %v4015, %v4053
        %v4059 = vadd.f32 %v4016, %v4053
        %v4060 = vadd.f32 %v4017, %v4053
        %v4061 = vadd.f32 %v4018, %v4053
        %v4062 = vadd.f32 %v4019, %v4053
        %v4063 = vadd.f32 %v4020, %v4053
        %v4064 = vadd.f32 %v4021, %v4053
        %v4065 = vadd.f32 %v4022, %v4053
        %v4066 = vadd.f32 %v4023, %v4053
        %v4067 = vadd.f32 %v4024, %v4053
        %v4068 = vadd.f32 %v4025, %v4053
        %v4069 = vadd.f32 %v4026, %v4053
        %v4070 = vadd.f32 %v4027, %v4053
        %v4071 = vadd.f32 %v4028, %v4053
        %v4072 = vadd.f32 %v4029, %v4053
        %v4073 = vadd.f32 %v4030, %v4053
        %v4074 = vadd.f32 %v4031, %v4053
        %v4075 = vadd.f32 %v4032, %v4053
        %v4076 = vadd.f32 %v4033, %v4053
        %v4077 = vadd.f32 %v4034, %v4053
        %v4078 = vadd.f32 %v4035, %v4053
        %v4079 = vadd.f32 %v4036, %v4053
        %v4080 = vadd.f32 %v4037, %v4053
        %v4081 = vadd.f32 %v4038, %v4053
        %v4082 = vadd.f32 %v4039, %v4053
        %v4083 = vadd.f32 %v4040, %v4053
        %v4084 = vadd.f32 %v4041, %v4053
        %v4085 = vadd.f32 %v4042, %v4053
        %v4086 = vadd.f32 %v4043, %v4053
        %v4087 = vadd.f32 %v4044, %v4053
        %v4088 = vadd.f32 %v4045, %v4053
        %v4089 = vadd.f32 %v4046, %v4053
        %v4090 = vadd.f32 %v4047, %v4053
        %v4091 = vmax.f32 %v4055, 0.0
        %v4092 = vmax.f32 %v4056, 0.0
        %v4093 = vmax.f32 %v4057, 0.0
        %v4094 = vmax.f32 %v4058, 0.0
        %v4095 = vmax.f32 %v4059, 0.0
        %v4096 = vmax.f32 %v4060, 0.0
        %v4097 = vmax.f32 %v4061, 0.0
        %v4098 = vmax.f32 %v4062, 0.0
        %v4099 = vmax.f32 %v4063, 0.0
        %v4100 = vmax.f32 %v4064, 0.0
        %v4101 = vmax.f32 %v4065, 0.0
        %v4102 = vmax.f32 %v4066, 0.0
        %v4103 = vmax.f32 %v4067, 0.0
        %v4104 = vmax.f32 %v4068, 0.0
        %v4105 = vmax.f32 %v4069, 0.0
        %v4106 = vmax.f32 %v4070, 0.0
        %v4107 = vmax.f32 %v4071, 0.0
        %v4108 = vmax.f32 %v4072, 0.0
        %v4109 = vmax.f32 %v4073, 0.0
        %v4110 = vmax.f32 %v4074, 0.0
        %v4111 = vmax.f32 %v4075, 0.0
        %v4112 = vmax.f32 %v4076, 0.0
        %v4113 = vmax.f32 %v4077, 0.0
        %v4114 = vmax.f32 %v4078, 0.0
        %v4115 = vmax.f32 %v4079, 0.0
        %v4116 = vmax.f32 %v4080, 0.0
        %v4117 = vmax.f32 %v4081, 0.0
        %v4118 = vmax.f32 %v4082, 0.0
        %v4119 = vmax.f32 %v4083, 0.0
        %v4120 = vmax.f32 %v4084, 0.0
        %v4121 = vmax.f32 %v4085, 0.0
        %v4122 = vmax.f32 %v4086, 0.0
        %v4123 = vmax.f32 %v4087, 0.0
        %v4124 = vmax.f32 %v4088, 0.0
        %v4125 = vmax.f32 %v4089, 0.0
        %v4126 = vmax.f32 %v4090, 0.0
        %v4127 = vld [vmem:[%s3] sm:$0x7]
        %v4129 = vlaneseq
        %v4130 = vshrl.u32 %v4129, 7
        %v4131 = vsub.s32 0, %v4130
        %v4132 = vrot.slane %v4127, %v4131
        %v4133 = vlaneseq
        %v4134 = vshrl.u32 %v4133, 7
        %v4135 = vsub.s32 1, %v4134
        %v4136 = vrot.slane %v4127, %v4135
        %v4137 = vlaneseq
        %v4138 = vshrl.u32 %v4137, 7
        %v4139 = vsub.s32 2, %v4138
        %v4140 = vrot.slane %v4127, %v4139
        %vm4143 = vcmask 261120
        %v4144 = vsel %vm4143, %v4140, 0
        %4146 = vmatprep.subr.mxu0 0.0
        %4147 = vmatpush1.msra.mxu0 %v4106
        %4148 = vmatprep.subr.mxu0 0.0
        %4149 = vmatpush1.msra.mxu0 %v4105
        %4150 = vmatprep.subr.mxu0 0.0
        %4151 = vmatpush1.msra.mxu0 %v4104
        %4152 = vmatprep.subr.mxu0 0.0
        %4153 = vmatpush1.msra.mxu0 %v4103
        %4154 = vmatprep.subr.mxu0 0.0
        %4155 = vmatpush1.msra.mxu0 %v4102
        %4156 = vmatprep.subr.mxu0 0.0
        %4157 = vmatpush1.msra.mxu0 %v4101
        %4158 = vmatprep.subr.mxu0 0.0
        %4159 = vmatpush1.msra.mxu0 %v4100
        %4160 = vmatprep.subr.mxu0 0.0
        %4161 = vmatpush1.msra.mxu0 %v4099
        %4162 = vmatprep.subr.mxu0 0.0
        %4163 = vmatpush1.msra.mxu0 %v4098
        %4164 = vmatprep.subr.mxu0 0.0
        %4165 = vmatpush1.msra.mxu0 %v4097
        %4166 = vmatprep.subr.mxu0 0.0
        %4167 = vmatpush1.msra.mxu0 %v4096
        %4168 = vmatprep.subr.mxu0 0.0
        %4169 = vmatpush1.msra.mxu0 %v4095
        %4170 = vmatprep.subr.mxu0 0.0
        %4171 = vmatpush1.msra.mxu0 %v4094
        %4172 = vmatprep.subr.mxu0 0.0
        %4173 = vmatpush1.msra.mxu0 %v4093
        %4174 = vmatprep.subr.mxu0 0.0
        %4175 = vmatpush1.msra.mxu0 %v4092
        %4176 = vmatprep.subr.mxu0 0.0
        %4177 = vmatpush1.msra.mxu0 %v4091
        %4178 = vmatprep.subr.mxu0 0.0
        %4179 = vmatpush2.msra.mxu0 %v4122
        %4180 = vmatprep.subr.mxu0 0.0
        %4181 = vmatpush2.msra.mxu0 %v4121
        %4182 = vmatprep.subr.mxu0 0.0
        %4183 = vmatpush2.msra.mxu0 %v4120
        %4184 = vmatprep.subr.mxu0 0.0
        %4185 = vmatpush2.msra.mxu0 %v4119
        %4186 = vmatprep.subr.mxu0 0.0
        %4187 = vmatpush2.msra.mxu0 %v4118
        %4188 = vmatprep.subr.mxu0 0.0
        %4189 = vmatpush2.msra.mxu0 %v4117
        %4190 = vmatprep.subr.mxu0 0.0
        %4191 = vmatpush2.msra.mxu0 %v4116
        %4192 = vmatprep.subr.mxu0 0.0
        %4193 = vmatpush2.msra.mxu0 %v4115
        %4194 = vmatprep.subr.mxu0 0.0
        %4195 = vmatpush2.msra.mxu0 %v4114
        %4196 = vmatprep.subr.mxu0 0.0
        %4197 = vmatpush2.msra.mxu0 %v4113
        %4198 = vmatprep.subr.mxu0 0.0
        %4199 = vmatpush2.msra.mxu0 %v4112
        %4200 = vmatprep.subr.mxu0 0.0
        %4201 = vmatpush2.msra.mxu0 %v4111
        %4202 = vmatprep.subr.mxu0 0.0
        %4203 = vmatpush2.msra.mxu0 %v4110
        %4204 = vmatprep.subr.mxu0 0.0
        %4205 = vmatpush2.msra.mxu0 %v4109
        %4206 = vmatprep.subr.mxu0 0.0
        %4207 = vmatpush2.msra.mxu0 %v4108
        %4208 = vmatprep.subr.mxu0 0.0
        %4209 = vmatpush2.msra.mxu0 %v4107
        %4210 = vmatprep.mubr.f32.mxu0 %v4136
        %4211 = vmatmul.mubr.f32.gmra.mxu0 %v4132
        %v4212 = vpop.f32.mrf.mxu0
        %v4213 = vadd.f32 0.0, %v4212
        %v4214 = vpop.f32.mrf.mxu0
        %4215 = vdwg.mxu0
        %4216 = vmatprep.subr.mxu0 0.0
        %4217 = vmatpush1.msra.mxu0 0.0
        %4218 = vmatprep.subr.mxu0 0.0
        %4219 = vmatpush1.msra.mxu0 0.0
        %4220 = vmatprep.subr.mxu0 0.0
        %4221 = vmatpush1.msra.mxu0 0.0
        %4222 = vmatprep.subr.mxu0 0.0
        %4223 = vmatpush1.msra.mxu0 0.0
        %4224 = vmatprep.subr.mxu0 0.0
        %4225 = vmatpush1.msra.mxu0 0.0
        %4226 = vmatprep.subr.mxu0 0.0
        %4227 = vmatpush1.msra.mxu0 0.0
        %4228 = vmatprep.subr.mxu0 0.0
        %4229 = vmatpush1.msra.mxu0 0.0
        %4230 = vmatprep.subr.mxu0 0.0
        %4231 = vmatpush1.msra.mxu0 0.0
        %4232 = vmatprep.subr.mxu0 0.0
        %4233 = vmatpush1.msra.mxu0 0.0
        %4234 = vmatprep.subr.mxu0 0.0
        %4235 = vmatpush1.msra.mxu0 0.0
        %4236 = vmatprep.subr.mxu0 0.0
        %4237 = vmatpush1.msra.mxu0 0.0
        %4238 = vmatprep.subr.mxu0 0.0
        %4239 = vmatpush1.msra.mxu0 0.0
        %4240 = vmatprep.subr.mxu0 0.0
        %4241 = vmatpush1.msra.mxu0 %v4126
        %4242 = vmatprep.subr.mxu0 0.0
        %4243 = vmatpush1.msra.mxu0 %v4125
        %4244 = vmatprep.subr.mxu0 0.0
        %4245 = vmatpush1.msra.mxu0 %v4124
        %4246 = vmatprep.subr.mxu0 0.0
        %4247 = vmatpush1.msra.mxu0 %v4123
        %4248 = vmatprep.subr.mxu0 0.0
        %4249 = vmatpush2.msra.mxu0 0.0
        %4250 = vmatprep.subr.mxu0 0.0
        %4251 = vmatpush2.msra.mxu0 0.0
        %4252 = vmatprep.subr.mxu0 0.0
        %4253 = vmatpush2.msra.mxu0 0.0
        %4254 = vmatprep.subr.mxu0 0.0
        %4255 = vmatpush2.msra.mxu0 0.0
        %4256 = vmatprep.subr.mxu0 0.0
        %4257 = vmatpush2.msra.mxu0 0.0
        %4258 = vmatprep.subr.mxu0 0.0
        %4259 = vmatpush2.msra.mxu0 0.0
        %4260 = vmatprep.subr.mxu0 0.0
        %4261 = vmatpush2.msra.mxu0 0.0
        %4262 = vmatprep.subr.mxu0 0.0
        %4263 = vmatpush2.msra.mxu0 0.0
        %4264 = vmatprep.subr.mxu0 0.0
        %4265 = vmatpush2.msra.mxu0 0.0
        %4266 = vmatprep.subr.mxu0 0.0
        %4267 = vmatpush2.msra.mxu0 0.0
        %4268 = vmatprep.subr.mxu0 0.0
        %4269 = vmatpush2.msra.mxu0 0.0
        %4270 = vmatprep.subr.mxu0 0.0
        %4271 = vmatpush2.msra.mxu0 0.0
        %4272 = vmatprep.subr.mxu0 0.0
        %4273 = vmatpush2.msra.mxu0 0.0
        %4274 = vmatprep.subr.mxu0 0.0
        %4275 = vmatpush2.msra.mxu0 0.0
        %4276 = vmatprep.subr.mxu0 0.0
        %4277 = vmatpush2.msra.mxu0 0.0
        %4278 = vmatprep.subr.mxu0 0.0
        %4279 = vmatpush2.msra.mxu0 0.0
        %4280 = vmatprep.mubr.f32.mxu0 0.0
        %4281 = vmatmul.mubr.f32.gmra.mxu0 %v4144
        %v4282 = vpop.f32.mrf.mxu0
        %v4283 = vadd.f32 %v4213, %v4282
        %v4284 = vpop.f32.mrf.mxu0
        %4285 = vdwg.mxu0
        %v4286 = vld [vmem:[%s4] sm:$0xff]
        %v4287 = vld [vmem:[%s4 + $0x8] sm:$0xff]
        %v4288 = vld [vmem:[%s4 + $0x10] sm:$0xff]
        %v4289 = vld [vmem:[%s4 + $0x18] sm:$0xff]
        %v4290 = vld [vmem:[%s5] sm:$0x1]
        %v4292 = vsel %vm4143, %v4283, 0
        %4294 = vmatprep.subr.mxu0 0.0
        %4295 = vmatpush1.msra.mxu0 0.0
        %4296 = vmatprep.subr.mxu0 0.0
        %4297 = vmatpush1.msra.mxu0 0.0
        %4298 = vmatprep.subr.mxu0 0.0
        %4299 = vmatpush1.msra.mxu0 0.0
        %4300 = vmatprep.subr.mxu0 0.0
        %4301 = vmatpush1.msra.mxu0 0.0
        %4302 = vmatprep.subr.mxu0 0.0
        %4303 = vmatpush1.msra.mxu0 0.0
        %4304 = vmatprep.subr.mxu0 0.0
        %4305 = vmatpush1.msra.mxu0 0.0
        %4306 = vmatprep.subr.mxu0 0.0
        %4307 = vmatpush1.msra.mxu0 0.0
        %4308 = vmatprep.subr.mxu0 0.0
        %4309 = vmatpush1.msra.mxu0 0.0
        %4310 = vmatprep.subr.mxu0 0.0
        %4311 = vmatpush1.msra.mxu0 0.0
        %4312 = vmatprep.subr.mxu0 0.0
        %4313 = vmatpush1.msra.mxu0 0.0
        %4314 = vmatprep.subr.mxu0 0.0
        %4315 = vmatpush1.msra.mxu0 0.0
        %4316 = vmatprep.subr.mxu0 0.0
        %4317 = vmatpush1.msra.mxu0 0.0
        %4318 = vmatprep.subr.mxu0 0.0
        %4319 = vmatpush1.msra.mxu0 %v4289
        %4320 = vmatprep.subr.mxu0 0.0
        %4321 = vmatpush1.msra.mxu0 %v4288
        %4322 = vmatprep.subr.mxu0 0.0
        %4323 = vmatpush1.msra.mxu0 %v4287
        %4324 = vmatprep.subr.mxu0 0.0
        %4325 = vmatpush1.msra.mxu0 %v4286
        %4326 = vmatprep.subr.mxu0 0.0
        %4327 = vmatpush2.msra.mxu0 0.0
        %4328 = vmatprep.subr.mxu0 0.0
        %4329 = vmatpush2.msra.mxu0 0.0
        %4330 = vmatprep.subr.mxu0 0.0
        %4331 = vmatpush2.msra.mxu0 0.0
        %4332 = vmatprep.subr.mxu0 0.0
        %4333 = vmatpush2.msra.mxu0 0.0
        %4334 = vmatprep.subr.mxu0 0.0
        %4335 = vmatpush2.msra.mxu0 0.0
        %4336 = vmatprep.subr.mxu0 0.0
        %4337 = vmatpush2.msra.mxu0 0.0
        %4338 = vmatprep.subr.mxu0 0.0
        %4339 = vmatpush2.msra.mxu0 0.0
        %4340 = vmatprep.subr.mxu0 0.0
        %4341 = vmatpush2.msra.mxu0 0.0
        %4342 = vmatprep.subr.mxu0 0.0
        %4343 = vmatpush2.msra.mxu0 0.0
        %4344 = vmatprep.subr.mxu0 0.0
        %4345 = vmatpush2.msra.mxu0 0.0
        %4346 = vmatprep.subr.mxu0 0.0
        %4347 = vmatpush2.msra.mxu0 0.0
        %4348 = vmatprep.subr.mxu0 0.0
        %4349 = vmatpush2.msra.mxu0 0.0
        %4350 = vmatprep.subr.mxu0 0.0
        %4351 = vmatpush2.msra.mxu0 0.0
        %4352 = vmatprep.subr.mxu0 0.0
        %4353 = vmatpush2.msra.mxu0 0.0
        %4354 = vmatprep.subr.mxu0 0.0
        %4355 = vmatpush2.msra.mxu0 0.0
        %4356 = vmatprep.subr.mxu0 0.0
        %4357 = vmatpush2.msra.mxu0 0.0
        %4358 = vmatprep.mubr.f32.mxu0 0.0
        %4359 = vmatmul.mubr.f32.gmra.mxu0 %v4292
        %v4360 = vpop.f32.mrf.mxu0
        %v4361 = vadd.f32 %v4290, %v4360
        %v4362 = vpop.f32.mrf.mxu0
        %4363 = vdwg.mxu0
        %vm4364 = vcmask 73728
        %4365 = vst.msk [vmem:[%s243] sm:$0x1] %vm4364, %v4361
        %s4366 = sand.u32 %s159, 1
        %s4367 = scalar_lea.sflag [#allocation3], %s4366
        %s4368 = sand.u32 %s159, 1
        %s4369 = scalar_lea.vmem [#allocation2], %s4368
        // Predicated region
        $region45: #{classifier_forward.1} parent=43 // pred_check
          %p4370 = pneg %p169
        $region46: #{classifier_forward.1} parent=43 // pred_check_branch
          %4372 = sbr.rel (%p4370) target = $region48
        $region47: #{classifier_forward.1} parent=43 // pred_region
          %s4374 = ssub.s32 16, 16
          %4375 = vsyncadd %s4367, %s4374
          %s4376 = smul.addr %s20, 16
          %s4377 = scalar_lea.hbm %s6, %s4376
          %s4379 = sshll.u32 %s4369, 4
          %s4380 = int_to_ptr.vmem [resolvable:$true] %s4379
          %4382 = dma.vmem_to_hbm [thread:$0]  %s4380, 16, %s4377, %s4367
        $region48: #{classifier_forward.1} parent=43 // pred_fallthru
          _
      $region44: #{classifier_forward.1} parent=5 // pred_fallthru
        _
      %p4383 = scmp.le.s32.totalorder 2, %s15
      // Predicated region
      $region49: #{classifier_forward.1} parent=5 // pred_check
        %p4384 = pneg %p4383
      $region50: #{classifier_forward.1} parent=5 // pred_check_branch
        %4386 = sbr.rel (%p4384) target = $region52
      $region51: #{classifier_forward.1} parent=5 // pred_region
        %s4387 = ssub.s32 %s15, 2
        // Predicated region
        $region53: #{classifier_forward.1} parent=51 // pred_check
          %p4388 = pneg %p175
        $region54: #{classifier_forward.1} parent=51 // pred_check_branch
          %4390 = sbr.rel (%p4388) target = $region56
        $region55: #{classifier_forward.1} parent=51 // pred_region
          %s4391 = sand.u32 %s160, 1
          %s4392 = scalar_lea.sflag [#allocation3], %s4391
          %s4393 = sand.u32 %s160, 1
          %s4394 = scalar_lea.vmem [#allocation2], %s4393
          %4395 = dma.done %s4392, 16
        $region56: #{classifier_forward.1} parent=51 // pred_fallthru
          _
      $region52: #{classifier_forward.1} parent=5 // pred_fallthru
        _
    $region6: #{classifier_forward.1} parent=1 // loop_footer
      %s19 = sadd.s32 1, %s15
    $region7: #{classifier_forward.1} parent=1 // loop_footer_branch
      %14 = sbr.rel target = $region3
    $region8: #{classifier_forward.1} parent=1 // loop_exit
      _
    %4396 = vsyncpa [#allocation3], 1
    %s4397 = scalar_lea.sflag [#allocation3], 1
    %4398 = vsyncpa %s4397, 1

</llo_original>
